<compile_context>
chip_gen: v5e
topology: v5e:2x2
jax: 0.10.0
libtpu: 0.0.40
codegen_flags: <defaults>
</compile_context>

<pallas_src>
import math
import functools

import jax
import jax.numpy as jnp
import numpy as np
from jax import lax
from jax.experimental import pallas as pl
from jax.experimental.pallas import tpu as pltpu


# ----------------------------------------------------------------------------
# Pallas kernels
# ----------------------------------------------------------------------------
def _zero_halo(ref):
    """Zero the 1-pixel halo ring of a (Hp, Wp, C) scratch ref (interior untouched)."""
    Hp, Wp, C = ref.shape
    zrow = jnp.zeros((1, Wp, C), ref.dtype)
    zcol = jnp.zeros((Hp, 1, C), ref.dtype)
    ref[0:1, :, :] = zrow
    ref[Hp - 1:Hp, :, :] = zrow
    ref[:, 0:1, :] = zcol
    ref[:, Wp - 1:Wp, :] = zcol


def _im2col9(src_ref, H, W):
    """(Hp, Wp, C) zero-padded scratch -> (H*W, 9*C) bf16 patch matrix (one MXU operand)."""
    C = src_ref.shape[2]
    taps = [src_ref[dy:dy + H, dx:dx + W, :].reshape(H * W, C)
            for dy in range(3) for dx in range(3)]
    return jnp.concatenate(taps, axis=-1).astype(jnp.bfloat16)


def _detect_level_kernel(x_ref,
                         bw1_ref, bs1_ref, bb1_ref, bw2_ref, bs2_ref, bb2_ref,
                         bw3_ref, bb3_ref,
                         cw1_ref, cs1_ref, cb1_ref, cw2_ref, cs2_ref, cb2_ref,
                         cw3_ref, cb3_ref,
                         out_ref,
                         xpad_ref, midb_ref, midc_ref):
    """Fused per-level detect head.

    Box branch (Conv3x3+BN+SiLU -> Conv3x3+BN+SiLU -> Conv1x1+bias) and cls
    branch computed from one staged padded input; output is the concatenation
    (1, H*W, 4*reg_max + nc).  Each 3x3 conv = ONE im2col matmul, bf16 MXU
    inputs, f32 accumulation.
    """
    H, W = x_ref.shape[1], x_ref.shape[2]

    # Zero only the halo ring of the padded scratches (interior fully overwritten
    # below).  Done unconditionally every step so per-core scratch stays correct
    # when the "parallel" batch axis is split across TensorCores.
    _zero_halo(xpad_ref)
    _zero_halo(midb_ref)
    _zero_halo(midc_ref)

    # Stage the padded input once; both branches reuse it (input DMA'd once).
    xpad_ref[1:1 + H, 1:1 + W, :] = x_ref[0]

    def branch(w1, s1, b1, w2, s2, b2, w3, b3, mid_ref):
        c1 = mid_ref.shape[2]
        # layer 1: 3x3 conv + BN + SiLU   ((H*W, 9*Cin) @ (9*Cin, C1))
        a = jnp.dot(_im2col9(xpad_ref, H, W), w1[...],
                    preferred_element_type=jnp.float32)
        a = a * s1[0] + b1[0]
        a = a * jax.nn.sigmoid(a)                       # SiLU, f32
        mid_ref[1:1 + H, 1:1 + W, :] = a.reshape(H, W, c1)
        # layer 2: 3x3 conv (groups folded into block-diag dense W) + BN + SiLU
        a2 = jnp.dot(_im2col9(mid_ref, H, W), w2[...],
                     preferred_element_type=jnp.float32)
        a2 = a2 * s2[0] + b2[0]
        a2 = a2 * jax.nn.sigmoid(a2)
        # layer 3: 1x1 conv + bias
        return jnp.dot(a2.astype(jnp.bfloat16), w3[...],
                       preferred_element_type=jnp.float32) + b3[0]

    box_out = branch(bw1_ref, bs1_ref, bb1_ref, bw2_ref, bs2_ref, bb2_ref,
                     bw3_ref, bb3_ref, midb_ref)
    cls_out = branch(cw1_ref, cs1_ref, cb1_ref, cw2_ref, cs2_ref, cb2_ref,
                     cw3_ref, cb3_ref, midc_ref)
    out_ref[0] = jnp.concatenate([box_out, cls_out], axis=-1)  # (H*W, no)


def _head_kernel(f_ref, meta_ref, y_ref, *, reg_max):
    """DFL softmax-expectation + dist2bbox(xywh) * stride + sigmoid(cls).

    f_ref   : (1, A, 4*reg_max + nc)  concatenated box/cls logits (flattened d3)
    meta_ref: (4, A)  rows = [anchor_x, anchor_y, stride, stride]
    y_ref   : (1, 4 + nc, A)  lane-dense (A on lanes), PyTorch dim order
    """
    fT = jnp.transpose(f_ref[0])                  # (no, A) — one in-kernel transpose
    boxT = fT[:4 * reg_max, :]                    # (4*reg_max, A)
    clsT = fT[4 * reg_max:, :]                    # (nc, A)

    bins = lax.broadcasted_iota(jnp.int32, (reg_max, 1), 0).astype(jnp.float32)
    dist = []
    for k in range(4):                            # sides: lt_x, lt_y, rb_x, rb_y
        ch = boxT[k * reg_max:(k + 1) * reg_max, :]    # (reg_max, A), lane-dense
        m = jnp.max(ch, axis=0, keepdims=True)
        e = jnp.exp(ch - m)
        dist.append(jnp.sum(e * bins, axis=0, keepdims=True) /
                    jnp.sum(e, axis=0, keepdims=True))  # (1, A)
    lt_x, lt_y, rb_x, rb_y = dist

    meta = meta_ref[...]
    ax, ay, st = meta[0:1, :], meta[1:2, :], meta[2:3, :]
    cx = (ax + (rb_x - lt_x) * 0.5) * st
    cy = (ay + (rb_y - lt_y) * 0.5) * st
    w = (lt_x + rb_x) * st
    h = (lt_y + rb_y) * st
    y_ref[0] = jnp.concatenate([cx, cy, w, h, jax.nn.sigmoid(clsT)], axis=0)


# ----------------------------------------------------------------------------
# Pallas wrappers
# ----------------------------------------------------------------------------
_PKEYS = ("w1", "s1", "b1", "w2", "s2", "b2", "w3", "b3")


def _branch_param_specs(p):
    return [pl.BlockSpec(p[k].shape, lambda b: (0, 0)) for k in _PKEYS]


def _branch_param_args(p):
    return [p[k] for k in _PKEYS]


def _detect_level(x_nhwc, pbox, pcls):
    """One detect level: fused box+cls branches -> (B, H*W, 4*reg_max + nc)."""
    B, H, W, cin = x_nhwc.shape
    Hp, Wp = H + 2, W + 2
    c1b, coutb = pbox["w3"].shape
    c1c, coutc = pcls["w3"].shape
    no = coutb + coutc
    # TODO(synk): at real YOLO feature-map sizes add a row-strip spatial grid
    # axis (1-row halo) and size tiles per chip (16 MiB scoped VMEM on v5e,
    # 64 MiB physical on v7x, larger strips / deeper buffering on v6e); the
    # whole-image block used here is fine at these small test sizes.
    return pl.pallas_call(
        _detect_level_kernel,
        out_shape=jax.ShapeDtypeStruct((B, H * W, no), jnp.float32),
        grid_spec=pltpu.PrefetchScalarGridSpec(
            num_scalar_prefetch=0,
            grid=(B,),
            in_specs=([pl.BlockSpec((1, H, W, cin), lambda b: (b, 0, 0, 0))]
                      + _branch_param_specs(pbox) + _branch_param_specs(pcls)),
            out_specs=pl.BlockSpec((1, H * W, no), lambda b: (b, 0, 0)),
            scratch_shapes=[pltpu.VMEM((Hp, Wp, cin), jnp.float32),
                            pltpu.VMEM((Hp, Wp, c1b), jnp.float32),
                            pltpu.VMEM((Hp, Wp, c1c), jnp.float32)],
        ),
        compiler_params=pltpu.CompilerParams(dimension_semantics=("parallel",)),
    )(x_nhwc, *_branch_param_args(pbox), *_branch_param_args(pcls))


def _head(f, meta, reg_max):
    """f: (B, A, no); meta: (4, A).  Returns y: (B, 4+nc, A) (PyTorch dim order)."""
    B, A, no = f.shape
    nc = no - 4 * reg_max
    kernel = functools.partial(_head_kernel, reg_max=reg_max)
    return pl.pallas_call(
        kernel,
        out_shape=jax.ShapeDtypeStruct((B, 4 + nc, A), jnp.float32),
        grid_spec=pltpu.PrefetchScalarGridSpec(
            num_scalar_prefetch=0,
            grid=(B,),
            in_specs=[pl.BlockSpec((1, A, no), lambda b: (b, 0, 0)),
                      pl.BlockSpec((4, A), lambda b: (0, 0))],
            out_specs=pl.BlockSpec((1, 4 + nc, A), lambda b: (b, 0, 0)),
        ),
        compiler_params=pltpu.CompilerParams(dimension_semantics=("parallel",)),
    )(f, meta)


# ----------------------------------------------------------------------------
# Deterministic parameter construction (shapes mirror TripleDDetect.__init__)
# ----------------------------------------------------------------------------
def make_divisible(x, divisor):
    return math.ceil(x / divisor) * divisor


def _init_conv_bn(key, cin, cout, groups=1):
    kw, kg, kb, km, kv = jax.random.split(key, 5)
    cin_g = cin // groups
    w = jax.random.normal(kw, (cout, cin_g, 3, 3), jnp.float32) / math.sqrt(cin_g * 9)
    if groups > 1:  # grouped conv == dense conv with block-diagonal weight
        dense = jnp.zeros((cout, cin, 3, 3), jnp.float32)
        og = cout // groups
        for g in range(groups):
            dense = dense.at[g * og:(g + 1) * og, g * cin_g:(g + 1) * cin_g].set(
                w[g * og:(g + 1) * og])
        w = dense
    gamma = jax.random.uniform(kg, (cout,), jnp.float32, 0.5, 1.5)
    beta = 0.1 * jax.random.normal(kb, (cout,), jnp.float32)
    mean = 0.1 * jax.random.normal(km, (cout,), jnp.float32)
    var = jax.random.uniform(kv, (cout,), jnp.float32, 0.5, 1.5)
    eps = 1e-3  # YOLO Conv's BatchNorm2d(eps=0.001)
    scale = gamma / jnp.sqrt(var + eps)
    bias = beta - mean * scale
    # (cout, cin, 3, 3) -> im2col weight (9*cin, cout), stored bf16 for the MXU
    w_flat = jnp.transpose(w, (2, 3, 1, 0)).reshape(9 * cin, cout).astype(jnp.bfloat16)
    return w_flat, scale.reshape(1, cout), bias.reshape(1, cout)


def _init_conv1x1(key, cin, cout, groups=1):
    kw, kb = jax.random.split(key)
    cin_g = cin // groups
    w = jax.random.normal(kw, (cout, cin_g), jnp.float32) / math.sqrt(cin_g)
    if groups > 1:
        dense = jnp.zeros((cout, cin), jnp.float32)
        og = cout // groups
        for g in range(groups):
            dense = dense.at[g * og:(g + 1) * og, g * cin_g:(g + 1) * cin_g].set(
                w[g * og:(g + 1) * og])
        w = dense
    b = 0.1 * jax.random.normal(kb, (cout,), jnp.float32)
    return jnp.transpose(w).astype(jnp.bfloat16), b.reshape(1, cout)


def _init_branch(key, cin, cmid, cout, mid_groups, out_groups):
    k1, k2, k3 = jax.random.split(key, 3)
    w1, s1, b1 = _init_conv_bn(k1, cin, cmid, groups=1)
    w2, s2, b2 = _init_conv_bn(k2, cmid, cmid, groups=mid_groups)
    w3, b3 = _init_conv1x1(k3, cmid, cout, groups=out_groups)
    return dict(w1=w1, s1=s1, b1=b1, w2=w2, s2=s2, b2=b2, w3=w3, b3=b3)


def init_triple_d_detect(key, nc, ch):
    nl = len(ch) // 3
    reg_max = 16
    c2 = make_divisible(max(ch[0] // 4, reg_max * 4, 16), 4)
    c3 = max(ch[0], min(nc * 2, 128))
    c4 = make_divisible(max(ch[nl] // 4, reg_max * 4, 16), 4)
    c5 = max(ch[nl], min(nc * 2, 128))
    c6 = make_divisible(max(ch[2 * nl] // 4, reg_max * 4, 16), 4)
    c7 = max(ch[2 * nl], min(nc * 2, 128))
    keys = jax.random.split(key, 6 * nl)
    params = dict(nc=nc, nl=nl, reg_max=reg_max,
                  cv2=[], cv3=[], cv4=[], cv5=[], cv6=[], cv7=[])
    for i in range(nl):
        params["cv2"].append(_init_branch(keys[6 * i + 0], ch[i], c2, 4 * reg_max, 4, 4))
        params["cv3"].append(_init_branch(keys[6 * i + 1], ch[i], c3, nc, 1, 1))
        params["cv4"].append(_init_branch(keys[6 * i + 2], ch[nl + i], c4, 4 * reg_max, 4, 4))
        params["cv5"].append(_init_branch(keys[6 * i + 3], ch[nl + i], c5, nc, 1, 1))
        params["cv6"].append(_init_branch(keys[6 * i + 4], ch[2 * nl + i], c6, 4 * reg_max, 4, 4))
        params["cv7"].append(_init_branch(keys[6 * i + 5], ch[2 * nl + i], c7, nc, 1, 1))
    params["stride"] = [8.0 * (2 ** i) for i in range(nl)]  # canonical YOLO strides
    return params


# ----------------------------------------------------------------------------
# Forward pass (inference path of TripleDDetect.forward)
# ----------------------------------------------------------------------------
def make_anchors(shapes_hw, strides, grid_cell_offset=0.5):
    anchor_points, stride_tensor = [], []
    for (h, w), s in zip(shapes_hw, strides):
        sx = jnp.arange(w, dtype=jnp.float32) + grid_cell_offset
        sy = jnp.arange(h, dtype=jnp.float32) + grid_cell_offset
        syg, sxg = jnp.meshgrid(sy, sx, indexing="ij")
        anchor_points.append(jnp.stack((sxg, syg), -1).reshape(-1, 2))
        stride_tensor.append(jnp.full((h * w, 1), s, jnp.float32))
    return jnp.concatenate(anchor_points, 0), jnp.concatenate(stride_tensor, 0)


def triple_d_detect_forward(params, x_nchw_list):
    nl, nc, reg_max = params["nl"], params["nc"], params["reg_max"]
    no = nc + 4 * reg_max
    xs = [jnp.transpose(x, (0, 2, 3, 1)) for x in x_nchw_list]  # NCHW -> NHWC glue

    d1f, d2f, d3f = [], [], []  # flattened (B, H*W, no) per level
    for i in range(nl):
        d1f.append(_detect_level(xs[i], params["cv2"][i], params["cv3"][i]))
        d2f.append(_detect_level(xs[nl + i], params["cv4"][i], params["cv5"][i]))
        d3f.append(_detect_level(xs[2 * nl + i], params["cv6"][i], params["cv7"][i]))

    # anchors from the d1 spatial shapes (== x[:nl] shapes since convs are stride-1)
    shapes_hw = [(x.shape[1], x.shape[2]) for x in xs[:nl]]
    anchors, strides = make_anchors(shapes_hw, params["stride"], 0.5)
    meta = jnp.concatenate([anchors.T, strides.T, strides.T], axis=0)  # (4, A)

    f3 = d3f[0] if nl == 1 else jnp.concatenate(d3f, axis=1)
    y = _head(f3, meta, reg_max)  # (B, 4+nc, A) — PyTorch dim order, written lane-dense
    # NOTE: torch eval also computes dbox/dbox2 from d1/d2 but they are dead code
    # (only y (from d3) and d3 are returned), so those heads are skipped here.

    d3_nchw = []
    for i in range(nl):
        B, H, W = xs[2 * nl + i].shape[:3]
        d3_nchw.append(jnp.transpose(d3f[i].reshape(B, H, W, no), (0, 3, 1, 2)))
    return y, d3_nchw
    # TODO(synk): training-mode output ([d1, d2, d3]) and the stateful anchor
    # caching (self.shape/self.dynamic) are not modeled; anchors recomputed per call.


# ----------------------------------------------------------------------------
# Pure-JAX reference (validation only; uses the same bf16-quantized weights)
# ----------------------------------------------------------------------------
def _ref_branch(x, p):
    def cbs(x, w_flat, s, b):
        cin = w_flat.shape[0] // 9
        cout = w_flat.shape[1]
        w = w_flat.astype(jnp.float32).reshape(3, 3, cin, cout)
        y = lax.conv_general_dilated(x, w, (1, 1), "SAME",
                                     dimension_numbers=("NHWC", "HWIO", "NHWC"),
                                     precision=lax.Precision.HIGHEST)
        y = y * s.reshape(1, 1, 1, -1) + b.reshape(1, 1, 1, -1)
        return y * jax.nn.sigmoid(y)
    y = cbs(x, p["w1"], p["s1"], p["b1"])
    y = cbs(y, p["w2"], p["s2"], p["b2"])
    y = jnp.einsum("bhwc,cd->bhwd", y, p["w3"].astype(jnp.float32),
                   precision=lax.Precision.HIGHEST) + p["b3"].reshape(1, 1, 1, -1)
    return y


def _ref_head(box, cls_, anchors, strides, reg_max):
    B, A, _ = box.shape
    p = jax.nn.softmax(box.reshape(B, A, 4, reg_max), axis=-1)
    dist = jnp.sum(p * jnp.arange(reg_max, dtype=jnp.float32), axis=-1)  # (B,A,4)
    lt, rb = dist[..., :2], dist[..., 2:]
    anc = anchors[None]
    x1y1 = anc - lt
    x2y2 = anc + rb
    dbox = jnp.concatenate([(x1y1 + x2y2) * 0.5, x2y2 - x1y1], -1) * strides[None]
    y = jnp.concatenate([dbox, jax.nn.sigmoid(cls_)], -1)
    return jnp.transpose(y, (0, 2, 1))


def _ref_forward(params, x_nchw_list):
    nl, nc, reg_max = params["nl"], params["nc"], params["reg_max"]
    no = nc + 4 * reg_max
    xs = [jnp.transpose(x, (0, 2, 3, 1)) for x in x_nchw_list]
    d3 = []
    for i in range(nl):
        d3.append(jnp.concatenate([_ref_branch(xs[2 * nl + i], params["cv6"][i]),
                                   _ref_branch(xs[2 * nl + i], params["cv7"][i])], -1))
    shapes_hw = [(x.shape[1], x.shape[2]) for x in xs[:nl]]
    anchors, strides = make_anchors(shapes_hw, params["stride"], 0.5)
    f3 = jnp.concatenate([d.reshape(d.shape[0], -1, no) for d in d3], 1)
    box3, cls3 = f3[..., :4 * reg_max], f3[..., 4 * reg_max:]
    y = _ref_head(box3, cls3, anchors, strides, reg_max)
    return y, [jnp.transpose(d, (0, 3, 1, 2)) for d in d3]


# ----------------------------------------------------------------------------
if __name__ == "__main__":
    key = jax.random.PRNGKey(0)
    nc = 8
    ch = (32, 48, 64)        # nl = 1: x[0] -> cv2/cv3, x[1] -> cv4/cv5, x[2] -> cv6/cv7
    B, H, W = 2, 8, 8

    pkey, x0k, x1k, x2k = jax.random.split(key, 4)
    params = init_triple_d_detect(pkey, nc, ch)
    x = [jax.random.normal(x0k, (B, ch[0], H, W), jnp.float32),
         jax.random.normal(x1k, (B, ch[1], H, W), jnp.float32),
         jax.random.normal(x2k, (B, ch[2], H, W), jnp.float32)]

    y, d3 = triple_d_detect_forward(params, x)
    y = jax.block_until_ready(y)
    d3 = [jax.block_until_ready(d) for d in d3]

    # sanity check against a pure-JAX reference
    y_ref, d3_ref = _ref_forward(params, x)
    assert y.shape == (B, 4 + nc, H * W)
    assert np.allclose(np.asarray(y), np.asarray(y_ref), rtol=3e-2, atol=3e-2)
    for a, b in zip(d3, d3_ref):
        assert a.shape == (B, nc + 4 * 16, H, W)
        assert np.allclose(np.asarray(a), np.asarray(b), rtol=3e-2, atol=3e-2)

    print("KERNEL_OK")
</pallas_src>

<mosaic_0001>
module attributes {stable_mosaic.version = 11 : i64} {
  func.func @_detect_level_kernel(%arg0: i32, %arg1: memref<1x8x8x32xf32, #tpu.memory_space<vmem>>, %arg2: memref<288x64xbf16, #tpu.memory_space<vmem>>, %arg3: memref<1x64xf32, #tpu.memory_space<vmem>>, %arg4: memref<1x64xf32, #tpu.memory_space<vmem>>, %arg5: memref<576x64xbf16, #tpu.memory_space<vmem>>, %arg6: memref<1x64xf32, #tpu.memory_space<vmem>>, %arg7: memref<1x64xf32, #tpu.memory_space<vmem>>, %arg8: memref<64x64xbf16, #tpu.memory_space<vmem>>, %arg9: memref<1x64xf32, #tpu.memory_space<vmem>>, %arg10: memref<288x32xbf16, #tpu.memory_space<vmem>>, %arg11: memref<1x32xf32, #tpu.memory_space<vmem>>, %arg12: memref<1x32xf32, #tpu.memory_space<vmem>>, %arg13: memref<288x32xbf16, #tpu.memory_space<vmem>>, %arg14: memref<1x32xf32, #tpu.memory_space<vmem>>, %arg15: memref<1x32xf32, #tpu.memory_space<vmem>>, %arg16: memref<32x8xbf16, #tpu.memory_space<vmem>>, %arg17: memref<1x8xf32, #tpu.memory_space<vmem>>, %arg18: memref<1x64x72xf32, #tpu.memory_space<vmem>>, %arg19: memref<10x10x32xf32, #tpu.memory_space<vmem>>, %arg20: memref<10x10x64xf32, #tpu.memory_space<vmem>>, %arg21: memref<10x10x32xf32, #tpu.memory_space<vmem>>) attributes {dimension_semantics = [#tpu.dimension_semantics<parallel>], iteration_bounds = array<i64: 2>, scalar_prefetch = 0 : i64, scratch_operands = 3 : i64, tpu.core_type = #tpu.core_type<tc>, window_params = [{transform_indices = @transform_0, window_bounds = array<i64: 1, 8, 8, 32>}, {pipeline_mode = #tpu.pipeline_mode<synchronous>, transform_indices = @transform_1, window_bounds = array<i64: 288, 64>}, {pipeline_mode = #tpu.pipeline_mode<synchronous>, transform_indices = @transform_2, window_bounds = array<i64: 1, 64>}, {pipeline_mode = #tpu.pipeline_mode<synchronous>, transform_indices = @transform_3, window_bounds = array<i64: 1, 64>}, {pipeline_mode = #tpu.pipeline_mode<synchronous>, transform_indices = @transform_4, window_bounds = array<i64: 576, 64>}, {pipeline_mode = #tpu.pipeline_mode<synchronous>, transform_indices = @transform_5, window_bounds = array<i64: 1, 64>}, {pipeline_mode = #tpu.pipeline_mode<synchronous>, transform_indices = @transform_6, window_bounds = array<i64: 1, 64>}, {pipeline_mode = #tpu.pipeline_mode<synchronous>, transform_indices = @transform_7, window_bounds = array<i64: 64, 64>}, {pipeline_mode = #tpu.pipeline_mode<synchronous>, transform_indices = @transform_8, window_bounds = array<i64: 1, 64>}, {pipeline_mode = #tpu.pipeline_mode<synchronous>, transform_indices = @transform_9, window_bounds = array<i64: 288, 32>}, {pipeline_mode = #tpu.pipeline_mode<synchronous>, transform_indices = @transform_10, window_bounds = array<i64: 1, 32>}, {pipeline_mode = #tpu.pipeline_mode<synchronous>, transform_indices = @transform_11, window_bounds = array<i64: 1, 32>}, {pipeline_mode = #tpu.pipeline_mode<synchronous>, transform_indices = @transform_12, window_bounds = array<i64: 288, 32>}, {pipeline_mode = #tpu.pipeline_mode<synchronous>, transform_indices = @transform_13, window_bounds = array<i64: 1, 32>}, {pipeline_mode = #tpu.pipeline_mode<synchronous>, transform_indices = @transform_14, window_bounds = array<i64: 1, 32>}, {pipeline_mode = #tpu.pipeline_mode<synchronous>, transform_indices = @transform_15, window_bounds = array<i64: 32, 8>}, {pipeline_mode = #tpu.pipeline_mode<synchronous>, transform_indices = @transform_16, window_bounds = array<i64: 1, 8>}, {transform_indices = @transform_17, window_bounds = array<i64: 1, 64, 72>}]} {
    %cst = arith.constant 0.000000e+00 : f32
    %0 = vector.broadcast %cst : f32 to vector<1x10x32xf32>
    %cst_0 = arith.constant 0.000000e+00 : f32
    %1 = vector.broadcast %cst_0 : f32 to vector<10x1x32xf32>
    %c0 = arith.constant 0 : index
    %c0_1 = arith.constant 0 : index
    %c0_2 = arith.constant 0 : index
    %2 = vector.load %arg19[%c0, %c0_1, %c0_2] : memref<10x10x32xf32, #tpu.memory_space<vmem>>, vector<1x10x32xf32>
    tpu.vector_store %arg19[%c0, %c0_1, %c0_2], %0 {strides = array<i32>} : memref<10x10x32xf32, #tpu.memory_space<vmem>>, vector<1x10x32xf32>,
    %c9 = arith.constant 9 : index
    %c0_3 = arith.constant 0 : index
    %c0_4 = arith.constant 0 : index
    %3 = vector.load %arg19[%c9, %c0_3, %c0_4] : memref<10x10x32xf32, #tpu.memory_space<vmem>>, vector<1x10x32xf32>
    tpu.vector_store %arg19[%c9, %c0_3, %c0_4], %0 {strides = array<i32>} : memref<10x10x32xf32, #tpu.memory_space<vmem>>, vector<1x10x32xf32>,
    %c0_5 = arith.constant 0 : index
    %c0_6 = arith.constant 0 : index
    %c0_7 = arith.constant 0 : index
    %4 = vector.load %arg19[%c0_5, %c0_6, %c0_7] : memref<10x10x32xf32, #tpu.memory_space<vmem>>, vector<10x1x32xf32>
    tpu.vector_store %arg19[%c0_5, %c0_6, %c0_7], %1 {strides = array<i32>} : memref<10x10x32xf32, #tpu.memory_space<vmem>>, vector<10x1x32xf32>,
    %c0_8 = arith.constant 0 : index
    %c9_9 = arith.constant 9 : index
    %c0_10 = arith.constant 0 : index
    %5 = vector.load %arg19[%c0_8, %c9_9, %c0_10] : memref<10x10x32xf32, #tpu.memory_space<vmem>>, vector<10x1x32xf32>
    tpu.vector_store %arg19[%c0_8, %c9_9, %c0_10], %1 {strides = array<i32>} : memref<10x10x32xf32, #tpu.memory_space<vmem>>, vector<10x1x32xf32>,
    %cst_11 = arith.constant 0.000000e+00 : f32
    %6 = vector.broadcast %cst_11 : f32 to vector<1x10x64xf32>
    %cst_12 = arith.constant 0.000000e+00 : f32
    %7 = vector.broadcast %cst_12 : f32 to vector<10x1x64xf32>
    %c0_13 = arith.constant 0 : index
    %c0_14 = arith.constant 0 : index
    %c0_15 = arith.constant 0 : index
    %8 = vector.load %arg20[%c0_13, %c0_14, %c0_15] : memref<10x10x64xf32, #tpu.memory_space<vmem>>, vector<1x10x64xf32>
    tpu.vector_store %arg20[%c0_13, %c0_14, %c0_15], %6 {strides = array<i32>} : memref<10x10x64xf32, #tpu.memory_space<vmem>>, vector<1x10x64xf32>,
    %c9_16 = arith.constant 9 : index
    %c0_17 = arith.constant 0 : index
    %c0_18 = arith.constant 0 : index
    %9 = vector.load %arg20[%c9_16, %c0_17, %c0_18] : memref<10x10x64xf32, #tpu.memory_space<vmem>>, vector<1x10x64xf32>
    tpu.vector_store %arg20[%c9_16, %c0_17, %c0_18], %6 {strides = array<i32>} : memref<10x10x64xf32, #tpu.memory_space<vmem>>, vector<1x10x64xf32>,
    %c0_19 = arith.constant 0 : index
    %c0_20 = arith.constant 0 : index
    %c0_21 = arith.constant 0 : index
    %10 = vector.load %arg20[%c0_19, %c0_20, %c0_21] : memref<10x10x64xf32, #tpu.memory_space<vmem>>, vector<10x1x64xf32>
    tpu.vector_store %arg20[%c0_19, %c0_20, %c0_21], %7 {strides = array<i32>} : memref<10x10x64xf32, #tpu.memory_space<vmem>>, vector<10x1x64xf32>,
    %c0_22 = arith.constant 0 : index
    %c9_23 = arith.constant 9 : index
    %c0_24 = arith.constant 0 : index
    %11 = vector.load %arg20[%c0_22, %c9_23, %c0_24] : memref<10x10x64xf32, #tpu.memory_space<vmem>>, vector<10x1x64xf32>
    tpu.vector_store %arg20[%c0_22, %c9_23, %c0_24], %7 {strides = array<i32>} : memref<10x10x64xf32, #tpu.memory_space<vmem>>, vector<10x1x64xf32>,
    %cst_25 = arith.constant 0.000000e+00 : f32
    %12 = vector.broadcast %cst_25 : f32 to vector<1x10x32xf32>
    %cst_26 = arith.constant 0.000000e+00 : f32
    %13 = vector.broadcast %cst_26 : f32 to vector<10x1x32xf32>
    %c0_27 = arith.constant 0 : index
    %c0_28 = arith.constant 0 : index
    %c0_29 = arith.constant 0 : index
    %14 = vector.load %arg21[%c0_27, %c0_28, %c0_29] : memref<10x10x32xf32, #tpu.memory_space<vmem>>, vector<1x10x32xf32>
    tpu.vector_store %arg21[%c0_27, %c0_28, %c0_29], %12 {strides = array<i32>} : memref<10x10x32xf32, #tpu.memory_space<vmem>>, vector<1x10x32xf32>,
    %c9_30 = arith.constant 9 : index
    %c0_31 = arith.constant 0 : index
    %c0_32 = arith.constant 0 : index
    %15 = vector.load %arg21[%c9_30, %c0_31, %c0_32] : memref<10x10x32xf32, #tpu.memory_space<vmem>>, vector<1x10x32xf32>
    tpu.vector_store %arg21[%c9_30, %c0_31, %c0_32], %12 {strides = array<i32>} : memref<10x10x32xf32, #tpu.memory_space<vmem>>, vector<1x10x32xf32>,
    %c0_33 = arith.constant 0 : index
    %c0_34 = arith.constant 0 : index
    %c0_35 = arith.constant 0 : index
    %16 = vector.load %arg21[%c0_33, %c0_34, %c0_35] : memref<10x10x32xf32, #tpu.memory_space<vmem>>, vector<10x1x32xf32>
    tpu.vector_store %arg21[%c0_33, %c0_34, %c0_35], %13 {strides = array<i32>} : memref<10x10x32xf32, #tpu.memory_space<vmem>>, vector<10x1x32xf32>,
    %c0_36 = arith.constant 0 : index
    %c9_37 = arith.constant 9 : index
    %c0_38 = arith.constant 0 : index
    %17 = vector.load %arg21[%c0_36, %c9_37, %c0_38] : memref<10x10x32xf32, #tpu.memory_space<vmem>>, vector<10x1x32xf32>
    tpu.vector_store %arg21[%c0_36, %c9_37, %c0_38], %13 {strides = array<i32>} : memref<10x10x32xf32, #tpu.memory_space<vmem>>, vector<10x1x32xf32>,
    %c0_39 = arith.constant 0 : index
    %c0_40 = arith.constant 0 : index
    %c0_41 = arith.constant 0 : index
    %c0_42 = arith.constant 0 : index
    %18 = vector.load %arg1[%c0_39, %c0_40, %c0_41, %c0_42] : memref<1x8x8x32xf32, #tpu.memory_space<vmem>>, vector<1x8x8x32xf32>
    %19 = vector.shape_cast %18 : vector<1x8x8x32xf32> to vector<8x8x32xf32>
    %c1 = arith.constant 1 : index
    %c1_43 = arith.constant 1 : index
    %c0_44 = arith.constant 0 : index
    %20 = vector.load %arg19[%c1, %c1_43, %c0_44] : memref<10x10x32xf32, #tpu.memory_space<vmem>>, vector<8x8x32xf32>
    tpu.vector_store %arg19[%c1, %c1_43, %c0_44], %19 {strides = array<i32>} : memref<10x10x32xf32, #tpu.memory_space<vmem>>, vector<8x8x32xf32>,
    %c0_45 = arith.constant 0 : index
    %c0_46 = arith.constant 0 : index
    %c0_47 = arith.constant 0 : index
    %21 = vector.load %arg19[%c0_45, %c0_46, %c0_47] : memref<10x10x32xf32, #tpu.memory_space<vmem>>, vector<8x8x32xf32>
    %22 = vector.shape_cast %21 : vector<8x8x32xf32> to vector<64x32xf32>
    %c0_48 = arith.constant 0 : index
    %c1_49 = arith.constant 1 : index
    %c0_50 = arith.constant 0 : index
    %23 = vector.load %arg19[%c0_48, %c1_49, %c0_50] : memref<10x10x32xf32, #tpu.memory_space<vmem>>, vector<8x8x32xf32>
    %24 = vector.shape_cast %23 : vector<8x8x32xf32> to vector<64x32xf32>
    %c0_51 = arith.constant 0 : index
    %c2 = arith.constant 2 : index
    %c0_52 = arith.constant 0 : index
    %25 = vector.load %arg19[%c0_51, %c2, %c0_52] : memref<10x10x32xf32, #tpu.memory_space<vmem>>, vector<8x8x32xf32>
    %26 = vector.shape_cast %25 : vector<8x8x32xf32> to vector<64x32xf32>
    %c1_53 = arith.constant 1 : index
    %c0_54 = arith.constant 0 : index
    %c0_55 = arith.constant 0 : index
    %27 = vector.load %arg19[%c1_53, %c0_54, %c0_55] : memref<10x10x32xf32, #tpu.memory_space<vmem>>, vector<8x8x32xf32>
    %28 = vector.shape_cast %27 : vector<8x8x32xf32> to vector<64x32xf32>
    %c1_56 = arith.constant 1 : index
    %c1_57 = arith.constant 1 : index
    %c0_58 = arith.constant 0 : index
    %29 = vector.load %arg19[%c1_56, %c1_57, %c0_58] : memref<10x10x32xf32, #tpu.memory_space<vmem>>, vector<8x8x32xf32>
    %30 = vector.shape_cast %29 : vector<8x8x32xf32> to vector<64x32xf32>
    %c1_59 = arith.constant 1 : index
    %c2_60 = arith.constant 2 : index
    %c0_61 = arith.constant 0 : index
    %31 = vector.load %arg19[%c1_59, %c2_60, %c0_61] : memref<10x10x32xf32, #tpu.memory_space<vmem>>, vector<8x8x32xf32>
    %32 = vector.shape_cast %31 : vector<8x8x32xf32> to vector<64x32xf32>
    %c2_62 = arith.constant 2 : index
    %c0_63 = arith.constant 0 : index
    %c0_64 = arith.constant 0 : index
    %33 = vector.load %arg19[%c2_62, %c0_63, %c0_64] : memref<10x10x32xf32, #tpu.memory_space<vmem>>, vector<8x8x32xf32>
    %34 = vector.shape_cast %33 : vector<8x8x32xf32> to vector<64x32xf32>
    %c2_65 = arith.constant 2 : index
    %c1_66 = arith.constant 1 : index
    %c0_67 = arith.constant 0 : index
    %35 = vector.load %arg19[%c2_65, %c1_66, %c0_67] : memref<10x10x32xf32, #tpu.memory_space<vmem>>, vector<8x8x32xf32>
    %36 = vector.shape_cast %35 : vector<8x8x32xf32> to vector<64x32xf32>
    %c2_68 = arith.constant 2 : index
    %c2_69 = arith.constant 2 : index
    %c0_70 = arith.constant 0 : index
    %37 = vector.load %arg19[%c2_68, %c2_69, %c0_70] : memref<10x10x32xf32, #tpu.memory_space<vmem>>, vector<8x8x32xf32>
    %38 = vector.shape_cast %37 : vector<8x8x32xf32> to vector<64x32xf32>
    %39 = tpu.concatenate %22, %24, %26, %28, %30, %32, %34, %36, %38 in 1 : vector<64x32xf32>, vector<64x32xf32>, vector<64x32xf32>, vector<64x32xf32>, vector<64x32xf32>, vector<64x32xf32>, vector<64x32xf32>, vector<64x32xf32>, vector<64x32xf32> -> vector<64x288xf32>
    %40 = arith.truncf %39 : vector<64x288xf32> to vector<64x288xbf16>
    %c0_71 = arith.constant 0 : index
    %c0_72 = arith.constant 0 : index
    %41 = vector.load %arg2[%c0_71, %c0_72] : memref<288x64xbf16, #tpu.memory_space<vmem>>, vector<288x64xbf16>
    %cst_73 = arith.constant dense<0.000000e+00> : vector<64x64xf32>
    %42 = tpu.matmul %40, %41, %cst_73 {dimension_numbers = #tpu.dot_dimension_numbers<[1], [0], [0], [1], [0, 0, 1, 1], [], []>} : vector<64x288xbf16>, vector<288x64xbf16>, vector<64x64xf32> -> vector<64x64xf32>
    %c0_74 = arith.constant 0 : index
    %c0_75 = arith.constant 0 : index
    %43 = vector.load %arg3[%c0_74, %c0_75] : memref<1x64xf32, #tpu.memory_space<vmem>>, vector<1x64xf32>
    %44 = vector.shape_cast %43 : vector<1x64xf32> to vector<64xf32>
    %45 = vector.shape_cast %44 : vector<64xf32> to vector<1x64xf32>
    %46 = vector.broadcast %45 : vector<1x64xf32> to vector<64x64xf32>
    %47 = arith.mulf %42, %46 : vector<64x64xf32>
    %c0_76 = arith.constant 0 : index
    %c0_77 = arith.constant 0 : index
    %48 = vector.load %arg4[%c0_76, %c0_77] : memref<1x64xf32, #tpu.memory_space<vmem>>, vector<1x64xf32>
    %49 = vector.shape_cast %48 : vector<1x64xf32> to vector<64xf32>
    %50 = vector.shape_cast %49 : vector<64xf32> to vector<1x64xf32>
    %51 = vector.broadcast %50 : vector<1x64xf32> to vector<64x64xf32>
    %52 = arith.addf %47, %51 : vector<64x64xf32>
    %53 = arith.negf %52 : vector<64x64xf32>
    %54 = math.exp %53 : vector<64x64xf32>
    %cst_78 = arith.constant 1.000000e+00 : f32
    %55 = vector.broadcast %cst_78 : f32 to vector<64x64xf32>
    %56 = arith.addf %55, %54 : vector<64x64xf32>
    %57 = arith.divf %55, %56 : vector<64x64xf32>
    %58 = arith.mulf %52, %57 : vector<64x64xf32>
    %59 = vector.shape_cast %58 : vector<64x64xf32> to vector<8x8x64xf32>
    %c1_79 = arith.constant 1 : index
    %c1_80 = arith.constant 1 : index
    %c0_81 = arith.constant 0 : index
    %60 = vector.load %arg20[%c1_79, %c1_80, %c0_81] : memref<10x10x64xf32, #tpu.memory_space<vmem>>, vector<8x8x64xf32>
    tpu.vector_store %arg20[%c1_79, %c1_80, %c0_81], %59 {strides = array<i32>} : memref<10x10x64xf32, #tpu.memory_space<vmem>>, vector<8x8x64xf32>,
    %c0_82 = arith.constant 0 : index
    %c0_83 = arith.constant 0 : index
    %c0_84 = arith.constant 0 : index
    %61 = vector.load %arg20[%c0_82, %c0_83, %c0_84] : memref<10x10x64xf32, #tpu.memory_space<vmem>>, vector<8x8x64xf32>
    %62 = vector.shape_cast %61 : vector<8x8x64xf32> to vector<64x64xf32>
    %c0_85 = arith.constant 0 : index
    %c1_86 = arith.constant 1 : index
    %c0_87 = arith.constant 0 : index
    %63 = vector.load %arg20[%c0_85, %c1_86, %c0_87] : memref<10x10x64xf32, #tpu.memory_space<vmem>>, vector<8x8x64xf32>
    %64 = vector.shape_cast %63 : vector<8x8x64xf32> to vector<64x64xf32>
    %c0_88 = arith.constant 0 : index
    %c2_89 = arith.constant 2 : index
    %c0_90 = arith.constant 0 : index
    %65 = vector.load %arg20[%c0_88, %c2_89, %c0_90] : memref<10x10x64xf32, #tpu.memory_space<vmem>>, vector<8x8x64xf32>
    %66 = vector.shape_cast %65 : vector<8x8x64xf32> to vector<64x64xf32>
    %c1_91 = arith.constant 1 : index
    %c0_92 = arith.constant 0 : index
    %c0_93 = arith.constant 0 : index
    %67 = vector.load %arg20[%c1_91, %c0_92, %c0_93] : memref<10x10x64xf32, #tpu.memory_space<vmem>>, vector<8x8x64xf32>
    %68 = vector.shape_cast %67 : vector<8x8x64xf32> to vector<64x64xf32>
    %c1_94 = arith.constant 1 : index
    %c1_95 = arith.constant 1 : index
    %c0_96 = arith.constant 0 : index
    %69 = vector.load %arg20[%c1_94, %c1_95, %c0_96] : memref<10x10x64xf32, #tpu.memory_space<vmem>>, vector<8x8x64xf32>
    %70 = vector.shape_cast %69 : vector<8x8x64xf32> to vector<64x64xf32>
    %c1_97 = arith.constant 1 : index
    %c2_98 = arith.constant 2 : index
    %c0_99 = arith.constant 0 : index
    %71 = vector.load %arg20[%c1_97, %c2_98, %c0_99] : memref<10x10x64xf32, #tpu.memory_space<vmem>>, vector<8x8x64xf32>
    %72 = vector.shape_cast %71 : vector<8x8x64xf32> to vector<64x64xf32>
    %c2_100 = arith.constant 2 : index
    %c0_101 = arith.constant 0 : index
    %c0_102 = arith.constant 0 : index
    %73 = vector.load %arg20[%c2_100, %c0_101, %c0_102] : memref<10x10x64xf32, #tpu.memory_space<vmem>>, vector<8x8x64xf32>
    %74 = vector.shape_cast %73 : vector<8x8x64xf32> to vector<64x64xf32>
    %c2_103 = arith.constant 2 : index
    %c1_104 = arith.constant 1 : index
    %c0_105 = arith.constant 0 : index
    %75 = vector.load %arg20[%c2_103, %c1_104, %c0_105] : memref<10x10x64xf32, #tpu.memory_space<vmem>>, vector<8x8x64xf32>
    %76 = vector.shape_cast %75 : vector<8x8x64xf32> to vector<64x64xf32>
    %c2_106 = arith.constant 2 : index
    %c2_107 = arith.constant 2 : index
    %c0_108 = arith.constant 0 : index
    %77 = vector.load %arg20[%c2_106, %c2_107, %c0_108] : memref<10x10x64xf32, #tpu.memory_space<vmem>>, vector<8x8x64xf32>
    %78 = vector.shape_cast %77 : vector<8x8x64xf32> to vector<64x64xf32>
    %79 = tpu.concatenate %62, %64, %66, %68, %70, %72, %74, %76, %78 in 1 : vector<64x64xf32>, vector<64x64xf32>, vector<64x64xf32>, vector<64x64xf32>, vector<64x64xf32>, vector<64x64xf32>, vector<64x64xf32>, vector<64x64xf32>, vector<64x64xf32> -> vector<64x576xf32>
    %80 = arith.truncf %79 : vector<64x576xf32> to vector<64x576xbf16>
    %c0_109 = arith.constant 0 : index
    %c0_110 = arith.constant 0 : index
    %81 = vector.load %arg5[%c0_109, %c0_110] : memref<576x64xbf16, #tpu.memory_space<vmem>>, vector<576x64xbf16>
    %cst_111 = arith.constant dense<0.000000e+00> : vector<64x64xf32>
    %82 = tpu.matmul %80, %81, %cst_111 {dimension_numbers = #tpu.dot_dimension_numbers<[1], [0], [0], [1], [0, 0, 1, 1], [], []>} : vector<64x576xbf16>, vector<576x64xbf16>, vector<64x64xf32> -> vector<64x64xf32>
    %c0_112 = arith.constant 0 : index
    %c0_113 = arith.constant 0 : index
    %83 = vector.load %arg6[%c0_112, %c0_113] : memref<1x64xf32, #tpu.memory_space<vmem>>, vector<1x64xf32>
    %84 = vector.shape_cast %83 : vector<1x64xf32> to vector<64xf32>
    %85 = vector.shape_cast %84 : vector<64xf32> to vector<1x64xf32>
    %86 = vector.broadcast %85 : vector<1x64xf32> to vector<64x64xf32>
    %87 = arith.mulf %82, %86 : vector<64x64xf32>
    %c0_114 = arith.constant 0 : index
    %c0_115 = arith.constant 0 : index
    %88 = vector.load %arg7[%c0_114, %c0_115] : memref<1x64xf32, #tpu.memory_space<vmem>>, vector<1x64xf32>
    %89 = vector.shape_cast %88 : vector<1x64xf32> to vector<64xf32>
    %90 = vector.shape_cast %89 : vector<64xf32> to vector<1x64xf32>
    %91 = vector.broadcast %90 : vector<1x64xf32> to vector<64x64xf32>
    %92 = arith.addf %87, %91 : vector<64x64xf32>
    %93 = arith.negf %92 : vector<64x64xf32>
    %94 = math.exp %93 : vector<64x64xf32>
    %cst_116 = arith.constant 1.000000e+00 : f32
    %95 = vector.broadcast %cst_116 : f32 to vector<64x64xf32>
    %96 = arith.addf %95, %94 : vector<64x64xf32>
    %97 = arith.divf %95, %96 : vector<64x64xf32>
    %98 = arith.mulf %92, %97 : vector<64x64xf32>
    %99 = arith.truncf %98 : vector<64x64xf32> to vector<64x64xbf16>
    %c0_117 = arith.constant 0 : index
    %c0_118 = arith.constant 0 : index
    %100 = vector.load %arg8[%c0_117, %c0_118] : memref<64x64xbf16, #tpu.memory_space<vmem>>, vector<64x64xbf16>
    %cst_119 = arith.constant dense<0.000000e+00> : vector<64x64xf32>
    %101 = tpu.matmul %99, %100, %cst_119 {dimension_numbers = #tpu.dot_dimension_numbers<[1], [0], [0], [1], [0, 0, 1, 1], [], []>} : vector<64x64xbf16>, vector<64x64xbf16>, vector<64x64xf32> -> vector<64x64xf32>
    %c0_120 = arith.constant 0 : index
    %c0_121 = arith.constant 0 : index
    %102 = vector.load %arg9[%c0_120, %c0_121] : memref<1x64xf32, #tpu.memory_space<vmem>>, vector<1x64xf32>
    %103 = vector.shape_cast %102 : vector<1x64xf32> to vector<64xf32>
    %104 = vector.shape_cast %103 : vector<64xf32> to vector<1x64xf32>
    %105 = vector.broadcast %104 : vector<1x64xf32> to vector<64x64xf32>
    %106 = arith.addf %101, %105 : vector<64x64xf32>
    %c0_122 = arith.constant 0 : index
    %c0_123 = arith.constant 0 : index
    %c0_124 = arith.constant 0 : index
    %107 = vector.load %arg19[%c0_122, %c0_123, %c0_124] : memref<10x10x32xf32, #tpu.memory_space<vmem>>, vector<8x8x32xf32>
    %108 = vector.shape_cast %107 : vector<8x8x32xf32> to vector<64x32xf32>
    %c0_125 = arith.constant 0 : index
    %c1_126 = arith.constant 1 : index
    %c0_127 = arith.constant 0 : index
    %109 = vector.load %arg19[%c0_125, %c1_126, %c0_127] : memref<10x10x32xf32, #tpu.memory_space<vmem>>, vector<8x8x32xf32>
    %110 = vector.shape_cast %109 : vector<8x8x32xf32> to vector<64x32xf32>
    %c0_128 = arith.constant 0 : index
    %c2_129 = arith.constant 2 : index
    %c0_130 = arith.constant 0 : index
    %111 = vector.load %arg19[%c0_128, %c2_129, %c0_130] : memref<10x10x32xf32, #tpu.memory_space<vmem>>, vector<8x8x32xf32>
    %112 = vector.shape_cast %111 : vector<8x8x32xf32> to vector<64x32xf32>
    %c1_131 = arith.constant 1 : index
    %c0_132 = arith.constant 0 : index
    %c0_133 = arith.constant 0 : index
    %113 = vector.load %arg19[%c1_131, %c0_132, %c0_133] : memref<10x10x32xf32, #tpu.memory_space<vmem>>, vector<8x8x32xf32>
    %114 = vector.shape_cast %113 : vector<8x8x32xf32> to vector<64x32xf32>
    %c1_134 = arith.constant 1 : index
    %c1_135 = arith.constant 1 : index
    %c0_136 = arith.constant 0 : index
    %115 = vector.load %arg19[%c1_134, %c1_135, %c0_136] : memref<10x10x32xf32, #tpu.memory_space<vmem>>, vector<8x8x32xf32>
    %116 = vector.shape_cast %115 : vector<8x8x32xf32> to vector<64x32xf32>
    %c1_137 = arith.constant 1 : index
    %c2_138 = arith.constant 2 : index
    %c0_139 = arith.constant 0 : index
    %117 = vector.load %arg19[%c1_137, %c2_138, %c0_139] : memref<10x10x32xf32, #tpu.memory_space<vmem>>, vector<8x8x32xf32>
    %118 = vector.shape_cast %117 : vector<8x8x32xf32> to vector<64x32xf32>
    %c2_140 = arith.constant 2 : index
    %c0_141 = arith.constant 0 : index
    %c0_142 = arith.constant 0 : index
    %119 = vector.load %arg19[%c2_140, %c0_141, %c0_142] : memref<10x10x32xf32, #tpu.memory_space<vmem>>, vector<8x8x32xf32>
    %120 = vector.shape_cast %119 : vector<8x8x32xf32> to vector<64x32xf32>
    %c2_143 = arith.constant 2 : index
    %c1_144 = arith.constant 1 : index
    %c0_145 = arith.constant 0 : index
    %121 = vector.load %arg19[%c2_143, %c1_144, %c0_145] : memref<10x10x32xf32, #tpu.memory_space<vmem>>, vector<8x8x32xf32>
    %122 = vector.shape_cast %121 : vector<8x8x32xf32> to vector<64x32xf32>
    %c2_146 = arith.constant 2 : index
    %c2_147 = arith.constant 2 : index
    %c0_148 = arith.constant 0 : index
    %123 = vector.load %arg19[%c2_146, %c2_147, %c0_148] : memref<10x10x32xf32, #tpu.memory_space<vmem>>, vector<8x8x32xf32>
    %124 = vector.shape_cast %123 : vector<8x8x32xf32> to vector<64x32xf32>
    %125 = tpu.concatenate %108, %110, %112, %114, %116, %118, %120, %122, %124 in 1 : vector<64x32xf32>, vector<64x32xf32>, vector<64x32xf32>, vector<64x32xf32>, vector<64x32xf32>, vector<64x32xf32>, vector<64x32xf32>, vector<64x32xf32>, vector<64x32xf32> -> vector<64x288xf32>
    %126 = arith.truncf %125 : vector<64x288xf32> to vector<64x288xbf16>
    %c0_149 = arith.constant 0 : index
    %c0_150 = arith.constant 0 : index
    %127 = vector.load %arg10[%c0_149, %c0_150] : memref<288x32xbf16, #tpu.memory_space<vmem>>, vector<288x32xbf16>
    %cst_151 = arith.constant dense<0.000000e+00> : vector<64x32xf32>
    %128 = tpu.matmul %126, %127, %cst_151 {dimension_numbers = #tpu.dot_dimension_numbers<[1], [0], [0], [1], [0, 0, 1, 1], [], []>} : vector<64x288xbf16>, vector<288x32xbf16>, vector<64x32xf32> -> vector<64x32xf32>
    %c0_152 = arith.constant 0 : index
    %c0_153 = arith.constant 0 : index
    %129 = vector.load %arg11[%c0_152, %c0_153] : memref<1x32xf32, #tpu.memory_space<vmem>>, vector<1x32xf32>
    %130 = vector.shape_cast %129 : vector<1x32xf32> to vector<32xf32>
    %131 = vector.shape_cast %130 : vector<32xf32> to vector<1x32xf32>
    %132 = vector.broadcast %131 : vector<1x32xf32> to vector<64x32xf32>
    %133 = arith.mulf %128, %132 : vector<64x32xf32>
    %c0_154 = arith.constant 0 : index
    %c0_155 = arith.constant 0 : index
    %134 = vector.load %arg12[%c0_154, %c0_155] : memref<1x32xf32, #tpu.memory_space<vmem>>, vector<1x32xf32>
    %135 = vector.shape_cast %134 : vector<1x32xf32> to vector<32xf32>
    %136 = vector.shape_cast %135 : vector<32xf32> to vector<1x32xf32>
    %137 = vector.broadcast %136 : vector<1x32xf32> to vector<64x32xf32>
    %138 = arith.addf %133, %137 : vector<64x32xf32>
    %139 = arith.negf %138 : vector<64x32xf32>
    %140 = math.exp %139 : vector<64x32xf32>
    %cst_156 = arith.constant 1.000000e+00 : f32
    %141 = vector.broadcast %cst_156 : f32 to vector<64x32xf32>
    %142 = arith.addf %141, %140 : vector<64x32xf32>
    %143 = arith.divf %141, %142 : vector<64x32xf32>
    %144 = arith.mulf %138, %143 : vector<64x32xf32>
    %145 = vector.shape_cast %144 : vector<64x32xf32> to vector<8x8x32xf32>
    %c1_157 = arith.constant 1 : index
    %c1_158 = arith.constant 1 : index
    %c0_159 = arith.constant 0 : index
    %146 = vector.load %arg21[%c1_157, %c1_158, %c0_159] : memref<10x10x32xf32, #tpu.memory_space<vmem>>, vector<8x8x32xf32>
    tpu.vector_store %arg21[%c1_157, %c1_158, %c0_159], %145 {strides = array<i32>} : memref<10x10x32xf32, #tpu.memory_space<vmem>>, vector<8x8x32xf32>,
    %c0_160 = arith.constant 0 : index
    %c0_161 = arith.constant 0 : index
    %c0_162 = arith.constant 0 : index
    %147 = vector.load %arg21[%c0_160, %c0_161, %c0_162] : memref<10x10x32xf32, #tpu.memory_space<vmem>>, vector<8x8x32xf32>
    %148 = vector.shape_cast %147 : vector<8x8x32xf32> to vector<64x32xf32>
    %c0_163 = arith.constant 0 : index
    %c1_164 = arith.constant 1 : index
    %c0_165 = arith.constant 0 : index
    %149 = vector.load %arg21[%c0_163, %c1_164, %c0_165] : memref<10x10x32xf32, #tpu.memory_space<vmem>>, vector<8x8x32xf32>
    %150 = vector.shape_cast %149 : vector<8x8x32xf32> to vector<64x32xf32>
    %c0_166 = arith.constant 0 : index
    %c2_167 = arith.constant 2 : index
    %c0_168 = arith.constant 0 : index
    %151 = vector.load %arg21[%c0_166, %c2_167, %c0_168] : memref<10x10x32xf32, #tpu.memory_space<vmem>>, vector<8x8x32xf32>
    %152 = vector.shape_cast %151 : vector<8x8x32xf32> to vector<64x32xf32>
    %c1_169 = arith.constant 1 : index
    %c0_170 = arith.constant 0 : index
    %c0_171 = arith.constant 0 : index
    %153 = vector.load %arg21[%c1_169, %c0_170, %c0_171] : memref<10x10x32xf32, #tpu.memory_space<vmem>>, vector<8x8x32xf32>
    %154 = vector.shape_cast %153 : vector<8x8x32xf32> to vector<64x32xf32>
    %c1_172 = arith.constant 1 : index
    %c1_173 = arith.constant 1 : index
    %c0_174 = arith.constant 0 : index
    %155 = vector.load %arg21[%c1_172, %c1_173, %c0_174] : memref<10x10x32xf32, #tpu.memory_space<vmem>>, vector<8x8x32xf32>
    %156 = vector.shape_cast %155 : vector<8x8x32xf32> to vector<64x32xf32>
    %c1_175 = arith.constant 1 : index
    %c2_176 = arith.constant 2 : index
    %c0_177 = arith.constant 0 : index
    %157 = vector.load %arg21[%c1_175, %c2_176, %c0_177] : memref<10x10x32xf32, #tpu.memory_space<vmem>>, vector<8x8x32xf32>
    %158 = vector.shape_cast %157 : vector<8x8x32xf32> to vector<64x32xf32>
    %c2_178 = arith.constant 2 : index
    %c0_179 = arith.constant 0 : index
    %c0_180 = arith.constant 0 : index
    %159 = vector.load %arg21[%c2_178, %c0_179, %c0_180] : memref<10x10x32xf32, #tpu.memory_space<vmem>>, vector<8x8x32xf32>
    %160 = vector.shape_cast %159 : vector<8x8x32xf32> to vector<64x32xf32>
    %c2_181 = arith.constant 2 : index
    %c1_182 = arith.constant 1 : index
    %c0_183 = arith.constant 0 : index
    %161 = vector.load %arg21[%c2_181, %c1_182, %c0_183] : memref<10x10x32xf32, #tpu.memory_space<vmem>>, vector<8x8x32xf32>
    %162 = vector.shape_cast %161 : vector<8x8x32xf32> to vector<64x32xf32>
    %c2_184 = arith.constant 2 : index
    %c2_185 = arith.constant 2 : index
    %c0_186 = arith.constant 0 : index
    %163 = vector.load %arg21[%c2_184, %c2_185, %c0_186] : memref<10x10x32xf32, #tpu.memory_space<vmem>>, vector<8x8x32xf32>
    %164 = vector.shape_cast %163 : vector<8x8x32xf32> to vector<64x32xf32>
    %165 = tpu.concatenate %148, %150, %152, %154, %156, %158, %160, %162, %164 in 1 : vector<64x32xf32>, vector<64x32xf32>, vector<64x32xf32>, vector<64x32xf32>, vector<64x32xf32>, vector<64x32xf32>, vector<64x32xf32>, vector<64x32xf32>, vector<64x32xf32> -> vector<64x288xf32>
    %166 = arith.truncf %165 : vector<64x288xf32> to vector<64x288xbf16>
    %c0_187 = arith.constant 0 : index
    %c0_188 = arith.constant 0 : index
    %167 = vector.load %arg13[%c0_187, %c0_188] : memref<288x32xbf16, #tpu.memory_space<vmem>>, vector<288x32xbf16>
    %cst_189 = arith.constant dense<0.000000e+00> : vector<64x32xf32>
    %168 = tpu.matmul %166, %167, %cst_189 {dimension_numbers = #tpu.dot_dimension_numbers<[1], [0], [0], [1], [0, 0, 1, 1], [], []>} : vector<64x288xbf16>, vector<288x32xbf16>, vector<64x32xf32> -> vector<64x32xf32>
    %c0_190 = arith.constant 0 : index
    %c0_191 = arith.constant 0 : index
    %169 = vector.load %arg14[%c0_190, %c0_191] : memref<1x32xf32, #tpu.memory_space<vmem>>, vector<1x32xf32>
    %170 = vector.shape_cast %169 : vector<1x32xf32> to vector<32xf32>
    %171 = vector.shape_cast %170 : vector<32xf32> to vector<1x32xf32>
    %172 = vector.broadcast %171 : vector<1x32xf32> to vector<64x32xf32>
    %173 = arith.mulf %168, %172 : vector<64x32xf32>
    %c0_192 = arith.constant 0 : index
    %c0_193 = arith.constant 0 : index
    %174 = vector.load %arg15[%c0_192, %c0_193] : memref<1x32xf32, #tpu.memory_space<vmem>>, vector<1x32xf32>
    %175 = vector.shape_cast %174 : vector<1x32xf32> to vector<32xf32>
    %176 = vector.shape_cast %175 : vector<32xf32> to vector<1x32xf32>
    %177 = vector.broadcast %176 : vector<1x32xf32> to vector<64x32xf32>
    %178 = arith.addf %173, %177 : vector<64x32xf32>
    %179 = arith.negf %178 : vector<64x32xf32>
    %180 = math.exp %179 : vector<64x32xf32>
    %cst_194 = arith.constant 1.000000e+00 : f32
    %181 = vector.broadcast %cst_194 : f32 to vector<64x32xf32>
    %182 = arith.addf %181, %180 : vector<64x32xf32>
    %183 = arith.divf %181, %182 : vector<64x32xf32>
    %184 = arith.mulf %178, %183 : vector<64x32xf32>
    %185 = arith.truncf %184 : vector<64x32xf32> to vector<64x32xbf16>
    %c0_195 = arith.constant 0 : index
    %c0_196 = arith.constant 0 : index
    %186 = vector.load %arg16[%c0_195, %c0_196] : memref<32x8xbf16, #tpu.memory_space<vmem>>, vector<32x8xbf16>
    %cst_197 = arith.constant dense<0.000000e+00> : vector<64x8xf32>
    %187 = tpu.matmul %185, %186, %cst_197 {dimension_numbers = #tpu.dot_dimension_numbers<[1], [0], [0], [1], [0, 0, 1, 1], [], []>} : vector<64x32xbf16>, vector<32x8xbf16>, vector<64x8xf32> -> vector<64x8xf32>
    %c0_198 = arith.constant 0 : index
    %c0_199 = arith.constant 0 : index
    %188 = vector.load %arg17[%c0_198, %c0_199] : memref<1x8xf32, #tpu.memory_space<vmem>>, vector<1x8xf32>
    %189 = vector.shape_cast %188 : vector<1x8xf32> to vector<8xf32>
    %190 = vector.shape_cast %189 : vector<8xf32> to vector<1x8xf32>
    %191 = vector.broadcast %190 : vector<1x8xf32> to vector<64x8xf32>
    %192 = arith.addf %187, %191 : vector<64x8xf32>
    %193 = tpu.concatenate %106, %192 in 1 : vector<64x64xf32>, vector<64x8xf32> -> vector<64x72xf32>
    %c0_200 = arith.constant 0 : index
    %c0_201 = arith.constant 0 : index
    %c0_202 = arith.constant 0 : index
    %194 = vector.load %arg18[%c0_200, %c0_201, %c0_202] : memref<1x64x72xf32, #tpu.memory_space<vmem>>, vector<1x64x72xf32>
    %195 = vector.shape_cast %194 : vector<1x64x72xf32> to vector<64x72xf32>
    %196 = vector.shape_cast %193 : vector<64x72xf32> to vector<1x64x72xf32>
    tpu.vector_store %arg18[%c0_200, %c0_201, %c0_202], %196 {strides = array<i32>} : memref<1x64x72xf32, #tpu.memory_space<vmem>>, vector<1x64x72xf32>,
    return
  }
  func.func @transform_0(%arg0: i32) -> (i32, i32, i32, i32) {
    %c0_i32 = arith.constant 0 : i32
    %c0_i32_0 = arith.constant 0 : i32
    %c0_i32_1 = arith.constant 0 : i32
    %c0_i32_2 = arith.constant 0 : i32
    return %arg0, %c0_i32, %c0_i32_0, %c0_i32_1 : i32, i32, i32, i32
  }
  func.func @transform_1(%arg0: i32) -> (i32, i32) {
    %c0_i32 = arith.constant 0 : i32
    %c0_i32_0 = arith.constant 0 : i32
    %c0_i32_1 = arith.constant 0 : i32
    return %c0_i32, %c0_i32_0 : i32, i32
  }
  func.func @transform_2(%arg0: i32) -> (i32, i32) {
    %c0_i32 = arith.constant 0 : i32
    %c0_i32_0 = arith.constant 0 : i32
    %c0_i32_1 = arith.constant 0 : i32
    return %c0_i32, %c0_i32_0 : i32, i32
  }
  func.func @transform_3(%arg0: i32) -> (i32, i32) {
    %c0_i32 = arith.constant 0 : i32
    %c0_i32_0 = arith.constant 0 : i32
    %c0_i32_1 = arith.constant 0 : i32
    return %c0_i32, %c0_i32_0 : i32, i32
  }
  func.func @transform_4(%arg0: i32) -> (i32, i32) {
    %c0_i32 = arith.constant 0 : i32
    %c0_i32_0 = arith.constant 0 : i32
    %c0_i32_1 = arith.constant 0 : i32
    return %c0_i32, %c0_i32_0 : i32, i32
  }
  func.func @transform_5(%arg0: i32) -> (i32, i32) {
    %c0_i32 = arith.constant 0 : i32
    %c0_i32_0 = arith.constant 0 : i32
    %c0_i32_1 = arith.constant 0 : i32
    return %c0_i32, %c0_i32_0 : i32, i32
  }
  func.func @transform_6(%arg0: i32) -> (i32, i32) {
    %c0_i32 = arith.constant 0 : i32
    %c0_i32_0 = arith.constant 0 : i32
    %c0_i32_1 = arith.constant 0 : i32
    return %c0_i32, %c0_i32_0 : i32, i32
  }
  func.func @transform_7(%arg0: i32) -> (i32, i32) {
    %c0_i32 = arith.constant 0 : i32
    %c0_i32_0 = arith.constant 0 : i32
    %c0_i32_1 = arith.constant 0 : i32
    return %c0_i32, %c0_i32_0 : i32, i32
  }
  func.func @transform_8(%arg0: i32) -> (i32, i32) {
    %c0_i32 = arith.constant 0 : i32
    %c0_i32_0 = arith.constant 0 : i32
    %c0_i32_1 = arith.constant 0 : i32
    return %c0_i32, %c0_i32_0 : i32, i32
  }
  func.func @transform_9(%arg0: i32) -> (i32, i32) {
    %c0_i32 = arith.constant 0 : i32
    %c0_i32_0 = arith.constant 0 : i32
    %c0_i32_1 = arith.constant 0 : i32
    return %c0_i32, %c0_i32_0 : i32, i32
  }
  func.func @transform_10(%arg0: i32) -> (i32, i32) {
    %c0_i32 = arith.constant 0 : i32
    %c0_i32_0 = arith.constant 0 : i32
    %c0_i32_1 = arith.constant 0 : i32
    return %c0_i32, %c0_i32_0 : i32, i32
  }
  func.func @transform_11(%arg0: i32) -> (i32, i32) {
    %c0_i32 = arith.constant 0 : i32
    %c0_i32_0 = arith.constant 0 : i32
    %c0_i32_1 = arith.constant 0 : i32
    return %c0_i32, %c0_i32_0 : i32, i32
  }
  func.func @transform_12(%arg0: i32) -> (i32, i32) {
    %c0_i32 = arith.constant 0 : i32
    %c0_i32_0 = arith.constant 0 : i32
    %c0_i32_1 = arith.constant 0 : i32
    return %c0_i32, %c0_i32_0 : i32, i32
  }
  func.func @transform_13(%arg0: i32) -> (i32, i32) {
    %c0_i32 = arith.constant 0 : i32
    %c0_i32_0 = arith.constant 0 : i32
    %c0_i32_1 = arith.constant 0 : i32
    return %c0_i32, %c0_i32_0 : i32, i32
  }
  func.func @transform_14(%arg0: i32) -> (i32, i32) {
    %c0_i32 = arith.constant 0 : i32
    %c0_i32_0 = arith.constant 0 : i32
    %c0_i32_1 = arith.constant 0 : i32
    return %c0_i32, %c0_i32_0 : i32, i32
  }
  func.func @transform_15(%arg0: i32) -> (i32, i32) {
    %c0_i32 = arith.constant 0 : i32
    %c0_i32_0 = arith.constant 0 : i32
    %c0_i32_1 = arith.constant 0 : i32
    return %c0_i32, %c0_i32_0 : i32, i32
  }
  func.func @transform_16(%arg0: i32) -> (i32, i32) {
    %c0_i32 = arith.constant 0 : i32
    %c0_i32_0 = arith.constant 0 : i32
    %c0_i32_1 = arith.constant 0 : i32
    return %c0_i32, %c0_i32_0 : i32, i32
  }
  func.func @transform_17(%arg0: i32) -> (i32, i32, i32) {
    %c0_i32 = arith.constant 0 : i32
    %c0_i32_0 = arith.constant 0 : i32
    %c0_i32_1 = arith.constant 0 : i32
    return %arg0, %c0_i32, %c0_i32_0 : i32, i32, i32
  }
}

</mosaic_0001>

<llo_original>
// kernel: tpu_custom_call.1
$region0: #{tpu_custom_call.1}
  #allocation0 [shape = 'u32[]', space=smem, size = 0x4, offset = 0x4, fixed_abs, tag = 'smem constant byte address 0x4 - core index']
  #allocation1 [shape = 'u32[72,128]{1,0:T(1,128)}', space=vmem, size = 0x9000, scoped, tag = 'internal scratch']
  #allocation2 [shape = 'f32[10,10,32]{2,1,0:T(8,128)}', space=vmem, size = 0x14000, scoped, tag = 'scratch operand']
  #allocation3 [shape = 'f32[10,10,64]{2,1,0:T(8,128)}', space=vmem, size = 0x14000, scoped, tag = 'scratch operand']
  #allocation4 [shape = 'f32[10,10,32]{2,1,0:T(8,128)}', space=vmem, size = 0x14000, scoped, tag = 'scratch operand']
  %s0 = inlined_call_operand.vmem [shape: f32[2,8,8,32], index: 0, kind: input, shape index: {}]
  %s1 = inlined_call_operand.vmem [shape: bf16[288,64], index: 1, kind: input, shape index: {}]
  %s2 = inlined_call_operand.vmem [shape: f32[1,64], index: 2, kind: input, shape index: {}]
  %s3 = inlined_call_operand.vmem [shape: f32[1,64], index: 3, kind: input, shape index: {}]
  %s4 = inlined_call_operand.vmem [shape: bf16[576,64], index: 4, kind: input, shape index: {}]
  %s5 = inlined_call_operand.vmem [shape: f32[1,64], index: 5, kind: input, shape index: {}]
  %s6 = inlined_call_operand.vmem [shape: f32[1,64], index: 6, kind: input, shape index: {}]
  %s7 = inlined_call_operand.vmem [shape: bf16[64,64], index: 7, kind: input, shape index: {}]
  %s8 = inlined_call_operand.vmem [shape: f32[1,64], index: 8, kind: input, shape index: {}]
  %s9 = inlined_call_operand.vmem [shape: bf16[288,32], index: 9, kind: input, shape index: {}]
  %s10 = inlined_call_operand.vmem [shape: f32[1,32], index: 10, kind: input, shape index: {}]
  %s11 = inlined_call_operand.vmem [shape: f32[1,32], index: 11, kind: input, shape index: {}]
  %s12 = inlined_call_operand.vmem [shape: bf16[288,32], index: 12, kind: input, shape index: {}]
  %s13 = inlined_call_operand.vmem [shape: f32[1,32], index: 13, kind: input, shape index: {}]
  %s14 = inlined_call_operand.vmem [shape: f32[1,32], index: 14, kind: input, shape index: {}]
  %s15 = inlined_call_operand.vmem [shape: bf16[32,8], index: 15, kind: input, shape index: {}]
  %s16 = inlined_call_operand.vmem [shape: f32[1,8], index: 16, kind: input, shape index: {}]
  %s17 = inlined_call_operand.hbm [shape: f32[2,64,72], index: 17, kind: output, shape index: {}]
  %s18 = sld [smem:[#allocation0]]
  $region101: #{tpu_custom_call.1} parent=0
    _
  %s20 = ssub.s32 1, %s18
  %s21 = scalar_select 0, %s20, %s18
  $region1: #{tpu_custom_call.1} parent=0
    #allocation5 [shape = 'u8[65536]{0}', space=vmem, size = 0x10000, scoped, tag = 'output window, operand 0']
    #allocation6 [shape = 's32[2]{0}', space=sflag, size = 0x8, scoped, tag = 'scoped memory for tpu_custom_call.1']
    %22 = vsyncpa [#allocation6], 0
    %s23 = scalar_lea.sflag [#allocation6], 1
    %24 = vsyncpa %s23, 0
    loop: start=0, step=1, limit=4
    $region2: #{tpu_custom_call.1} parent=1 // loop_pre_header
      _
    $region3: #{tpu_custom_call.1} parent=1 // loop_header
      %s26 = sphi 0, %s30
      %p27 = scmp.ge.s32.totalorder %s26, 4
      %s36 = sphi 0, %s38
      %s39 = sphi 0, %s36
      %s40 = sphi 0, %s39
      %s56 = sphi 0, %s40
      %s60 = sphi 0, %s60
      %s62 = sphi 0, %s60
      %s63 = sphi 0, %s62
      %s77 = sphi 0, %s63
      %s81 = sphi 0, %s81
      %s83 = sphi 0, %s81
      %s84 = sphi 0, %s83
      %s98 = sphi 0, %s84
      %s102 = sphi 0, %s102
      %s104 = sphi 0, %s102
      %s105 = sphi 0, %s104
      %s119 = sphi 0, %s105
      %s123 = sphi 0, %s123
      %s125 = sphi 0, %s123
      %s126 = sphi 0, %s125
      %s140 = sphi 0, %s126
      %s144 = sphi 0, %s144
      %s146 = sphi 0, %s144
      %s147 = sphi 0, %s146
      %s161 = sphi 0, %s147
      %s165 = sphi 0, %s165
      %s167 = sphi 0, %s165
      %s168 = sphi 0, %s167
      %s182 = sphi 0, %s168
      %s186 = sphi 0, %s186
      %s188 = sphi 0, %s186
      %s189 = sphi 0, %s188
      %s203 = sphi 0, %s189
      %s207 = sphi 0, %s207
      %s209 = sphi 0, %s207
      %s210 = sphi 0, %s209
      %s224 = sphi 0, %s210
      %s228 = sphi 0, %s228
      %s230 = sphi 0, %s228
      %s231 = sphi 0, %s230
      %s245 = sphi 0, %s231
      %s249 = sphi 0, %s249
      %s251 = sphi 0, %s249
      %s252 = sphi 0, %s251
      %s266 = sphi 0, %s252
      %s270 = sphi 0, %s270
      %s272 = sphi 0, %s270
      %s273 = sphi 0, %s272
      %s287 = sphi 0, %s273
      %s291 = sphi 0, %s291
      %s293 = sphi 0, %s291
      %s294 = sphi 0, %s293
      %s308 = sphi 0, %s294
      %s312 = sphi 0, %s312
      %s314 = sphi 0, %s312
      %s315 = sphi 0, %s314
      %s329 = sphi 0, %s315
      %s333 = sphi 0, %s333
      %s335 = sphi 0, %s333
      %s336 = sphi 0, %s335
      %s350 = sphi 0, %s336
      %s354 = sphi 0, %s354
      %s356 = sphi 0, %s354
      %s357 = sphi 0, %s356
      %s371 = sphi 0, %s357
      %s375 = sphi 0, %s375
      %s377 = sphi 0, %s375
      %s378 = sphi 0, %s377
      %s392 = sphi 0, %s378
      %s398 = sphi 0, %s400
      %s401 = sphi 0, %s398
      %s402 = sphi 0, %s401
      %s418 = sphi 0, %s402
    $region4: #{tpu_custom_call.1} parent=1 // loop_header_branch
      %29 = sbr.rel (%p27) target = $region8
    $region5: #{tpu_custom_call.1} parent=1 // loop_body
      %s31 = ssub.s32 %s26, 1
      %s32 = ssub.s32 %s26, 2
      %s33 = sadd.s32 %s26, 1
      %s34 = ssub.s32 %s26, %s33
      %p35 = scmp.eq.s32.totalorder %s34, 0
      %s37 = sadd.s32 %s36, 1
      %s38 = scalar_select %p35, %s36, %s37
      %p41 = pneg %p35
      %p42 = scmp.eq.s32.totalorder %s26, 1
      %p43 = por %p41, %p42
      %p44 = scmp.ne.s32.totalorder %s36, %s39
      %p45 = scmp.eq.s32.totalorder %s26, 0
      %p46 = por %p44, %p45
      %p47 = scmp.ne.s32.totalorder %s36, %s39
      %p48 = scmp.eq.s32.totalorder %s31, 1
      %p49 = por %p47, %p48
      %p50 = scmp.ne.s32.totalorder %s39, %s40
      %p51 = scmp.eq.s32.totalorder %s31, 0
      %p52 = por %p50, %p51
      %p53 = scmp.ne.s32.totalorder %s39, %s40
      %p54 = scmp.eq.s32.totalorder %s32, 1
      %p55 = por %p53, %p54
      %p57 = scmp.ne.s32.totalorder %s40, %s56
      %p58 = scmp.eq.s32.totalorder %s32, 0
      %p59 = por %p57, %p58
      %s61 = sadd.s32 %s60, 1
      %p64 = scmp.eq.s32.totalorder %s26, 1
      %p65 = scmp.ne.s32.totalorder %s60, %s62
      %p66 = scmp.eq.s32.totalorder %s26, 0
      %p67 = por %p65, %p66
      %p68 = scmp.ne.s32.totalorder %s60, %s62
      %p69 = scmp.eq.s32.totalorder %s31, 1
      %p70 = por %p68, %p69
      %p71 = scmp.ne.s32.totalorder %s62, %s63
      %p72 = scmp.eq.s32.totalorder %s31, 0
      %p73 = por %p71, %p72
      %p74 = scmp.ne.s32.totalorder %s62, %s63
      %p75 = scmp.eq.s32.totalorder %s32, 1
      %p76 = por %p74, %p75
      %p78 = scmp.ne.s32.totalorder %s63, %s77
      %p79 = scmp.eq.s32.totalorder %s32, 0
      %p80 = por %p78, %p79
      %s82 = sadd.s32 %s81, 1
      %p85 = scmp.eq.s32.totalorder %s26, 1
      %p86 = scmp.ne.s32.totalorder %s81, %s83
      %p87 = scmp.eq.s32.totalorder %s26, 0
      %p88 = por %p86, %p87
      %p89 = scmp.ne.s32.totalorder %s81, %s83
      %p90 = scmp.eq.s32.totalorder %s31, 1
      %p91 = por %p89, %p90
      %p92 = scmp.ne.s32.totalorder %s83, %s84
      %p93 = scmp.eq.s32.totalorder %s31, 0
      %p94 = por %p92, %p93
      %p95 = scmp.ne.s32.totalorder %s83, %s84
      %p96 = scmp.eq.s32.totalorder %s32, 1
      %p97 = por %p95, %p96
      %p99 = scmp.ne.s32.totalorder %s84, %s98
      %p100 = scmp.eq.s32.totalorder %s32, 0
      %p101 = por %p99, %p100
      %s103 = sadd.s32 %s102, 1
      %p106 = scmp.eq.s32.totalorder %s26, 1
      %p107 = scmp.ne.s32.totalorder %s102, %s104
      %p108 = scmp.eq.s32.totalorder %s26, 0
      %p109 = por %p107, %p108
      %p110 = scmp.ne.s32.totalorder %s102, %s104
      %p111 = scmp.eq.s32.totalorder %s31, 1
      %p112 = por %p110, %p111
      %p113 = scmp.ne.s32.totalorder %s104, %s105
      %p114 = scmp.eq.s32.totalorder %s31, 0
      %p115 = por %p113, %p114
      %p116 = scmp.ne.s32.totalorder %s104, %s105
      %p117 = scmp.eq.s32.totalorder %s32, 1
      %p118 = por %p116, %p117
      %p120 = scmp.ne.s32.totalorder %s105, %s119
      %p121 = scmp.eq.s32.totalorder %s32, 0
      %p122 = por %p120, %p121
      %s124 = sadd.s32 %s123, 1
      %p127 = scmp.eq.s32.totalorder %s26, 1
      %p128 = scmp.ne.s32.totalorder %s123, %s125
      %p129 = scmp.eq.s32.totalorder %s26, 0
      %p130 = por %p128, %p129
      %p131 = scmp.ne.s32.totalorder %s123, %s125
      %p132 = scmp.eq.s32.totalorder %s31, 1
      %p133 = por %p131, %p132
      %p134 = scmp.ne.s32.totalorder %s125, %s126
      %p135 = scmp.eq.s32.totalorder %s31, 0
      %p136 = por %p134, %p135
      %p137 = scmp.ne.s32.totalorder %s125, %s126
      %p138 = scmp.eq.s32.totalorder %s32, 1
      %p139 = por %p137, %p138
      %p141 = scmp.ne.s32.totalorder %s126, %s140
      %p142 = scmp.eq.s32.totalorder %s32, 0
      %p143 = por %p141, %p142
      %s145 = sadd.s32 %s144, 1
      %p148 = scmp.eq.s32.totalorder %s26, 1
      %p149 = scmp.ne.s32.totalorder %s144, %s146
      %p150 = scmp.eq.s32.totalorder %s26, 0
      %p151 = por %p149, %p150
      %p152 = scmp.ne.s32.totalorder %s144, %s146
      %p153 = scmp.eq.s32.totalorder %s31, 1
      %p154 = por %p152, %p153
      %p155 = scmp.ne.s32.totalorder %s146, %s147
      %p156 = scmp.eq.s32.totalorder %s31, 0
      %p157 = por %p155, %p156
      %p158 = scmp.ne.s32.totalorder %s146, %s147
      %p159 = scmp.eq.s32.totalorder %s32, 1
      %p160 = por %p158, %p159
      %p162 = scmp.ne.s32.totalorder %s147, %s161
      %p163 = scmp.eq.s32.totalorder %s32, 0
      %p164 = por %p162, %p163
      %s166 = sadd.s32 %s165, 1
      %p169 = scmp.eq.s32.totalorder %s26, 1
      %p170 = scmp.ne.s32.totalorder %s165, %s167
      %p171 = scmp.eq.s32.totalorder %s26, 0
      %p172 = por %p170, %p171
      %p173 = scmp.ne.s32.totalorder %s165, %s167
      %p174 = scmp.eq.s32.totalorder %s31, 1
      %p175 = por %p173, %p174
      %p176 = scmp.ne.s32.totalorder %s167, %s168
      %p177 = scmp.eq.s32.totalorder %s31, 0
      %p178 = por %p176, %p177
      %p179 = scmp.ne.s32.totalorder %s167, %s168
      %p180 = scmp.eq.s32.totalorder %s32, 1
      %p181 = por %p179, %p180
      %p183 = scmp.ne.s32.totalorder %s168, %s182
      %p184 = scmp.eq.s32.totalorder %s32, 0
      %p185 = por %p183, %p184
      %s187 = sadd.s32 %s186, 1
      %p190 = scmp.eq.s32.totalorder %s26, 1
      %p191 = scmp.ne.s32.totalorder %s186, %s188
      %p192 = scmp.eq.s32.totalorder %s26, 0
      %p193 = por %p191, %p192
      %p194 = scmp.ne.s32.totalorder %s186, %s188
      %p195 = scmp.eq.s32.totalorder %s31, 1
      %p196 = por %p194, %p195
      %p197 = scmp.ne.s32.totalorder %s188, %s189
      %p198 = scmp.eq.s32.totalorder %s31, 0
      %p199 = por %p197, %p198
      %p200 = scmp.ne.s32.totalorder %s188, %s189
      %p201 = scmp.eq.s32.totalorder %s32, 1
      %p202 = por %p200, %p201
      %p204 = scmp.ne.s32.totalorder %s189, %s203
      %p205 = scmp.eq.s32.totalorder %s32, 0
      %p206 = por %p204, %p205
      %s208 = sadd.s32 %s207, 1
      %p211 = scmp.eq.s32.totalorder %s26, 1
      %p212 = scmp.ne.s32.totalorder %s207, %s209
      %p213 = scmp.eq.s32.totalorder %s26, 0
      %p214 = por %p212, %p213
      %p215 = scmp.ne.s32.totalorder %s207, %s209
      %p216 = scmp.eq.s32.totalorder %s31, 1
      %p217 = por %p215, %p216
      %p218 = scmp.ne.s32.totalorder %s209, %s210
      %p219 = scmp.eq.s32.totalorder %s31, 0
      %p220 = por %p218, %p219
      %p221 = scmp.ne.s32.totalorder %s209, %s210
      %p222 = scmp.eq.s32.totalorder %s32, 1
      %p223 = por %p221, %p222
      %p225 = scmp.ne.s32.totalorder %s210, %s224
      %p226 = scmp.eq.s32.totalorder %s32, 0
      %p227 = por %p225, %p226
      %s229 = sadd.s32 %s228, 1
      %p232 = scmp.eq.s32.totalorder %s26, 1
      %p233 = scmp.ne.s32.totalorder %s228, %s230
      %p234 = scmp.eq.s32.totalorder %s26, 0
      %p235 = por %p233, %p234
      %p236 = scmp.ne.s32.totalorder %s228, %s230
      %p237 = scmp.eq.s32.totalorder %s31, 1
      %p238 = por %p236, %p237
      %p239 = scmp.ne.s32.totalorder %s230, %s231
      %p240 = scmp.eq.s32.totalorder %s31, 0
      %p241 = por %p239, %p240
      %p242 = scmp.ne.s32.totalorder %s230, %s231
      %p243 = scmp.eq.s32.totalorder %s32, 1
      %p244 = por %p242, %p243
      %p246 = scmp.ne.s32.totalorder %s231, %s245
      %p247 = scmp.eq.s32.totalorder %s32, 0
      %p248 = por %p246, %p247
      %s250 = sadd.s32 %s249, 1
      %p253 = scmp.eq.s32.totalorder %s26, 1
      %p254 = scmp.ne.s32.totalorder %s249, %s251
      %p255 = scmp.eq.s32.totalorder %s26, 0
      %p256 = por %p254, %p255
      %p257 = scmp.ne.s32.totalorder %s249, %s251
      %p258 = scmp.eq.s32.totalorder %s31, 1
      %p259 = por %p257, %p258
      %p260 = scmp.ne.s32.totalorder %s251, %s252
      %p261 = scmp.eq.s32.totalorder %s31, 0
      %p262 = por %p260, %p261
      %p263 = scmp.ne.s32.totalorder %s251, %s252
      %p264 = scmp.eq.s32.totalorder %s32, 1
      %p265 = por %p263, %p264
      %p267 = scmp.ne.s32.totalorder %s252, %s266
      %p268 = scmp.eq.s32.totalorder %s32, 0
      %p269 = por %p267, %p268
      %s271 = sadd.s32 %s270, 1
      %p274 = scmp.eq.s32.totalorder %s26, 1
      %p275 = scmp.ne.s32.totalorder %s270, %s272
      %p276 = scmp.eq.s32.totalorder %s26, 0
      %p277 = por %p275, %p276
      %p278 = scmp.ne.s32.totalorder %s270, %s272
      %p279 = scmp.eq.s32.totalorder %s31, 1
      %p280 = por %p278, %p279
      %p281 = scmp.ne.s32.totalorder %s272, %s273
      %p282 = scmp.eq.s32.totalorder %s31, 0
      %p283 = por %p281, %p282
      %p284 = scmp.ne.s32.totalorder %s272, %s273
      %p285 = scmp.eq.s32.totalorder %s32, 1
      %p286 = por %p284, %p285
      %p288 = scmp.ne.s32.totalorder %s273, %s287
      %p289 = scmp.eq.s32.totalorder %s32, 0
      %p290 = por %p288, %p289
      %s292 = sadd.s32 %s291, 1
      %p295 = scmp.eq.s32.totalorder %s26, 1
      %p296 = scmp.ne.s32.totalorder %s291, %s293
      %p297 = scmp.eq.s32.totalorder %s26, 0
      %p298 = por %p296, %p297
      %p299 = scmp.ne.s32.totalorder %s291, %s293
      %p300 = scmp.eq.s32.totalorder %s31, 1
      %p301 = por %p299, %p300
      %p302 = scmp.ne.s32.totalorder %s293, %s294
      %p303 = scmp.eq.s32.totalorder %s31, 0
      %p304 = por %p302, %p303
      %p305 = scmp.ne.s32.totalorder %s293, %s294
      %p306 = scmp.eq.s32.totalorder %s32, 1
      %p307 = por %p305, %p306
      %p309 = scmp.ne.s32.totalorder %s294, %s308
      %p310 = scmp.eq.s32.totalorder %s32, 0
      %p311 = por %p309, %p310
      %s313 = sadd.s32 %s312, 1
      %p316 = scmp.eq.s32.totalorder %s26, 1
      %p317 = scmp.ne.s32.totalorder %s312, %s314
      %p318 = scmp.eq.s32.totalorder %s26, 0
      %p319 = por %p317, %p318
      %p320 = scmp.ne.s32.totalorder %s312, %s314
      %p321 = scmp.eq.s32.totalorder %s31, 1
      %p322 = por %p320, %p321
      %p323 = scmp.ne.s32.totalorder %s314, %s315
      %p324 = scmp.eq.s32.totalorder %s31, 0
      %p325 = por %p323, %p324
      %p326 = scmp.ne.s32.totalorder %s314, %s315
      %p327 = scmp.eq.s32.totalorder %s32, 1
      %p328 = por %p326, %p327
      %p330 = scmp.ne.s32.totalorder %s315, %s329
      %p331 = scmp.eq.s32.totalorder %s32, 0
      %p332 = por %p330, %p331
      %s334 = sadd.s32 %s333, 1
      %p337 = scmp.eq.s32.totalorder %s26, 1
      %p338 = scmp.ne.s32.totalorder %s333, %s335
      %p339 = scmp.eq.s32.totalorder %s26, 0
      %p340 = por %p338, %p339
      %p341 = scmp.ne.s32.totalorder %s333, %s335
      %p342 = scmp.eq.s32.totalorder %s31, 1
      %p343 = por %p341, %p342
      %p344 = scmp.ne.s32.totalorder %s335, %s336
      %p345 = scmp.eq.s32.totalorder %s31, 0
      %p346 = por %p344, %p345
      %p347 = scmp.ne.s32.totalorder %s335, %s336
      %p348 = scmp.eq.s32.totalorder %s32, 1
      %p349 = por %p347, %p348
      %p351 = scmp.ne.s32.totalorder %s336, %s350
      %p352 = scmp.eq.s32.totalorder %s32, 0
      %p353 = por %p351, %p352
      %s355 = sadd.s32 %s354, 1
      %p358 = scmp.eq.s32.totalorder %s26, 1
      %p359 = scmp.ne.s32.totalorder %s354, %s356
      %p360 = scmp.eq.s32.totalorder %s26, 0
      %p361 = por %p359, %p360
      %p362 = scmp.ne.s32.totalorder %s354, %s356
      %p363 = scmp.eq.s32.totalorder %s31, 1
      %p364 = por %p362, %p363
      %p365 = scmp.ne.s32.totalorder %s356, %s357
      %p366 = scmp.eq.s32.totalorder %s31, 0
      %p367 = por %p365, %p366
      %p368 = scmp.ne.s32.totalorder %s356, %s357
      %p369 = scmp.eq.s32.totalorder %s32, 1
      %p370 = por %p368, %p369
      %p372 = scmp.ne.s32.totalorder %s357, %s371
      %p373 = scmp.eq.s32.totalorder %s32, 0
      %p374 = por %p372, %p373
      %s376 = sadd.s32 %s375, 1
      %p379 = scmp.eq.s32.totalorder %s26, 1
      %p380 = scmp.ne.s32.totalorder %s375, %s377
      %p381 = scmp.eq.s32.totalorder %s26, 0
      %p382 = por %p380, %p381
      %p383 = scmp.ne.s32.totalorder %s375, %s377
      %p384 = scmp.eq.s32.totalorder %s31, 1
      %p385 = por %p383, %p384
      %p386 = scmp.ne.s32.totalorder %s377, %s378
      %p387 = scmp.eq.s32.totalorder %s31, 0
      %p388 = por %p386, %p387
      %p389 = scmp.ne.s32.totalorder %s377, %s378
      %p390 = scmp.eq.s32.totalorder %s32, 1
      %p391 = por %p389, %p390
      %p393 = scmp.ne.s32.totalorder %s378, %s392
      %p394 = scmp.eq.s32.totalorder %s32, 0
      %p395 = por %p393, %p394
      %s396 = ssub.s32 %s26, %s33
      %p397 = scmp.eq.s32.totalorder %s396, 0
      %s399 = sadd.s32 %s398, 1
      %s400 = scalar_select %p397, %s398, %s399
      %p403 = pneg %p397
      %p404 = scmp.eq.s32.totalorder %s26, 1
      %p405 = por %p403, %p404
      %p406 = scmp.ne.s32.totalorder %s398, %s401
      %p407 = scmp.eq.s32.totalorder %s26, 0
      %p408 = por %p406, %p407
      %p409 = scmp.ne.s32.totalorder %s398, %s401
      %p410 = scmp.eq.s32.totalorder %s31, 1
      %p411 = por %p409, %p410
      %p412 = scmp.ne.s32.totalorder %s401, %s402
      %p413 = scmp.eq.s32.totalorder %s31, 0
      %p414 = por %p412, %p413
      %p415 = scmp.ne.s32.totalorder %s401, %s402
      %p416 = scmp.eq.s32.totalorder %s32, 1
      %p417 = por %p415, %p416
      %p419 = scmp.ne.s32.totalorder %s402, %s418
      %p420 = scmp.eq.s32.totalorder %s32, 0
      %p421 = por %p419, %p420
      %p422 = scmp.le.s32.totalorder 1, %s26
      %p423 = scmp.lt.s32.totalorder %s26, 3
      %p424 = pnand %p422, %p423
      %p425 = pneg %p424
      // Predicated region
      $region9: #{tpu_custom_call.1} parent=5 // pred_check
        _
      $region10: #{tpu_custom_call.1} parent=5 // pred_check_branch
        %427 = sbr.rel (%p424) target = $region12
      $region11: #{tpu_custom_call.1} parent=5 // pred_region
        %s428 = ssub.s32 %s26, 1
        // Predicated region
        $region13: #{tpu_custom_call.1} parent=11 // pred_check
          %p429 = pneg %p73
        $region14: #{tpu_custom_call.1} parent=11 // pred_check_branch
          %431 = sbr.rel (%p429) target = $region16
        $region15: #{tpu_custom_call.1} parent=11 // pred_region
          _
        $region16: #{tpu_custom_call.1} parent=11 // pred_fallthru
          _
        // Predicated region
        $region17: #{tpu_custom_call.1} parent=11 // pred_check
          %p432 = pneg %p94
        $region18: #{tpu_custom_call.1} parent=11 // pred_check_branch
          %434 = sbr.rel (%p432) target = $region20
        $region19: #{tpu_custom_call.1} parent=11 // pred_region
          _
        $region20: #{tpu_custom_call.1} parent=11 // pred_fallthru
          _
        // Predicated region
        $region21: #{tpu_custom_call.1} parent=11 // pred_check
          %p435 = pneg %p115
        $region22: #{tpu_custom_call.1} parent=11 // pred_check_branch
          %437 = sbr.rel (%p435) target = $region24
        $region23: #{tpu_custom_call.1} parent=11 // pred_region
          _
        $region24: #{tpu_custom_call.1} parent=11 // pred_fallthru
          _
        // Predicated region
        $region25: #{tpu_custom_call.1} parent=11 // pred_check
          %p438 = pneg %p136
        $region26: #{tpu_custom_call.1} parent=11 // pred_check_branch
          %440 = sbr.rel (%p438) target = $region28
        $region27: #{tpu_custom_call.1} parent=11 // pred_region
          _
        $region28: #{tpu_custom_call.1} parent=11 // pred_fallthru
          _
        // Predicated region
        $region29: #{tpu_custom_call.1} parent=11 // pred_check
          %p441 = pneg %p157
        $region30: #{tpu_custom_call.1} parent=11 // pred_check_branch
          %443 = sbr.rel (%p441) target = $region32
        $region31: #{tpu_custom_call.1} parent=11 // pred_region
          _
        $region32: #{tpu_custom_call.1} parent=11 // pred_fallthru
          _
        // Predicated region
        $region33: #{tpu_custom_call.1} parent=11 // pred_check
          %p444 = pneg %p178
        $region34: #{tpu_custom_call.1} parent=11 // pred_check_branch
          %446 = sbr.rel (%p444) target = $region36
        $region35: #{tpu_custom_call.1} parent=11 // pred_region
          _
        $region36: #{tpu_custom_call.1} parent=11 // pred_fallthru
          _
        // Predicated region
        $region37: #{tpu_custom_call.1} parent=11 // pred_check
          %p447 = pneg %p199
        $region38: #{tpu_custom_call.1} parent=11 // pred_check_branch
          %449 = sbr.rel (%p447) target = $region40
        $region39: #{tpu_custom_call.1} parent=11 // pred_region
          _
        $region40: #{tpu_custom_call.1} parent=11 // pred_fallthru
          _
        // Predicated region
        $region41: #{tpu_custom_call.1} parent=11 // pred_check
          %p450 = pneg %p220
        $region42: #{tpu_custom_call.1} parent=11 // pred_check_branch
          %452 = sbr.rel (%p450) target = $region44
        $region43: #{tpu_custom_call.1} parent=11 // pred_region
          _
        $region44: #{tpu_custom_call.1} parent=11 // pred_fallthru
          _
        // Predicated region
        $region45: #{tpu_custom_call.1} parent=11 // pred_check
          %p453 = pneg %p241
        $region46: #{tpu_custom_call.1} parent=11 // pred_check_branch
          %455 = sbr.rel (%p453) target = $region48
        $region47: #{tpu_custom_call.1} parent=11 // pred_region
          _
        $region48: #{tpu_custom_call.1} parent=11 // pred_fallthru
          _
        // Predicated region
        $region49: #{tpu_custom_call.1} parent=11 // pred_check
          %p456 = pneg %p262
        $region50: #{tpu_custom_call.1} parent=11 // pred_check_branch
          %458 = sbr.rel (%p456) target = $region52
        $region51: #{tpu_custom_call.1} parent=11 // pred_region
          _
        $region52: #{tpu_custom_call.1} parent=11 // pred_fallthru
          _
        // Predicated region
        $region53: #{tpu_custom_call.1} parent=11 // pred_check
          %p459 = pneg %p283
        $region54: #{tpu_custom_call.1} parent=11 // pred_check_branch
          %461 = sbr.rel (%p459) target = $region56
        $region55: #{tpu_custom_call.1} parent=11 // pred_region
          _
        $region56: #{tpu_custom_call.1} parent=11 // pred_fallthru
          _
        // Predicated region
        $region57: #{tpu_custom_call.1} parent=11 // pred_check
          %p462 = pneg %p304
        $region58: #{tpu_custom_call.1} parent=11 // pred_check_branch
          %464 = sbr.rel (%p462) target = $region60
        $region59: #{tpu_custom_call.1} parent=11 // pred_region
          _
        $region60: #{tpu_custom_call.1} parent=11 // pred_fallthru
          _
        // Predicated region
        $region61: #{tpu_custom_call.1} parent=11 // pred_check
          %p465 = pneg %p325
        $region62: #{tpu_custom_call.1} parent=11 // pred_check_branch
          %467 = sbr.rel (%p465) target = $region64
        $region63: #{tpu_custom_call.1} parent=11 // pred_region
          _
        $region64: #{tpu_custom_call.1} parent=11 // pred_fallthru
          _
        // Predicated region
        $region65: #{tpu_custom_call.1} parent=11 // pred_check
          %p468 = pneg %p346
        $region66: #{tpu_custom_call.1} parent=11 // pred_check_branch
          %470 = sbr.rel (%p468) target = $region68
        $region67: #{tpu_custom_call.1} parent=11 // pred_region
          _
        $region68: #{tpu_custom_call.1} parent=11 // pred_fallthru
          _
        // Predicated region
        $region69: #{tpu_custom_call.1} parent=11 // pred_check
          %p471 = pneg %p367
        $region70: #{tpu_custom_call.1} parent=11 // pred_check_branch
          %473 = sbr.rel (%p471) target = $region72
        $region71: #{tpu_custom_call.1} parent=11 // pred_region
          _
        $region72: #{tpu_custom_call.1} parent=11 // pred_fallthru
          _
        // Predicated region
        $region73: #{tpu_custom_call.1} parent=11 // pred_check
          %p474 = pneg %p388
        $region74: #{tpu_custom_call.1} parent=11 // pred_check_branch
          %476 = sbr.rel (%p474) target = $region76
        $region75: #{tpu_custom_call.1} parent=11 // pred_region
          _
        $region76: #{tpu_custom_call.1} parent=11 // pred_fallthru
          _
      $region12: #{tpu_custom_call.1} parent=5 // pred_fallthru
        _
      %p477 = scmp.lt.s32.totalorder %s26, 2
      // Predicated region
      $region77: #{tpu_custom_call.1} parent=5 // pred_check
        %p478 = pneg %p477
      $region78: #{tpu_custom_call.1} parent=5 // pred_check_branch
        %480 = sbr.rel (%p478) target = $region80
      $region79: #{tpu_custom_call.1} parent=5 // pred_region
        // Predicated region
        $region81: #{tpu_custom_call.1} parent=79 // pred_check
          %p481 = pneg %p46
        $region82: #{tpu_custom_call.1} parent=79 // pred_check_branch
          %483 = sbr.rel (%p481) target = $region84
        $region83: #{tpu_custom_call.1} parent=79 // pred_region
          %p484 = scmp.lt.s32.totalorder %s26, 1
          %s485 = scalar_select %p484, %s26, 1
          %s486 = smul.addr %s485, 8
          %s487 = smul.addr %s486, 8
          %s488 = scalar_lea.vmem %s0, %s487
        $region84: #{tpu_custom_call.1} parent=79 // pred_fallthru
          _
      $region80: #{tpu_custom_call.1} parent=5 // pred_fallthru
        _
      %p489 = scmp.le.s32.totalorder 1, %s26
      %p490 = scmp.lt.s32.totalorder %s26, 3
      %p491 = pnand %p489, %p490
      %p492 = pneg %p491
      // Predicated region
      $region85: #{tpu_custom_call.1} parent=5 // pred_check
        _
      $region86: #{tpu_custom_call.1} parent=5 // pred_check_branch
        %494 = sbr.rel (%p491) target = $region88
      $region87: #{tpu_custom_call.1} parent=5 // pred_region
        %s495 = ssub.s32 %s26, 1
        %p496 = scmp.lt.s32.totalorder %s31, 1
        %s497 = scalar_select %p496, %s31, 1
        %s498 = smul.addr %s497, 8
        %s499 = smul.addr %s498, 8
        %s500 = scalar_lea.vmem %s0, %s499
        %p501 = pneg %p52
        %p502 = pneg %p49
        %p503 = pneg %p73
        %p504 = pneg %p70
        %p505 = pneg %p94
        %p506 = pneg %p91
        %p507 = pneg %p115
        %p508 = pneg %p112
        %p509 = pneg %p136
        %p510 = pneg %p133
        %p511 = pneg %p157
        %p512 = pneg %p154
        %p513 = pneg %p178
        %p514 = pneg %p175
        %p515 = pneg %p199
        %p516 = pneg %p196
        %p517 = pneg %p220
        %p518 = pneg %p217
        %p519 = pneg %p241
        %p520 = pneg %p238
        %p521 = pneg %p262
        %p522 = pneg %p259
        %p523 = pneg %p283
        %p524 = pneg %p280
        %p525 = pneg %p304
        %p526 = pneg %p301
        %p527 = pneg %p325
        %p528 = pneg %p322
        %p529 = pneg %p346
        %p530 = pneg %p343
        %p531 = pneg %p367
        %p532 = pneg %p364
        %p533 = pneg %p388
        %p534 = pneg %p385
        %p535 = pneg %p414
        %p536 = pneg %p411
        %s537 = sand.u32 %s401, 1
        %s538 = scalar_lea.sflag [#allocation6], %s537
        %s539 = sand.u32 %s401, 1
        %s540 = smul.addr %s539, 64
        %s541 = scalar_lea.vmem [#allocation5], %s540
        %p542 = scmp.lt.s32.totalorder %s31, 1
        %s543 = scalar_select %p542, %s31, 1
        %s544 = smul.addr %s543, 8
        %s545 = smul.addr %s544, 8
        %s546 = scalar_lea.vmem %s0, %s545
        %vm548 = vcmask 261120
        %549 = vst.msk [vmem:[#allocation2] sm:$0xff] %vm548, 0.0
        %vm550 = vcmask 254976
        %551 = vst.msk [vmem:[#allocation2 + $0x8] sm:$0x3] %vm550, 0.0
        %s552 = scalar_lea.vmem [#allocation2], 144
        %553 = vst.msk [vmem:[%s552] sm:$0xff] %vm548, 0.0
        %554 = vst.msk [vmem:[%s552 + $0x8] sm:$0x3] %vm550, 0.0
        %vm555 = vcmask 253952
        %556 = vst.msk [vmem:[#allocation2] sm:$0x1] %vm555, 0.0
        %557 = vst.msk [vmem:[#allocation2 + $0x10] sm:$0x1] %vm555, 0.0
        %558 = vst.msk [vmem:[#allocation2 + $0x20] sm:$0x1] %vm555, 0.0
        %559 = vst.msk [vmem:[#allocation2 + $0x30] sm:$0x1] %vm555, 0.0
        %560 = vst.msk [vmem:[#allocation2 + $0x40] sm:$0x1] %vm555, 0.0
        %561 = vst.msk [vmem:[#allocation2 + $0x50] sm:$0x1] %vm555, 0.0
        %562 = vst.msk [vmem:[#allocation2 + $0x60] sm:$0x1] %vm555, 0.0
        %563 = vst.msk [vmem:[#allocation2 + $0x70] sm:$0x1] %vm555, 0.0
        %564 = vst.msk [vmem:[#allocation2 + $0x80] sm:$0x1] %vm555, 0.0
        %565 = vst.msk [vmem:[#allocation2 + $0x90] sm:$0x1] %vm555, 0.0
        %566 = vst.msk [vmem:[#allocation2 + $0x9] sm:$0x1] %vm555, 0.0
        %567 = vst.msk [vmem:[#allocation2 + $0x19] sm:$0x1] %vm555, 0.0
        %568 = vst.msk [vmem:[#allocation2 + $0x29] sm:$0x1] %vm555, 0.0
        %569 = vst.msk [vmem:[#allocation2 + $0x39] sm:$0x1] %vm555, 0.0
        %570 = vst.msk [vmem:[#allocation2 + $0x49] sm:$0x1] %vm555, 0.0
        %571 = vst.msk [vmem:[#allocation2 + $0x59] sm:$0x1] %vm555, 0.0
        %572 = vst.msk [vmem:[#allocation2 + $0x69] sm:$0x1] %vm555, 0.0
        %573 = vst.msk [vmem:[#allocation2 + $0x79] sm:$0x1] %vm555, 0.0
        %574 = vst.msk [vmem:[#allocation2 + $0x89] sm:$0x1] %vm555, 0.0
        %575 = vst.msk [vmem:[#allocation2 + $0x99] sm:$0x1] %vm555, 0.0
        %vm576 = vcmask 523264
        %577 = vst.msk [vmem:[#allocation3] sm:$0xff] %vm576, 0.0
        %vm578 = vcmask 517120
        %579 = vst.msk [vmem:[#allocation3 + $0x8] sm:$0x3] %vm578, 0.0
        %s580 = scalar_lea.vmem [#allocation3], 144
        %581 = vst.msk [vmem:[%s580] sm:$0xff] %vm576, 0.0
        %582 = vst.msk [vmem:[%s580 + $0x8] sm:$0x3] %vm578, 0.0
        %vm583 = vcmask 516096
        %584 = vst.msk [vmem:[#allocation3] sm:$0x1] %vm583, 0.0
        %585 = vst.msk [vmem:[#allocation3 + $0x10] sm:$0x1] %vm583, 0.0
        %586 = vst.msk [vmem:[#allocation3 + $0x20] sm:$0x1] %vm583, 0.0
        %587 = vst.msk [vmem:[#allocation3 + $0x30] sm:$0x1] %vm583, 0.0
        %588 = vst.msk [vmem:[#allocation3 + $0x40] sm:$0x1] %vm583, 0.0
        %589 = vst.msk [vmem:[#allocation3 + $0x50] sm:$0x1] %vm583, 0.0
        %590 = vst.msk [vmem:[#allocation3 + $0x60] sm:$0x1] %vm583, 0.0
        %591 = vst.msk [vmem:[#allocation3 + $0x70] sm:$0x1] %vm583, 0.0
        %592 = vst.msk [vmem:[#allocation3 + $0x80] sm:$0x1] %vm583, 0.0
        %593 = vst.msk [vmem:[#allocation3 + $0x90] sm:$0x1] %vm583, 0.0
        %594 = vst.msk [vmem:[#allocation3 + $0x9] sm:$0x1] %vm583, 0.0
        %595 = vst.msk [vmem:[#allocation3 + $0x19] sm:$0x1] %vm583, 0.0
        %596 = vst.msk [vmem:[#allocation3 + $0x29] sm:$0x1] %vm583, 0.0
        %597 = vst.msk [vmem:[#allocation3 + $0x39] sm:$0x1] %vm583, 0.0
        %598 = vst.msk [vmem:[#allocation3 + $0x49] sm:$0x1] %vm583, 0.0
        %599 = vst.msk [vmem:[#allocation3 + $0x59] sm:$0x1] %vm583, 0.0
        %600 = vst.msk [vmem:[#allocation3 + $0x69] sm:$0x1] %vm583, 0.0
        %601 = vst.msk [vmem:[#allocation3 + $0x79] sm:$0x1] %vm583, 0.0
        %602 = vst.msk [vmem:[#allocation3 + $0x89] sm:$0x1] %vm583, 0.0
        %603 = vst.msk [vmem:[#allocation3 + $0x99] sm:$0x1] %vm583, 0.0
        %604 = vst.msk [vmem:[#allocation4] sm:$0xff] %vm548, 0.0
        %605 = vst.msk [vmem:[#allocation4 + $0x8] sm:$0x3] %vm550, 0.0
        %s606 = scalar_lea.vmem [#allocation4], 144
        %607 = vst.msk [vmem:[%s606] sm:$0xff] %vm548, 0.0
        %608 = vst.msk [vmem:[%s606 + $0x8] sm:$0x3] %vm550, 0.0
        %609 = vst.msk [vmem:[#allocation4] sm:$0x1] %vm555, 0.0
        %610 = vst.msk [vmem:[#allocation4 + $0x10] sm:$0x1] %vm555, 0.0
        %611 = vst.msk [vmem:[#allocation4 + $0x20] sm:$0x1] %vm555, 0.0
        %612 = vst.msk [vmem:[#allocation4 + $0x30] sm:$0x1] %vm555, 0.0
        %613 = vst.msk [vmem:[#allocation4 + $0x40] sm:$0x1] %vm555, 0.0
        %614 = vst.msk [vmem:[#allocation4 + $0x50] sm:$0x1] %vm555, 0.0
        %615 = vst.msk [vmem:[#allocation4 + $0x60] sm:$0x1] %vm555, 0.0
        %616 = vst.msk [vmem:[#allocation4 + $0x70] sm:$0x1] %vm555, 0.0
        %617 = vst.msk [vmem:[#allocation4 + $0x80] sm:$0x1] %vm555, 0.0
        %618 = vst.msk [vmem:[#allocation4 + $0x90] sm:$0x1] %vm555, 0.0
        %619 = vst.msk [vmem:[#allocation4 + $0x9] sm:$0x1] %vm555, 0.0
        %620 = vst.msk [vmem:[#allocation4 + $0x19] sm:$0x1] %vm555, 0.0
        %621 = vst.msk [vmem:[#allocation4 + $0x29] sm:$0x1] %vm555, 0.0
        %622 = vst.msk [vmem:[#allocation4 + $0x39] sm:$0x1] %vm555, 0.0
        %623 = vst.msk [vmem:[#allocation4 + $0x49] sm:$0x1] %vm555, 0.0
        %624 = vst.msk [vmem:[#allocation4 + $0x59] sm:$0x1] %vm555, 0.0
        %625 = vst.msk [vmem:[#allocation4 + $0x69] sm:$0x1] %vm555, 0.0
        %626 = vst.msk [vmem:[#allocation4 + $0x79] sm:$0x1] %vm555, 0.0
        %627 = vst.msk [vmem:[#allocation4 + $0x89] sm:$0x1] %vm555, 0.0
        %628 = vst.msk [vmem:[#allocation4 + $0x99] sm:$0x1] %vm555, 0.0
        %v629 = vld [vmem:[%s546] sm:$0xff]
        %v630 = vld [vmem:[%s546 + $0x8] sm:$0xff]
        %v631 = vld [vmem:[%s546 + $0x10] sm:$0xff]
        %v632 = vld [vmem:[%s546 + $0x18] sm:$0xff]
        %v633 = vld [vmem:[%s546 + $0x20] sm:$0xff]
        %v634 = vld [vmem:[%s546 + $0x28] sm:$0xff]
        %v635 = vld [vmem:[%s546 + $0x30] sm:$0xff]
        %v636 = vld [vmem:[%s546 + $0x38] sm:$0xff]
        %s637 = scalar_lea.vmem [#allocation2], 16
        %638 = vst.msk [vmem:[%s637 + $0x1] sm:$0xff] %vm548, %v629
        %639 = vst.msk [vmem:[%s637 + $0x11] sm:$0xff] %vm548, %v630
        %640 = vst.msk [vmem:[%s637 + $0x21] sm:$0xff] %vm548, %v631
        %641 = vst.msk [vmem:[%s637 + $0x31] sm:$0xff] %vm548, %v632
        %642 = vst.msk [vmem:[%s637 + $0x41] sm:$0xff] %vm548, %v633
        %643 = vst.msk [vmem:[%s637 + $0x51] sm:$0xff] %vm548, %v634
        %644 = vst.msk [vmem:[%s637 + $0x61] sm:$0xff] %vm548, %v635
        %645 = vst.msk [vmem:[%s637 + $0x71] sm:$0xff] %vm548, %v636
        %v646 = vld [vmem:[#allocation2] sm:$0xff]
        %v647 = vld [vmem:[#allocation2 + $0x10] sm:$0xff]
        %v648 = vld [vmem:[#allocation2 + $0x20] sm:$0xff]
        %v649 = vld [vmem:[#allocation2 + $0x30] sm:$0xff]
        %v650 = vld [vmem:[#allocation2 + $0x40] sm:$0xff]
        %v651 = vld [vmem:[#allocation2 + $0x50] sm:$0xff]
        %v652 = vld [vmem:[#allocation2 + $0x60] sm:$0xff]
        %v653 = vld [vmem:[#allocation2 + $0x70] sm:$0xff]
        %v654 = vld [vmem:[#allocation2 + $0x1] sm:$0xff]
        %v655 = vld [vmem:[#allocation2 + $0x11] sm:$0xff]
        %v656 = vld [vmem:[#allocation2 + $0x21] sm:$0xff]
        %v657 = vld [vmem:[#allocation2 + $0x31] sm:$0xff]
        %v658 = vld [vmem:[#allocation2 + $0x41] sm:$0xff]
        %v659 = vld [vmem:[#allocation2 + $0x51] sm:$0xff]
        %v660 = vld [vmem:[#allocation2 + $0x61] sm:$0xff]
        %v661 = vld [vmem:[#allocation2 + $0x71] sm:$0xff]
        %v662 = vld [vmem:[#allocation2 + $0x2] sm:$0xff]
        %v663 = vld [vmem:[#allocation2 + $0x12] sm:$0xff]
        %v664 = vld [vmem:[#allocation2 + $0x22] sm:$0xff]
        %v665 = vld [vmem:[#allocation2 + $0x32] sm:$0xff]
        %v666 = vld [vmem:[#allocation2 + $0x42] sm:$0xff]
        %v667 = vld [vmem:[#allocation2 + $0x52] sm:$0xff]
        %v668 = vld [vmem:[#allocation2 + $0x62] sm:$0xff]
        %v669 = vld [vmem:[#allocation2 + $0x72] sm:$0xff]
        %v670 = vld [vmem:[%s637] sm:$0xff]
        %v671 = vld [vmem:[%s637 + $0x10] sm:$0xff]
        %v672 = vld [vmem:[%s637 + $0x20] sm:$0xff]
        %v673 = vld [vmem:[%s637 + $0x30] sm:$0xff]
        %v674 = vld [vmem:[%s637 + $0x40] sm:$0xff]
        %v675 = vld [vmem:[%s637 + $0x50] sm:$0xff]
        %v676 = vld [vmem:[%s637 + $0x60] sm:$0xff]
        %v677 = vld [vmem:[%s637 + $0x70] sm:$0xff]
        %v678 = vld [vmem:[%s637 + $0x1] sm:$0xff]
        %v679 = vld [vmem:[%s637 + $0x11] sm:$0xff]
        %v680 = vld [vmem:[%s637 + $0x21] sm:$0xff]
        %v681 = vld [vmem:[%s637 + $0x31] sm:$0xff]
        %v682 = vld [vmem:[%s637 + $0x41] sm:$0xff]
        %v683 = vld [vmem:[%s637 + $0x51] sm:$0xff]
        %v684 = vld [vmem:[%s637 + $0x61] sm:$0xff]
        %v685 = vld [vmem:[%s637 + $0x71] sm:$0xff]
        %v686 = vld [vmem:[%s637 + $0x2] sm:$0xff]
        %v687 = vld [vmem:[%s637 + $0x12] sm:$0xff]
        %v688 = vld [vmem:[%s637 + $0x22] sm:$0xff]
        %v689 = vld [vmem:[%s637 + $0x32] sm:$0xff]
        %v690 = vld [vmem:[%s637 + $0x42] sm:$0xff]
        %v691 = vld [vmem:[%s637 + $0x52] sm:$0xff]
        %v692 = vld [vmem:[%s637 + $0x62] sm:$0xff]
        %v693 = vld [vmem:[%s637 + $0x72] sm:$0xff]
        %s694 = scalar_lea.vmem [#allocation2], 32
        %v695 = vld [vmem:[%s694] sm:$0xff]
        %v696 = vld [vmem:[%s694 + $0x10] sm:$0xff]
        %v697 = vld [vmem:[%s694 + $0x20] sm:$0xff]
        %v698 = vld [vmem:[%s694 + $0x30] sm:$0xff]
        %v699 = vld [vmem:[%s694 + $0x40] sm:$0xff]
        %v700 = vld [vmem:[%s694 + $0x50] sm:$0xff]
        %v701 = vld [vmem:[%s694 + $0x60] sm:$0xff]
        %v702 = vld [vmem:[%s694 + $0x70] sm:$0xff]
        %v703 = vld [vmem:[%s694 + $0x1] sm:$0xff]
        %v704 = vld [vmem:[%s694 + $0x11] sm:$0xff]
        %v705 = vld [vmem:[%s694 + $0x21] sm:$0xff]
        %v706 = vld [vmem:[%s694 + $0x31] sm:$0xff]
        %v707 = vld [vmem:[%s694 + $0x41] sm:$0xff]
        %v708 = vld [vmem:[%s694 + $0x51] sm:$0xff]
        %v709 = vld [vmem:[%s694 + $0x61] sm:$0xff]
        %v710 = vld [vmem:[%s694 + $0x71] sm:$0xff]
        %v711 = vld [vmem:[%s694 + $0x2] sm:$0xff]
        %v712 = vld [vmem:[%s694 + $0x12] sm:$0xff]
        %v713 = vld [vmem:[%s694 + $0x22] sm:$0xff]
        %v714 = vld [vmem:[%s694 + $0x32] sm:$0xff]
        %v715 = vld [vmem:[%s694 + $0x42] sm:$0xff]
        %v716 = vld [vmem:[%s694 + $0x52] sm:$0xff]
        %v717 = vld [vmem:[%s694 + $0x62] sm:$0xff]
        %v718 = vld [vmem:[%s694 + $0x72] sm:$0xff]
        %727 = vrot.lane.b32.xlu0 %v654, 32
        %v728 = vpop.permute.xlu0 %727
        %729 = vrot.lane.b32.xlu0 %v655, 32
        %v730 = vpop.permute.xlu0 %729
        %731 = vrot.lane.b32.xlu0 %v656, 32
        %v732 = vpop.permute.xlu0 %731
        %733 = vrot.lane.b32.xlu0 %v657, 32
        %v734 = vpop.permute.xlu0 %733
        %735 = vrot.lane.b32.xlu0 %v658, 32
        %v736 = vpop.permute.xlu0 %735
        %737 = vrot.lane.b32.xlu0 %v659, 32
        %v738 = vpop.permute.xlu0 %737
        %739 = vrot.lane.b32.xlu0 %v660, 32
        %v740 = vpop.permute.xlu0 %739
        %741 = vrot.lane.b32.xlu0 %v661, 32
        %v742 = vpop.permute.xlu0 %741
        %759 = vrot.lane.b32.xlu0 %v662, 64
        %v760 = vpop.permute.xlu0 %759
        %761 = vrot.lane.b32.xlu0 %v663, 64
        %v762 = vpop.permute.xlu0 %761
        %763 = vrot.lane.b32.xlu0 %v664, 64
        %v764 = vpop.permute.xlu0 %763
        %765 = vrot.lane.b32.xlu0 %v665, 64
        %v766 = vpop.permute.xlu0 %765
        %767 = vrot.lane.b32.xlu0 %v666, 64
        %v768 = vpop.permute.xlu0 %767
        %769 = vrot.lane.b32.xlu0 %v667, 64
        %v770 = vpop.permute.xlu0 %769
        %771 = vrot.lane.b32.xlu0 %v668, 64
        %v772 = vpop.permute.xlu0 %771
        %773 = vrot.lane.b32.xlu0 %v669, 64
        %v774 = vpop.permute.xlu0 %773
        %791 = vrot.lane.b32.xlu0 %v670, 96
        %v792 = vpop.permute.xlu0 %791
        %793 = vrot.lane.b32.xlu0 %v671, 96
        %v794 = vpop.permute.xlu0 %793
        %795 = vrot.lane.b32.xlu0 %v672, 96
        %v796 = vpop.permute.xlu0 %795
        %797 = vrot.lane.b32.xlu0 %v673, 96
        %v798 = vpop.permute.xlu0 %797
        %799 = vrot.lane.b32.xlu0 %v674, 96
        %v800 = vpop.permute.xlu0 %799
        %801 = vrot.lane.b32.xlu0 %v675, 96
        %v802 = vpop.permute.xlu0 %801
        %803 = vrot.lane.b32.xlu0 %v676, 96
        %v804 = vpop.permute.xlu0 %803
        %805 = vrot.lane.b32.xlu0 %v677, 96
        %v806 = vpop.permute.xlu0 %805
        %823 = vrot.lane.b32.xlu0 %v686, 32
        %v824 = vpop.permute.xlu0 %823
        %825 = vrot.lane.b32.xlu0 %v687, 32
        %v826 = vpop.permute.xlu0 %825
        %827 = vrot.lane.b32.xlu0 %v688, 32
        %v828 = vpop.permute.xlu0 %827
        %829 = vrot.lane.b32.xlu0 %v689, 32
        %v830 = vpop.permute.xlu0 %829
        %831 = vrot.lane.b32.xlu0 %v690, 32
        %v832 = vpop.permute.xlu0 %831
        %833 = vrot.lane.b32.xlu0 %v691, 32
        %v834 = vpop.permute.xlu0 %833
        %835 = vrot.lane.b32.xlu0 %v692, 32
        %v836 = vpop.permute.xlu0 %835
        %837 = vrot.lane.b32.xlu0 %v693, 32
        %v838 = vpop.permute.xlu0 %837
        %855 = vrot.lane.b32.xlu0 %v695, 64
        %v856 = vpop.permute.xlu0 %855
        %857 = vrot.lane.b32.xlu0 %v696, 64
        %v858 = vpop.permute.xlu0 %857
        %859 = vrot.lane.b32.xlu0 %v697, 64
        %v860 = vpop.permute.xlu0 %859
        %861 = vrot.lane.b32.xlu0 %v698, 64
        %v862 = vpop.permute.xlu0 %861
        %863 = vrot.lane.b32.xlu0 %v699, 64
        %v864 = vpop.permute.xlu0 %863
        %865 = vrot.lane.b32.xlu0 %v700, 64
        %v866 = vpop.permute.xlu0 %865
        %867 = vrot.lane.b32.xlu0 %v701, 64
        %v868 = vpop.permute.xlu0 %867
        %869 = vrot.lane.b32.xlu0 %v702, 64
        %v870 = vpop.permute.xlu0 %869
        %887 = vrot.lane.b32.xlu0 %v703, 96
        %v888 = vpop.permute.xlu0 %887
        %889 = vrot.lane.b32.xlu0 %v704, 96
        %v890 = vpop.permute.xlu0 %889
        %891 = vrot.lane.b32.xlu0 %v705, 96
        %v892 = vpop.permute.xlu0 %891
        %893 = vrot.lane.b32.xlu0 %v706, 96
        %v894 = vpop.permute.xlu0 %893
        %895 = vrot.lane.b32.xlu0 %v707, 96
        %v896 = vpop.permute.xlu0 %895
        %897 = vrot.lane.b32.xlu0 %v708, 96
        %v898 = vpop.permute.xlu0 %897
        %899 = vrot.lane.b32.xlu0 %v709, 96
        %v900 = vpop.permute.xlu0 %899
        %901 = vrot.lane.b32.xlu0 %v710, 96
        %v902 = vpop.permute.xlu0 %901
        %v911 = vsel %vm548, %v646, %v728
        %v912 = vsel %vm548, %v647, %v730
        %v913 = vsel %vm548, %v648, %v732
        %v914 = vsel %vm548, %v649, %v734
        %v915 = vsel %vm548, %v650, %v736
        %v916 = vsel %vm548, %v651, %v738
        %v917 = vsel %vm548, %v652, %v740
        %v918 = vsel %vm548, %v653, %v742
        %v919 = vsel %vm576, %v911, %v760
        %v920 = vsel %vm576, %v912, %v762
        %v921 = vsel %vm576, %v913, %v764
        %v922 = vsel %vm576, %v914, %v766
        %v923 = vsel %vm576, %v915, %v768
        %v924 = vsel %vm576, %v916, %v770
        %v925 = vsel %vm576, %v917, %v772
        %v926 = vsel %vm576, %v918, %v774
        %vm927 = vcmask 785408
        %v928 = vsel %vm927, %v919, %v792
        %v929 = vsel %vm927, %v920, %v794
        %v930 = vsel %vm927, %v921, %v796
        %v931 = vsel %vm927, %v922, %v798
        %v932 = vsel %vm927, %v923, %v800
        %v933 = vsel %vm927, %v924, %v802
        %v934 = vsel %vm927, %v925, %v804
        %v935 = vsel %vm927, %v926, %v806
        %v936 = vsel %vm548, %v678, %v824
        %v937 = vsel %vm548, %v679, %v826
        %v938 = vsel %vm548, %v680, %v828
        %v939 = vsel %vm548, %v681, %v830
        %v940 = vsel %vm548, %v682, %v832
        %v941 = vsel %vm548, %v683, %v834
        %v942 = vsel %vm548, %v684, %v836
        %v943 = vsel %vm548, %v685, %v838
        %v944 = vsel %vm576, %v936, %v856
        %v945 = vsel %vm576, %v937, %v858
        %v946 = vsel %vm576, %v938, %v860
        %v947 = vsel %vm576, %v939, %v862
        %v948 = vsel %vm576, %v940, %v864
        %v949 = vsel %vm576, %v941, %v866
        %v950 = vsel %vm576, %v942, %v868
        %v951 = vsel %vm576, %v943, %v870
        %v952 = vsel %vm927, %v944, %v888
        %v953 = vsel %vm927, %v945, %v890
        %v954 = vsel %vm927, %v946, %v892
        %v955 = vsel %vm927, %v947, %v894
        %v956 = vsel %vm927, %v948, %v896
        %v957 = vsel %vm927, %v949, %v898
        %v958 = vsel %vm927, %v950, %v900
        %v959 = vsel %vm927, %v951, %v902
        %v960 = vpack.c.bf16 %v929, %v928
        %v961 = vpack.c.bf16 %v953, %v952
        %v962 = vpack.c.bf16 %v712, %v711
        %v963 = vpack.c.bf16 %v931, %v930
        %v964 = vpack.c.bf16 %v955, %v954
        %v965 = vpack.c.bf16 %v714, %v713
        %v966 = vpack.c.bf16 %v933, %v932
        %v967 = vpack.c.bf16 %v957, %v956
        %v968 = vpack.c.bf16 %v716, %v715
        %v969 = vpack.c.bf16 %v935, %v934
        %v970 = vpack.c.bf16 %v959, %v958
        %v971 = vpack.c.bf16 %v718, %v717
        %v972 = vld [vmem:[%s1] sm:$0xf]
        %v973 = vld [vmem:[%s1 + $0x4] sm:$0xf]
        %v974 = vld [vmem:[%s1 + $0x8] sm:$0xf]
        %v975 = vld [vmem:[%s1 + $0xc] sm:$0xf]
        %v976 = vld [vmem:[%s1 + $0x10] sm:$0xf]
        %v977 = vld [vmem:[%s1 + $0x14] sm:$0xf]
        %v978 = vld [vmem:[%s1 + $0x18] sm:$0xf]
        %v979 = vld [vmem:[%s1 + $0x1c] sm:$0xf]
        %v980 = vld [vmem:[%s1 + $0x20] sm:$0xf]
        %v981 = vld [vmem:[%s1 + $0x24] sm:$0xf]
        %v982 = vld [vmem:[%s1 + $0x28] sm:$0xf]
        %v983 = vld [vmem:[%s1 + $0x2c] sm:$0xf]
        %v984 = vld [vmem:[%s1 + $0x30] sm:$0xf]
        %v985 = vld [vmem:[%s1 + $0x34] sm:$0xf]
        %v986 = vld [vmem:[%s1 + $0x38] sm:$0xf]
        %v987 = vld [vmem:[%s1 + $0x3c] sm:$0xf]
        %v988 = vld [vmem:[%s1 + $0x40] sm:$0xf]
        %v989 = vld [vmem:[%s1 + $0x44] sm:$0xf]
        %v990 = vld [vmem:[%s1 + $0x48] sm:$0xf]
        %v991 = vld [vmem:[%s1 + $0x4c] sm:$0xf]
        %v992 = vld [vmem:[%s1 + $0x50] sm:$0xf]
        %v993 = vld [vmem:[%s1 + $0x54] sm:$0xf]
        %v994 = vld [vmem:[%s1 + $0x58] sm:$0xf]
        %v995 = vld [vmem:[%s1 + $0x5c] sm:$0xf]
        %v996 = vld [vmem:[%s1 + $0x60] sm:$0xf]
        %v997 = vld [vmem:[%s1 + $0x64] sm:$0xf]
        %v998 = vld [vmem:[%s1 + $0x68] sm:$0xf]
        %v999 = vld [vmem:[%s1 + $0x6c] sm:$0xf]
        %v1000 = vld [vmem:[%s1 + $0x70] sm:$0xf]
        %v1001 = vld [vmem:[%s1 + $0x74] sm:$0xf]
        %v1002 = vld [vmem:[%s1 + $0x78] sm:$0xf]
        %v1003 = vld [vmem:[%s1 + $0x7c] sm:$0xf]
        %v1004 = vld [vmem:[%s1 + $0x80] sm:$0xf]
        %v1005 = vld [vmem:[%s1 + $0x84] sm:$0xf]
        %v1006 = vld [vmem:[%s1 + $0x88] sm:$0xf]
        %v1007 = vld [vmem:[%s1 + $0x8c] sm:$0xf]
        %v1044 = vunpack.c.l.b16 %v972
        %v1045 = vunpack.c.l.b16 %v973
        %v1046 = vunpack.c.l.b16 %v974
        %v1047 = vunpack.c.l.b16 %v975
        %v1048 = vunpack.c.l.b16 %v976
        %v1049 = vunpack.c.l.b16 %v977
        %v1050 = vunpack.c.l.b16 %v978
        %v1051 = vunpack.c.l.b16 %v979
        %v1052 = vunpack.c.l.b16 %v980
        %v1053 = vunpack.c.l.b16 %v981
        %v1054 = vunpack.c.l.b16 %v982
        %v1055 = vunpack.c.l.b16 %v983
        %v1056 = vunpack.c.l.b16 %v984
        %v1057 = vunpack.c.l.b16 %v985
        %v1058 = vunpack.c.l.b16 %v986
        %v1059 = vunpack.c.l.b16 %v987
        %v1060 = vunpack.c.l.b16 %v988
        %v1061 = vunpack.c.l.b16 %v989
        %v1062 = vunpack.c.l.b16 %v990
        %v1063 = vunpack.c.l.b16 %v991
        %v1064 = vunpack.c.l.b16 %v992
        %v1065 = vunpack.c.l.b16 %v993
        %v1066 = vunpack.c.l.b16 %v994
        %v1067 = vunpack.c.l.b16 %v995
        %v1068 = vunpack.c.l.b16 %v996
        %v1069 = vunpack.c.l.b16 %v997
        %v1070 = vunpack.c.l.b16 %v998
        %v1071 = vunpack.c.l.b16 %v999
        %v1072 = vunpack.c.l.b16 %v1000
        %v1073 = vunpack.c.l.b16 %v1001
        %v1074 = vunpack.c.l.b16 %v1002
        %v1075 = vunpack.c.l.b16 %v1003
        %v1076 = vunpack.c.l.b16 %v1004
        %v1077 = vunpack.c.l.b16 %v1005
        %v1078 = vunpack.c.l.b16 %v1006
        %v1079 = vunpack.c.l.b16 %v1007
        %v1080 = vpack.c.b16 %v1045, %v1044
        %v1081 = vpack.c.b16 %v1047, %v1046
        %v1082 = vpack.c.b16 %v1049, %v1048
        %v1083 = vpack.c.b16 %v1051, %v1050
        %v1084 = vpack.c.b16 %v1053, %v1052
        %v1085 = vpack.c.b16 %v1055, %v1054
        %v1086 = vpack.c.b16 %v1057, %v1056
        %v1087 = vpack.c.b16 %v1059, %v1058
        %v1088 = vpack.c.b16 %v1061, %v1060
        %v1089 = vpack.c.b16 %v1063, %v1062
        %v1090 = vpack.c.b16 %v1065, %v1064
        %v1091 = vpack.c.b16 %v1067, %v1066
        %v1092 = vpack.c.b16 %v1069, %v1068
        %v1093 = vpack.c.b16 %v1071, %v1070
        %v1094 = vpack.c.b16 %v1073, %v1072
        %v1095 = vpack.c.b16 %v1075, %v1074
        %v1096 = vpack.c.b16 %v1077, %v1076
        %v1097 = vpack.c.b16 %v1079, %v1078
        %v1117 = vsel %vm548, %v962, 0
        %v1120 = vsel %vm548, %v965, 0
        %v1123 = vsel %vm548, %v968, 0
        %v1126 = vsel %vm548, %v971, 0
        %1128 = vmatpush.bf16.msra.mxu0 %v1087
        %1129 = vmatpush.bf16.msra.mxu0 %v1086
        %1130 = vmatpush.bf16.msra.mxu0 %v1085
        %1131 = vmatpush.bf16.msra.mxu0 %v1084
        %1132 = vmatpush.bf16.msra.mxu0 %v1083
        %1133 = vmatpush.bf16.msra.mxu0 %v1082
        %1134 = vmatpush.bf16.msra.mxu0 %v1081
        %1135 = vmatpush.bf16.msra.mxu0 %v1080
        %1136 = vmatmul.bf16.gmra.mxu0 %v960
        %v1137 = vpop.f32.mrf.mxu0
        %v1138 = vadd.f32 0.0, %v1137
        %v1139 = vpop.f32.mrf.mxu0
        %v1140 = vadd.f32 0.0, %v1139
        %1141 = vmatmul.bf16.gmra.mxu0 %v963
        %v1142 = vpop.f32.mrf.mxu0
        %v1143 = vadd.f32 0.0, %v1142
        %v1144 = vpop.f32.mrf.mxu0
        %v1145 = vadd.f32 0.0, %v1144
        %1146 = vmatmul.bf16.gmra.mxu0 %v966
        %v1147 = vpop.f32.mrf.mxu0
        %v1148 = vadd.f32 0.0, %v1147
        %v1149 = vpop.f32.mrf.mxu0
        %v1150 = vadd.f32 0.0, %v1149
        %1151 = vmatmul.bf16.gmra.mxu0 %v969
        %v1152 = vpop.f32.mrf.mxu0
        %v1153 = vadd.f32 0.0, %v1152
        %v1154 = vpop.f32.mrf.mxu0
        %v1155 = vadd.f32 0.0, %v1154
        %1156 = vdwg.mxu0
        %1157 = vmatpush.bf16.msra.mxu0 %v1095
        %1158 = vmatpush.bf16.msra.mxu0 %v1094
        %1159 = vmatpush.bf16.msra.mxu0 %v1093
        %1160 = vmatpush.bf16.msra.mxu0 %v1092
        %1161 = vmatpush.bf16.msra.mxu0 %v1091
        %1162 = vmatpush.bf16.msra.mxu0 %v1090
        %1163 = vmatpush.bf16.msra.mxu0 %v1089
        %1164 = vmatpush.bf16.msra.mxu0 %v1088
        %1165 = vmatmul.bf16.gmra.mxu0 %v961
        %v1166 = vpop.f32.mrf.mxu0
        %v1167 = vadd.f32 %v1138, %v1166
        %v1168 = vpop.f32.mrf.mxu0
        %v1169 = vadd.f32 %v1140, %v1168
        %1170 = vmatmul.bf16.gmra.mxu0 %v964
        %v1171 = vpop.f32.mrf.mxu0
        %v1172 = vadd.f32 %v1143, %v1171
        %v1173 = vpop.f32.mrf.mxu0
        %v1174 = vadd.f32 %v1145, %v1173
        %1175 = vmatmul.bf16.gmra.mxu0 %v967
        %v1176 = vpop.f32.mrf.mxu0
        %v1177 = vadd.f32 %v1148, %v1176
        %v1178 = vpop.f32.mrf.mxu0
        %v1179 = vadd.f32 %v1150, %v1178
        %1180 = vmatmul.bf16.gmra.mxu0 %v970
        %v1181 = vpop.f32.mrf.mxu0
        %v1182 = vadd.f32 %v1153, %v1181
        %v1183 = vpop.f32.mrf.mxu0
        %v1184 = vadd.f32 %v1155, %v1183
        %1185 = vdwg.mxu0
        %1186 = vmatpush.bf16.msra.mxu0 0
        %1187 = vmatpush.bf16.msra.mxu0 0
        %1188 = vmatpush.bf16.msra.mxu0 0
        %1189 = vmatpush.bf16.msra.mxu0 0
        %1190 = vmatpush.bf16.msra.mxu0 0
        %1191 = vmatpush.bf16.msra.mxu0 0
        %1192 = vmatpush.bf16.msra.mxu0 %v1097
        %1193 = vmatpush.bf16.msra.mxu0 %v1096
        %1194 = vmatmul.bf16.gmra.mxu0 %v1117
        %v1195 = vpop.f32.mrf.mxu0
        %v1196 = vadd.f32 %v1167, %v1195
        %v1197 = vpop.f32.mrf.mxu0
        %v1198 = vadd.f32 %v1169, %v1197
        %1199 = vmatmul.bf16.gmra.mxu0 %v1120
        %v1200 = vpop.f32.mrf.mxu0
        %v1201 = vadd.f32 %v1172, %v1200
        %v1202 = vpop.f32.mrf.mxu0
        %v1203 = vadd.f32 %v1174, %v1202
        %1204 = vmatmul.bf16.gmra.mxu0 %v1123
        %v1205 = vpop.f32.mrf.mxu0
        %v1206 = vadd.f32 %v1177, %v1205
        %v1207 = vpop.f32.mrf.mxu0
        %v1208 = vadd.f32 %v1179, %v1207
        %1209 = vmatmul.bf16.gmra.mxu0 %v1126
        %v1210 = vpop.f32.mrf.mxu0
        %v1211 = vadd.f32 %v1182, %v1210
        %v1212 = vpop.f32.mrf.mxu0
        %v1213 = vadd.f32 %v1184, %v1212
        %1214 = vdwg.mxu0
        %v1215 = vld [vmem:[%s2] sm:$0x1]
        %v1217 = vperm.slane %v1215, 0
        %v1219 = vmul.f32 %v1196, %v1217
        %v1220 = vmul.f32 %v1198, %v1217
        %v1221 = vmul.f32 %v1201, %v1217
        %v1222 = vmul.f32 %v1203, %v1217
        %v1223 = vmul.f32 %v1206, %v1217
        %v1224 = vmul.f32 %v1208, %v1217
        %v1225 = vmul.f32 %v1211, %v1217
        %v1226 = vmul.f32 %v1213, %v1217
        %v1227 = vld [vmem:[%s3] sm:$0x1]
        %v1229 = vperm.slane %v1227, 0
        %v1231 = vadd.f32 %v1219, %v1229
        %v1232 = vadd.f32 %v1220, %v1229
        %v1233 = vadd.f32 %v1221, %v1229
        %v1234 = vadd.f32 %v1222, %v1229
        %v1235 = vadd.f32 %v1223, %v1229
        %v1236 = vadd.f32 %v1224, %v1229
        %v1237 = vadd.f32 %v1225, %v1229
        %v1238 = vadd.f32 %v1226, %v1229
        %v1239 = vxor.u32 %v1231, 2147483648
        %v1240 = vxor.u32 %v1232, 2147483648
        %v1241 = vxor.u32 %v1233, 2147483648
        %v1242 = vxor.u32 %v1234, 2147483648
        %v1243 = vxor.u32 %v1235, 2147483648
        %v1244 = vxor.u32 %v1236, 2147483648
        %v1245 = vxor.u32 %v1237, 2147483648
        %v1246 = vxor.u32 %v1238, 2147483648
        %v1247 = vmul.f32 %v1239, 1.442695
        %v1248 = vpow.pop %v1247
        %v1249 = vmul.f32 %v1240, 1.442695
        %v1250 = vpow.pop %v1249
        %v1251 = vmul.f32 %v1241, 1.442695
        %v1252 = vpow.pop %v1251
        %v1253 = vmul.f32 %v1242, 1.442695
        %v1254 = vpow.pop %v1253
        %v1255 = vmul.f32 %v1243, 1.442695
        %v1256 = vpow.pop %v1255
        %v1257 = vmul.f32 %v1244, 1.442695
        %v1258 = vpow.pop %v1257
        %v1259 = vmul.f32 %v1245, 1.442695
        %v1260 = vpow.pop %v1259
        %v1261 = vmul.f32 %v1246, 1.442695
        %v1262 = vpow.pop %v1261
        %v1263 = vadd.f32 %v1248, 1.0
        %v1264 = vadd.f32 %v1250, 1.0
        %v1265 = vadd.f32 %v1252, 1.0
        %v1266 = vadd.f32 %v1254, 1.0
        %v1267 = vadd.f32 %v1256, 1.0
        %v1268 = vadd.f32 %v1258, 1.0
        %v1269 = vadd.f32 %v1260, 1.0
        %v1270 = vadd.f32 %v1262, 1.0
        %v1271 = vrcp.pop %v1263
        %v1272 = vmul.f32 %v1263, %v1271
        %v1273 = vsub.f32 1.0, %v1272
        %v1274 = vmul.f32 %v1271, %v1273
        %v1275 = vadd.f32 %v1271, %v1274
        %vm1276 = vweird.f32 %v1263
        %vm1277 = vweird.f32 %v1271
        %vm1278 = vmor %vm1276, %vm1277
        %v1279 = vsel %vm1278, %v1271, %v1275
        %v1280 = vand.u32 2147483647, %v1263
        %vm1281 = vcmp.eq.f32.partialorder %v1280, 8.507059e+37
        %v1282 = vand.u32 %v1263, 2147483648
        %v1283 = vor.u32 1.1754944e-38, %v1282
        %v1284 = vsel %vm1281, %v1283, %v1279
        %v1285 = vmul.f32 1.0, %v1284
        %v1286 = vrcp.pop %v1264
        %v1287 = vmul.f32 %v1264, %v1286
        %v1288 = vsub.f32 1.0, %v1287
        %v1289 = vmul.f32 %v1286, %v1288
        %v1290 = vadd.f32 %v1286, %v1289
        %vm1291 = vweird.f32 %v1264
        %vm1292 = vweird.f32 %v1286
        %vm1293 = vmor %vm1291, %vm1292
        %v1294 = vsel %vm1293, %v1286, %v1290
        %v1295 = vand.u32 2147483647, %v1264
        %vm1296 = vcmp.eq.f32.partialorder %v1295, 8.507059e+37
        %v1297 = vand.u32 %v1264, 2147483648
        %v1298 = vor.u32 1.1754944e-38, %v1297
        %v1299 = vsel %vm1296, %v1298, %v1294
        %v1300 = vmul.f32 1.0, %v1299
        %v1301 = vrcp.pop %v1265
        %v1302 = vmul.f32 %v1265, %v1301
        %v1303 = vsub.f32 1.0, %v1302
        %v1304 = vmul.f32 %v1301, %v1303
        %v1305 = vadd.f32 %v1301, %v1304
        %vm1306 = vweird.f32 %v1265
        %vm1307 = vweird.f32 %v1301
        %vm1308 = vmor %vm1306, %vm1307
        %v1309 = vsel %vm1308, %v1301, %v1305
        %v1310 = vand.u32 2147483647, %v1265
        %vm1311 = vcmp.eq.f32.partialorder %v1310, 8.507059e+37
        %v1312 = vand.u32 %v1265, 2147483648
        %v1313 = vor.u32 1.1754944e-38, %v1312
        %v1314 = vsel %vm1311, %v1313, %v1309
        %v1315 = vmul.f32 1.0, %v1314
        %v1316 = vrcp.pop %v1266
        %v1317 = vmul.f32 %v1266, %v1316
        %v1318 = vsub.f32 1.0, %v1317
        %v1319 = vmul.f32 %v1316, %v1318
        %v1320 = vadd.f32 %v1316, %v1319
        %vm1321 = vweird.f32 %v1266
        %vm1322 = vweird.f32 %v1316
        %vm1323 = vmor %vm1321, %vm1322
        %v1324 = vsel %vm1323, %v1316, %v1320
        %v1325 = vand.u32 2147483647, %v1266
        %vm1326 = vcmp.eq.f32.partialorder %v1325, 8.507059e+37
        %v1327 = vand.u32 %v1266, 2147483648
        %v1328 = vor.u32 1.1754944e-38, %v1327
        %v1329 = vsel %vm1326, %v1328, %v1324
        %v1330 = vmul.f32 1.0, %v1329
        %v1331 = vrcp.pop %v1267
        %v1332 = vmul.f32 %v1267, %v1331
        %v1333 = vsub.f32 1.0, %v1332
        %v1334 = vmul.f32 %v1331, %v1333
        %v1335 = vadd.f32 %v1331, %v1334
        %vm1336 = vweird.f32 %v1267
        %vm1337 = vweird.f32 %v1331
        %vm1338 = vmor %vm1336, %vm1337
        %v1339 = vsel %vm1338, %v1331, %v1335
        %v1340 = vand.u32 2147483647, %v1267
        %vm1341 = vcmp.eq.f32.partialorder %v1340, 8.507059e+37
        %v1342 = vand.u32 %v1267, 2147483648
        %v1343 = vor.u32 1.1754944e-38, %v1342
        %v1344 = vsel %vm1341, %v1343, %v1339
        %v1345 = vmul.f32 1.0, %v1344
        %v1346 = vrcp.pop %v1268
        %v1347 = vmul.f32 %v1268, %v1346
        %v1348 = vsub.f32 1.0, %v1347
        %v1349 = vmul.f32 %v1346, %v1348
        %v1350 = vadd.f32 %v1346, %v1349
        %vm1351 = vweird.f32 %v1268
        %vm1352 = vweird.f32 %v1346
        %vm1353 = vmor %vm1351, %vm1352
        %v1354 = vsel %vm1353, %v1346, %v1350
        %v1355 = vand.u32 2147483647, %v1268
        %vm1356 = vcmp.eq.f32.partialorder %v1355, 8.507059e+37
        %v1357 = vand.u32 %v1268, 2147483648
        %v1358 = vor.u32 1.1754944e-38, %v1357
        %v1359 = vsel %vm1356, %v1358, %v1354
        %v1360 = vmul.f32 1.0, %v1359
        %v1361 = vrcp.pop %v1269
        %v1362 = vmul.f32 %v1269, %v1361
        %v1363 = vsub.f32 1.0, %v1362
        %v1364 = vmul.f32 %v1361, %v1363
        %v1365 = vadd.f32 %v1361, %v1364
        %vm1366 = vweird.f32 %v1269
        %vm1367 = vweird.f32 %v1361
        %vm1368 = vmor %vm1366, %vm1367
        %v1369 = vsel %vm1368, %v1361, %v1365
        %v1370 = vand.u32 2147483647, %v1269
        %vm1371 = vcmp.eq.f32.partialorder %v1370, 8.507059e+37
        %v1372 = vand.u32 %v1269, 2147483648
        %v1373 = vor.u32 1.1754944e-38, %v1372
        %v1374 = vsel %vm1371, %v1373, %v1369
        %v1375 = vmul.f32 1.0, %v1374
        %v1376 = vrcp.pop %v1270
        %v1377 = vmul.f32 %v1270, %v1376
        %v1378 = vsub.f32 1.0, %v1377
        %v1379 = vmul.f32 %v1376, %v1378
        %v1380 = vadd.f32 %v1376, %v1379
        %vm1381 = vweird.f32 %v1270
        %vm1382 = vweird.f32 %v1376
        %vm1383 = vmor %vm1381, %vm1382
        %v1384 = vsel %vm1383, %v1376, %v1380
        %v1385 = vand.u32 2147483647, %v1270
        %vm1386 = vcmp.eq.f32.partialorder %v1385, 8.507059e+37
        %v1387 = vand.u32 %v1270, 2147483648
        %v1388 = vor.u32 1.1754944e-38, %v1387
        %v1389 = vsel %vm1386, %v1388, %v1384
        %v1390 = vmul.f32 1.0, %v1389
        %v1391 = vmul.f32 %v1231, %v1285
        %v1392 = vmul.f32 %v1232, %v1300
        %v1393 = vmul.f32 %v1233, %v1315
        %v1394 = vmul.f32 %v1234, %v1330
        %v1395 = vmul.f32 %v1235, %v1345
        %v1396 = vmul.f32 %v1236, %v1360
        %v1397 = vmul.f32 %v1237, %v1375
        %v1398 = vmul.f32 %v1238, %v1390
        %s1399 = scalar_lea.vmem [#allocation3], 16
        %1400 = vst.msk [vmem:[%s1399 + $0x1] sm:$0xff] %vm576, %v1391
        %1401 = vst.msk [vmem:[%s1399 + $0x11] sm:$0xff] %vm576, %v1392
        %1402 = vst.msk [vmem:[%s1399 + $0x21] sm:$0xff] %vm576, %v1393
        %1403 = vst.msk [vmem:[%s1399 + $0x31] sm:$0xff] %vm576, %v1394
        %1404 = vst.msk [vmem:[%s1399 + $0x41] sm:$0xff] %vm576, %v1395
        %1405 = vst.msk [vmem:[%s1399 + $0x51] sm:$0xff] %vm576, %v1396
        %1406 = vst.msk [vmem:[%s1399 + $0x61] sm:$0xff] %vm576, %v1397
        %1407 = vst.msk [vmem:[%s1399 + $0x71] sm:$0xff] %vm576, %v1398
        %v1408 = vld [vmem:[#allocation3] sm:$0xff]
        %v1409 = vld [vmem:[#allocation3 + $0x10] sm:$0xff]
        %v1410 = vld [vmem:[#allocation3 + $0x20] sm:$0xff]
        %v1411 = vld [vmem:[#allocation3 + $0x30] sm:$0xff]
        %v1412 = vld [vmem:[#allocation3 + $0x40] sm:$0xff]
        %v1413 = vld [vmem:[#allocation3 + $0x50] sm:$0xff]
        %v1414 = vld [vmem:[#allocation3 + $0x60] sm:$0xff]
        %v1415 = vld [vmem:[#allocation3 + $0x70] sm:$0xff]
        %v1416 = vld [vmem:[#allocation3 + $0x1] sm:$0xff]
        %v1417 = vld [vmem:[#allocation3 + $0x11] sm:$0xff]
        %v1418 = vld [vmem:[#allocation3 + $0x21] sm:$0xff]
        %v1419 = vld [vmem:[#allocation3 + $0x31] sm:$0xff]
        %v1420 = vld [vmem:[#allocation3 + $0x41] sm:$0xff]
        %v1421 = vld [vmem:[#allocation3 + $0x51] sm:$0xff]
        %v1422 = vld [vmem:[#allocation3 + $0x61] sm:$0xff]
        %v1423 = vld [vmem:[#allocation3 + $0x71] sm:$0xff]
        %v1424 = vld [vmem:[#allocation3 + $0x2] sm:$0xff]
        %v1425 = vld [vmem:[#allocation3 + $0x12] sm:$0xff]
        %v1426 = vld [vmem:[#allocation3 + $0x22] sm:$0xff]
        %v1427 = vld [vmem:[#allocation3 + $0x32] sm:$0xff]
        %v1428 = vld [vmem:[#allocation3 + $0x42] sm:$0xff]
        %v1429 = vld [vmem:[#allocation3 + $0x52] sm:$0xff]
        %v1430 = vld [vmem:[#allocation3 + $0x62] sm:$0xff]
        %v1431 = vld [vmem:[#allocation3 + $0x72] sm:$0xff]
        %v1432 = vld [vmem:[%s1399] sm:$0xff]
        %v1433 = vld [vmem:[%s1399 + $0x10] sm:$0xff]
        %v1434 = vld [vmem:[%s1399 + $0x20] sm:$0xff]
        %v1435 = vld [vmem:[%s1399 + $0x30] sm:$0xff]
        %v1436 = vld [vmem:[%s1399 + $0x40] sm:$0xff]
        %v1437 = vld [vmem:[%s1399 + $0x50] sm:$0xff]
        %v1438 = vld [vmem:[%s1399 + $0x60] sm:$0xff]
        %v1439 = vld [vmem:[%s1399 + $0x70] sm:$0xff]
        %v1440 = vld [vmem:[%s1399 + $0x1] sm:$0xff]
        %v1441 = vld [vmem:[%s1399 + $0x11] sm:$0xff]
        %v1442 = vld [vmem:[%s1399 + $0x21] sm:$0xff]
        %v1443 = vld [vmem:[%s1399 + $0x31] sm:$0xff]
        %v1444 = vld [vmem:[%s1399 + $0x41] sm:$0xff]
        %v1445 = vld [vmem:[%s1399 + $0x51] sm:$0xff]
        %v1446 = vld [vmem:[%s1399 + $0x61] sm:$0xff]
        %v1447 = vld [vmem:[%s1399 + $0x71] sm:$0xff]
        %v1448 = vld [vmem:[%s1399 + $0x2] sm:$0xff]
        %v1449 = vld [vmem:[%s1399 + $0x12] sm:$0xff]
        %v1450 = vld [vmem:[%s1399 + $0x22] sm:$0xff]
        %v1451 = vld [vmem:[%s1399 + $0x32] sm:$0xff]
        %v1452 = vld [vmem:[%s1399 + $0x42] sm:$0xff]
        %v1453 = vld [vmem:[%s1399 + $0x52] sm:$0xff]
        %v1454 = vld [vmem:[%s1399 + $0x62] sm:$0xff]
        %v1455 = vld [vmem:[%s1399 + $0x72] sm:$0xff]
        %s1456 = scalar_lea.vmem [#allocation3], 32
        %v1457 = vld [vmem:[%s1456] sm:$0xff]
        %v1458 = vld [vmem:[%s1456 + $0x10] sm:$0xff]
        %v1459 = vld [vmem:[%s1456 + $0x20] sm:$0xff]
        %v1460 = vld [vmem:[%s1456 + $0x30] sm:$0xff]
        %v1461 = vld [vmem:[%s1456 + $0x40] sm:$0xff]
        %v1462 = vld [vmem:[%s1456 + $0x50] sm:$0xff]
        %v1463 = vld [vmem:[%s1456 + $0x60] sm:$0xff]
        %v1464 = vld [vmem:[%s1456 + $0x70] sm:$0xff]
        %v1465 = vld [vmem:[%s1456 + $0x1] sm:$0xff]
        %v1466 = vld [vmem:[%s1456 + $0x11] sm:$0xff]
        %v1467 = vld [vmem:[%s1456 + $0x21] sm:$0xff]
        %v1468 = vld [vmem:[%s1456 + $0x31] sm:$0xff]
        %v1469 = vld [vmem:[%s1456 + $0x41] sm:$0xff]
        %v1470 = vld [vmem:[%s1456 + $0x51] sm:$0xff]
        %v1471 = vld [vmem:[%s1456 + $0x61] sm:$0xff]
        %v1472 = vld [vmem:[%s1456 + $0x71] sm:$0xff]
        %v1473 = vld [vmem:[%s1456 + $0x2] sm:$0xff]
        %v1474 = vld [vmem:[%s1456 + $0x12] sm:$0xff]
        %v1475 = vld [vmem:[%s1456 + $0x22] sm:$0xff]
        %v1476 = vld [vmem:[%s1456 + $0x32] sm:$0xff]
        %v1477 = vld [vmem:[%s1456 + $0x42] sm:$0xff]
        %v1478 = vld [vmem:[%s1456 + $0x52] sm:$0xff]
        %v1479 = vld [vmem:[%s1456 + $0x62] sm:$0xff]
        %v1480 = vld [vmem:[%s1456 + $0x72] sm:$0xff]
        %1489 = vrot.lane.b32.xlu0 %v1416, 64
        %v1490 = vpop.permute.xlu0 %1489
        %1491 = vrot.lane.b32.xlu0 %v1417, 64
        %v1492 = vpop.permute.xlu0 %1491
        %1493 = vrot.lane.b32.xlu0 %v1418, 64
        %v1494 = vpop.permute.xlu0 %1493
        %1495 = vrot.lane.b32.xlu0 %v1419, 64
        %v1496 = vpop.permute.xlu0 %1495
        %1497 = vrot.lane.b32.xlu0 %v1420, 64
        %v1498 = vpop.permute.xlu0 %1497
        %1499 = vrot.lane.b32.xlu0 %v1421, 64
        %v1500 = vpop.permute.xlu0 %1499
        %1501 = vrot.lane.b32.xlu0 %v1422, 64
        %v1502 = vpop.permute.xlu0 %1501
        %1503 = vrot.lane.b32.xlu0 %v1423, 64
        %v1504 = vpop.permute.xlu0 %1503
        %1521 = vrot.lane.b32.xlu0 %v1432, 64
        %v1522 = vpop.permute.xlu0 %1521
        %1523 = vrot.lane.b32.xlu0 %v1433, 64
        %v1524 = vpop.permute.xlu0 %1523
        %1525 = vrot.lane.b32.xlu0 %v1434, 64
        %v1526 = vpop.permute.xlu0 %1525
        %1527 = vrot.lane.b32.xlu0 %v1435, 64
        %v1528 = vpop.permute.xlu0 %1527
        %1529 = vrot.lane.b32.xlu0 %v1436, 64
        %v1530 = vpop.permute.xlu0 %1529
        %1531 = vrot.lane.b32.xlu0 %v1437, 64
        %v1532 = vpop.permute.xlu0 %1531
        %1533 = vrot.lane.b32.xlu0 %v1438, 64
        %v1534 = vpop.permute.xlu0 %1533
        %1535 = vrot.lane.b32.xlu0 %v1439, 64
        %v1536 = vpop.permute.xlu0 %1535
        %1553 = vrot.lane.b32.xlu0 %v1448, 64
        %v1554 = vpop.permute.xlu0 %1553
        %1555 = vrot.lane.b32.xlu0 %v1449, 64
        %v1556 = vpop.permute.xlu0 %1555
        %1557 = vrot.lane.b32.xlu0 %v1450, 64
        %v1558 = vpop.permute.xlu0 %1557
        %1559 = vrot.lane.b32.xlu0 %v1451, 64
        %v1560 = vpop.permute.xlu0 %1559
        %1561 = vrot.lane.b32.xlu0 %v1452, 64
        %v1562 = vpop.permute.xlu0 %1561
        %1563 = vrot.lane.b32.xlu0 %v1453, 64
        %v1564 = vpop.permute.xlu0 %1563
        %1565 = vrot.lane.b32.xlu0 %v1454, 64
        %v1566 = vpop.permute.xlu0 %1565
        %1567 = vrot.lane.b32.xlu0 %v1455, 64
        %v1568 = vpop.permute.xlu0 %1567
        %1585 = vrot.lane.b32.xlu0 %v1465, 64
        %v1586 = vpop.permute.xlu0 %1585
        %1587 = vrot.lane.b32.xlu0 %v1466, 64
        %v1588 = vpop.permute.xlu0 %1587
        %1589 = vrot.lane.b32.xlu0 %v1467, 64
        %v1590 = vpop.permute.xlu0 %1589
        %1591 = vrot.lane.b32.xlu0 %v1468, 64
        %v1592 = vpop.permute.xlu0 %1591
        %1593 = vrot.lane.b32.xlu0 %v1469, 64
        %v1594 = vpop.permute.xlu0 %1593
        %1595 = vrot.lane.b32.xlu0 %v1470, 64
        %v1596 = vpop.permute.xlu0 %1595
        %1597 = vrot.lane.b32.xlu0 %v1471, 64
        %v1598 = vpop.permute.xlu0 %1597
        %1599 = vrot.lane.b32.xlu0 %v1472, 64
        %v1600 = vpop.permute.xlu0 %1599
        %v1609 = vsel %vm576, %v1408, %v1490
        %v1610 = vsel %vm576, %v1409, %v1492
        %v1611 = vsel %vm576, %v1410, %v1494
        %v1612 = vsel %vm576, %v1411, %v1496
        %v1613 = vsel %vm576, %v1412, %v1498
        %v1614 = vsel %vm576, %v1413, %v1500
        %v1615 = vsel %vm576, %v1414, %v1502
        %v1616 = vsel %vm576, %v1415, %v1504
        %v1617 = vsel %vm576, %v1424, %v1522
        %v1618 = vsel %vm576, %v1425, %v1524
        %v1619 = vsel %vm576, %v1426, %v1526
        %v1620 = vsel %vm576, %v1427, %v1528
        %v1621 = vsel %vm576, %v1428, %v1530
        %v1622 = vsel %vm576, %v1429, %v1532
        %v1623 = vsel %vm576, %v1430, %v1534
        %v1624 = vsel %vm576, %v1431, %v1536
        %v1625 = vsel %vm576, %v1440, %v1554
        %v1626 = vsel %vm576, %v1441, %v1556
        %v1627 = vsel %vm576, %v1442, %v1558
        %v1628 = vsel %vm576, %v1443, %v1560
        %v1629 = vsel %vm576, %v1444, %v1562
        %v1630 = vsel %vm576, %v1445, %v1564
        %v1631 = vsel %vm576, %v1446, %v1566
        %v1632 = vsel %vm576, %v1447, %v1568
        %v1633 = vsel %vm576, %v1457, %v1586
        %v1634 = vsel %vm576, %v1458, %v1588
        %v1635 = vsel %vm576, %v1459, %v1590
        %v1636 = vsel %vm576, %v1460, %v1592
        %v1637 = vsel %vm576, %v1461, %v1594
        %v1638 = vsel %vm576, %v1462, %v1596
        %v1639 = vsel %vm576, %v1463, %v1598
        %v1640 = vsel %vm576, %v1464, %v1600
        %v1641 = vpack.c.bf16 %v1610, %v1609
        %v1642 = vpack.c.bf16 %v1618, %v1617
        %v1643 = vpack.c.bf16 %v1626, %v1625
        %v1644 = vpack.c.bf16 %v1634, %v1633
        %v1645 = vpack.c.bf16 %v1474, %v1473
        %v1646 = vpack.c.bf16 %v1612, %v1611
        %v1647 = vpack.c.bf16 %v1620, %v1619
        %v1648 = vpack.c.bf16 %v1628, %v1627
        %v1649 = vpack.c.bf16 %v1636, %v1635
        %v1650 = vpack.c.bf16 %v1476, %v1475
        %v1651 = vpack.c.bf16 %v1614, %v1613
        %v1652 = vpack.c.bf16 %v1622, %v1621
        %v1653 = vpack.c.bf16 %v1630, %v1629
        %v1654 = vpack.c.bf16 %v1638, %v1637
        %v1655 = vpack.c.bf16 %v1478, %v1477
        %v1656 = vpack.c.bf16 %v1616, %v1615
        %v1657 = vpack.c.bf16 %v1624, %v1623
        %v1658 = vpack.c.bf16 %v1632, %v1631
        %v1659 = vpack.c.bf16 %v1640, %v1639
        %v1660 = vpack.c.bf16 %v1480, %v1479
        %v1661 = vld [vmem:[%s4] sm:$0xf]
        %v1662 = vld [vmem:[%s4 + $0x4] sm:$0xf]
        %v1663 = vld [vmem:[%s4 + $0x8] sm:$0xf]
        %v1664 = vld [vmem:[%s4 + $0xc] sm:$0xf]
        %v1665 = vld [vmem:[%s4 + $0x10] sm:$0xf]
        %v1666 = vld [vmem:[%s4 + $0x14] sm:$0xf]
        %v1667 = vld [vmem:[%s4 + $0x18] sm:$0xf]
        %v1668 = vld [vmem:[%s4 + $0x1c] sm:$0xf]
        %v1669 = vld [vmem:[%s4 + $0x20] sm:$0xf]
        %v1670 = vld [vmem:[%s4 + $0x24] sm:$0xf]
        %v1671 = vld [vmem:[%s4 + $0x28] sm:$0xf]
        %v1672 = vld [vmem:[%s4 + $0x2c] sm:$0xf]
        %v1673 = vld [vmem:[%s4 + $0x30] sm:$0xf]
        %v1674 = vld [vmem:[%s4 + $0x34] sm:$0xf]
        %v1675 = vld [vmem:[%s4 + $0x38] sm:$0xf]
        %v1676 = vld [vmem:[%s4 + $0x3c] sm:$0xf]
        %v1677 = vld [vmem:[%s4 + $0x40] sm:$0xf]
        %v1678 = vld [vmem:[%s4 + $0x44] sm:$0xf]
        %v1679 = vld [vmem:[%s4 + $0x48] sm:$0xf]
        %v1680 = vld [vmem:[%s4 + $0x4c] sm:$0xf]
        %v1681 = vld [vmem:[%s4 + $0x50] sm:$0xf]
        %v1682 = vld [vmem:[%s4 + $0x54] sm:$0xf]
        %v1683 = vld [vmem:[%s4 + $0x58] sm:$0xf]
        %v1684 = vld [vmem:[%s4 + $0x5c] sm:$0xf]
        %v1685 = vld [vmem:[%s4 + $0x60] sm:$0xf]
        %v1686 = vld [vmem:[%s4 + $0x64] sm:$0xf]
        %v1687 = vld [vmem:[%s4 + $0x68] sm:$0xf]
        %v1688 = vld [vmem:[%s4 + $0x6c] sm:$0xf]
        %v1689 = vld [vmem:[%s4 + $0x70] sm:$0xf]
        %v1690 = vld [vmem:[%s4 + $0x74] sm:$0xf]
        %v1691 = vld [vmem:[%s4 + $0x78] sm:$0xf]
        %v1692 = vld [vmem:[%s4 + $0x7c] sm:$0xf]
        %v1693 = vld [vmem:[%s4 + $0x80] sm:$0xf]
        %v1694 = vld [vmem:[%s4 + $0x84] sm:$0xf]
        %v1695 = vld [vmem:[%s4 + $0x88] sm:$0xf]
        %v1696 = vld [vmem:[%s4 + $0x8c] sm:$0xf]
        %v1697 = vld [vmem:[%s4 + $0x90] sm:$0xf]
        %v1698 = vld [vmem:[%s4 + $0x94] sm:$0xf]
        %v1699 = vld [vmem:[%s4 + $0x98] sm:$0xf]
        %v1700 = vld [vmem:[%s4 + $0x9c] sm:$0xf]
        %v1701 = vld [vmem:[%s4 + $0xa0] sm:$0xf]
        %v1702 = vld [vmem:[%s4 + $0xa4] sm:$0xf]
        %v1703 = vld [vmem:[%s4 + $0xa8] sm:$0xf]
        %v1704 = vld [vmem:[%s4 + $0xac] sm:$0xf]
        %v1705 = vld [vmem:[%s4 + $0xb0] sm:$0xf]
        %v1706 = vld [vmem:[%s4 + $0xb4] sm:$0xf]
        %v1707 = vld [vmem:[%s4 + $0xb8] sm:$0xf]
        %v1708 = vld [vmem:[%s4 + $0xbc] sm:$0xf]
        %v1709 = vld [vmem:[%s4 + $0xc0] sm:$0xf]
        %v1710 = vld [vmem:[%s4 + $0xc4] sm:$0xf]
        %v1711 = vld [vmem:[%s4 + $0xc8] sm:$0xf]
        %v1712 = vld [vmem:[%s4 + $0xcc] sm:$0xf]
        %v1713 = vld [vmem:[%s4 + $0xd0] sm:$0xf]
        %v1714 = vld [vmem:[%s4 + $0xd4] sm:$0xf]
        %v1715 = vld [vmem:[%s4 + $0xd8] sm:$0xf]
        %v1716 = vld [vmem:[%s4 + $0xdc] sm:$0xf]
        %v1717 = vld [vmem:[%s4 + $0xe0] sm:$0xf]
        %v1718 = vld [vmem:[%s4 + $0xe4] sm:$0xf]
        %v1719 = vld [vmem:[%s4 + $0xe8] sm:$0xf]
        %v1720 = vld [vmem:[%s4 + $0xec] sm:$0xf]
        %v1721 = vld [vmem:[%s4 + $0xf0] sm:$0xf]
        %v1722 = vld [vmem:[%s4 + $0xf4] sm:$0xf]
        %v1723 = vld [vmem:[%s4 + $0xf8] sm:$0xf]
        %v1724 = vld [vmem:[%s4 + $0xfc] sm:$0xf]
        %v1725 = vld [vmem:[%s4 + $0x100] sm:$0xf]
        %v1726 = vld [vmem:[%s4 + $0x104] sm:$0xf]
        %v1727 = vld [vmem:[%s4 + $0x108] sm:$0xf]
        %v1728 = vld [vmem:[%s4 + $0x10c] sm:$0xf]
        %v1729 = vld [vmem:[%s4 + $0x110] sm:$0xf]
        %v1730 = vld [vmem:[%s4 + $0x114] sm:$0xf]
        %v1731 = vld [vmem:[%s4 + $0x118] sm:$0xf]
        %v1732 = vld [vmem:[%s4 + $0x11c] sm:$0xf]
        %v1805 = vunpack.c.l.b16 %v1661
        %v1806 = vunpack.c.l.b16 %v1662
        %v1807 = vunpack.c.l.b16 %v1663
        %v1808 = vunpack.c.l.b16 %v1664
        %v1809 = vunpack.c.l.b16 %v1665
        %v1810 = vunpack.c.l.b16 %v1666
        %v1811 = vunpack.c.l.b16 %v1667
        %v1812 = vunpack.c.l.b16 %v1668
        %v1813 = vunpack.c.l.b16 %v1669
        %v1814 = vunpack.c.l.b16 %v1670
        %v1815 = vunpack.c.l.b16 %v1671
        %v1816 = vunpack.c.l.b16 %v1672
        %v1817 = vunpack.c.l.b16 %v1673
        %v1818 = vunpack.c.l.b16 %v1674
        %v1819 = vunpack.c.l.b16 %v1675
        %v1820 = vunpack.c.l.b16 %v1676
        %v1821 = vunpack.c.l.b16 %v1677
        %v1822 = vunpack.c.l.b16 %v1678
        %v1823 = vunpack.c.l.b16 %v1679
        %v1824 = vunpack.c.l.b16 %v1680
        %v1825 = vunpack.c.l.b16 %v1681
        %v1826 = vunpack.c.l.b16 %v1682
        %v1827 = vunpack.c.l.b16 %v1683
        %v1828 = vunpack.c.l.b16 %v1684
        %v1829 = vunpack.c.l.b16 %v1685
        %v1830 = vunpack.c.l.b16 %v1686
        %v1831 = vunpack.c.l.b16 %v1687
        %v1832 = vunpack.c.l.b16 %v1688
        %v1833 = vunpack.c.l.b16 %v1689
        %v1834 = vunpack.c.l.b16 %v1690
        %v1835 = vunpack.c.l.b16 %v1691
        %v1836 = vunpack.c.l.b16 %v1692
        %v1837 = vunpack.c.l.b16 %v1693
        %v1838 = vunpack.c.l.b16 %v1694
        %v1839 = vunpack.c.l.b16 %v1695
        %v1840 = vunpack.c.l.b16 %v1696
        %v1841 = vunpack.c.l.b16 %v1697
        %v1842 = vunpack.c.l.b16 %v1698
        %v1843 = vunpack.c.l.b16 %v1699
        %v1844 = vunpack.c.l.b16 %v1700
        %v1845 = vunpack.c.l.b16 %v1701
        %v1846 = vunpack.c.l.b16 %v1702
        %v1847 = vunpack.c.l.b16 %v1703
        %v1848 = vunpack.c.l.b16 %v1704
        %v1849 = vunpack.c.l.b16 %v1705
        %v1850 = vunpack.c.l.b16 %v1706
        %v1851 = vunpack.c.l.b16 %v1707
        %v1852 = vunpack.c.l.b16 %v1708
        %v1853 = vunpack.c.l.b16 %v1709
        %v1854 = vunpack.c.l.b16 %v1710
        %v1855 = vunpack.c.l.b16 %v1711
        %v1856 = vunpack.c.l.b16 %v1712
        %v1857 = vunpack.c.l.b16 %v1713
        %v1858 = vunpack.c.l.b16 %v1714
        %v1859 = vunpack.c.l.b16 %v1715
        %v1860 = vunpack.c.l.b16 %v1716
        %v1861 = vunpack.c.l.b16 %v1717
        %v1862 = vunpack.c.l.b16 %v1718
        %v1863 = vunpack.c.l.b16 %v1719
        %v1864 = vunpack.c.l.b16 %v1720
        %v1865 = vunpack.c.l.b16 %v1721
        %v1866 = vunpack.c.l.b16 %v1722
        %v1867 = vunpack.c.l.b16 %v1723
        %v1868 = vunpack.c.l.b16 %v1724
        %v1869 = vunpack.c.l.b16 %v1725
        %v1870 = vunpack.c.l.b16 %v1726
        %v1871 = vunpack.c.l.b16 %v1727
        %v1872 = vunpack.c.l.b16 %v1728
        %v1873 = vunpack.c.l.b16 %v1729
        %v1874 = vunpack.c.l.b16 %v1730
        %v1875 = vunpack.c.l.b16 %v1731
        %v1876 = vunpack.c.l.b16 %v1732
        %v1877 = vpack.c.b16 %v1806, %v1805
        %v1878 = vpack.c.b16 %v1808, %v1807
        %v1879 = vpack.c.b16 %v1810, %v1809
        %v1880 = vpack.c.b16 %v1812, %v1811
        %v1881 = vpack.c.b16 %v1814, %v1813
        %v1882 = vpack.c.b16 %v1816, %v1815
        %v1883 = vpack.c.b16 %v1818, %v1817
        %v1884 = vpack.c.b16 %v1820, %v1819
        %v1885 = vpack.c.b16 %v1822, %v1821
        %v1886 = vpack.c.b16 %v1824, %v1823
        %v1887 = vpack.c.b16 %v1826, %v1825
        %v1888 = vpack.c.b16 %v1828, %v1827
        %v1889 = vpack.c.b16 %v1830, %v1829
        %v1890 = vpack.c.b16 %v1832, %v1831
        %v1891 = vpack.c.b16 %v1834, %v1833
        %v1892 = vpack.c.b16 %v1836, %v1835
        %v1893 = vpack.c.b16 %v1838, %v1837
        %v1894 = vpack.c.b16 %v1840, %v1839
        %v1895 = vpack.c.b16 %v1842, %v1841
        %v1896 = vpack.c.b16 %v1844, %v1843
        %v1897 = vpack.c.b16 %v1846, %v1845
        %v1898 = vpack.c.b16 %v1848, %v1847
        %v1899 = vpack.c.b16 %v1850, %v1849
        %v1900 = vpack.c.b16 %v1852, %v1851
        %v1901 = vpack.c.b16 %v1854, %v1853
        %v1902 = vpack.c.b16 %v1856, %v1855
        %v1903 = vpack.c.b16 %v1858, %v1857
        %v1904 = vpack.c.b16 %v1860, %v1859
        %v1905 = vpack.c.b16 %v1862, %v1861
        %v1906 = vpack.c.b16 %v1864, %v1863
        %v1907 = vpack.c.b16 %v1866, %v1865
        %v1908 = vpack.c.b16 %v1868, %v1867
        %v1909 = vpack.c.b16 %v1870, %v1869
        %v1910 = vpack.c.b16 %v1872, %v1871
        %v1911 = vpack.c.b16 %v1874, %v1873
        %v1912 = vpack.c.b16 %v1876, %v1875
        %v1950 = vsel %vm576, %v1645, 0
        %v1953 = vsel %vm576, %v1650, 0
        %v1956 = vsel %vm576, %v1655, 0
        %v1959 = vsel %vm576, %v1660, 0
        %1961 = vmatpush.bf16.msra.mxu0 %v1884
        %1962 = vmatpush.bf16.msra.mxu0 %v1883
        %1963 = vmatpush.bf16.msra.mxu0 %v1882
        %1964 = vmatpush.bf16.msra.mxu0 %v1881
        %1965 = vmatpush.bf16.msra.mxu0 %v1880
        %1966 = vmatpush.bf16.msra.mxu0 %v1879
        %1967 = vmatpush.bf16.msra.mxu0 %v1878
        %1968 = vmatpush.bf16.msra.mxu0 %v1877
        %1969 = vmatmul.bf16.gmra.mxu0 %v1641
        %v1970 = vpop.f32.mrf.mxu0
        %v1971 = vadd.f32 0.0, %v1970
        %v1972 = vpop.f32.mrf.mxu0
        %v1973 = vadd.f32 0.0, %v1972
        %1974 = vmatmul.bf16.gmra.mxu0 %v1646
        %v1975 = vpop.f32.mrf.mxu0
        %v1976 = vadd.f32 0.0, %v1975
        %v1977 = vpop.f32.mrf.mxu0
        %v1978 = vadd.f32 0.0, %v1977
        %1979 = vmatmul.bf16.gmra.mxu0 %v1651
        %v1980 = vpop.f32.mrf.mxu0
        %v1981 = vadd.f32 0.0, %v1980
        %v1982 = vpop.f32.mrf.mxu0
        %v1983 = vadd.f32 0.0, %v1982
        %1984 = vmatmul.bf16.gmra.mxu0 %v1656
        %v1985 = vpop.f32.mrf.mxu0
        %v1986 = vadd.f32 0.0, %v1985
        %v1987 = vpop.f32.mrf.mxu0
        %v1988 = vadd.f32 0.0, %v1987
        %1989 = vdwg.mxu0
        %1990 = vmatpush.bf16.msra.mxu0 %v1892
        %1991 = vmatpush.bf16.msra.mxu0 %v1891
        %1992 = vmatpush.bf16.msra.mxu0 %v1890
        %1993 = vmatpush.bf16.msra.mxu0 %v1889
        %1994 = vmatpush.bf16.msra.mxu0 %v1888
        %1995 = vmatpush.bf16.msra.mxu0 %v1887
        %1996 = vmatpush.bf16.msra.mxu0 %v1886
        %1997 = vmatpush.bf16.msra.mxu0 %v1885
        %1998 = vmatmul.bf16.gmra.mxu0 %v1642
        %v1999 = vpop.f32.mrf.mxu0
        %v2000 = vadd.f32 %v1971, %v1999
        %v2001 = vpop.f32.mrf.mxu0
        %v2002 = vadd.f32 %v1973, %v2001
        %2003 = vmatmul.bf16.gmra.mxu0 %v1647
        %v2004 = vpop.f32.mrf.mxu0
        %v2005 = vadd.f32 %v1976, %v2004
        %v2006 = vpop.f32.mrf.mxu0
        %v2007 = vadd.f32 %v1978, %v2006
        %2008 = vmatmul.bf16.gmra.mxu0 %v1652
        %v2009 = vpop.f32.mrf.mxu0
        %v2010 = vadd.f32 %v1981, %v2009
        %v2011 = vpop.f32.mrf.mxu0
        %v2012 = vadd.f32 %v1983, %v2011
        %2013 = vmatmul.bf16.gmra.mxu0 %v1657
        %v2014 = vpop.f32.mrf.mxu0
        %v2015 = vadd.f32 %v1986, %v2014
        %v2016 = vpop.f32.mrf.mxu0
        %v2017 = vadd.f32 %v1988, %v2016
        %2018 = vdwg.mxu0
        %2019 = vmatpush.bf16.msra.mxu0 %v1900
        %2020 = vmatpush.bf16.msra.mxu0 %v1899
        %2021 = vmatpush.bf16.msra.mxu0 %v1898
        %2022 = vmatpush.bf16.msra.mxu0 %v1897
        %2023 = vmatpush.bf16.msra.mxu0 %v1896
        %2024 = vmatpush.bf16.msra.mxu0 %v1895
        %2025 = vmatpush.bf16.msra.mxu0 %v1894
        %2026 = vmatpush.bf16.msra.mxu0 %v1893
        %2027 = vmatmul.bf16.gmra.mxu0 %v1643
        %v2028 = vpop.f32.mrf.mxu0
        %v2029 = vadd.f32 %v2000, %v2028
        %v2030 = vpop.f32.mrf.mxu0
        %v2031 = vadd.f32 %v2002, %v2030
        %2032 = vmatmul.bf16.gmra.mxu0 %v1648
        %v2033 = vpop.f32.mrf.mxu0
        %v2034 = vadd.f32 %v2005, %v2033
        %v2035 = vpop.f32.mrf.mxu0
        %v2036 = vadd.f32 %v2007, %v2035
        %2037 = vmatmul.bf16.gmra.mxu0 %v1653
        %v2038 = vpop.f32.mrf.mxu0
        %v2039 = vadd.f32 %v2010, %v2038
        %v2040 = vpop.f32.mrf.mxu0
        %v2041 = vadd.f32 %v2012, %v2040
        %2042 = vmatmul.bf16.gmra.mxu0 %v1658
        %v2043 = vpop.f32.mrf.mxu0
        %v2044 = vadd.f32 %v2015, %v2043
        %v2045 = vpop.f32.mrf.mxu0
        %v2046 = vadd.f32 %v2017, %v2045
        %2047 = vdwg.mxu0
        %2048 = vmatpush.bf16.msra.mxu0 %v1908
        %2049 = vmatpush.bf16.msra.mxu0 %v1907
        %2050 = vmatpush.bf16.msra.mxu0 %v1906
        %2051 = vmatpush.bf16.msra.mxu0 %v1905
        %2052 = vmatpush.bf16.msra.mxu0 %v1904
        %2053 = vmatpush.bf16.msra.mxu0 %v1903
        %2054 = vmatpush.bf16.msra.mxu0 %v1902
        %2055 = vmatpush.bf16.msra.mxu0 %v1901
        %2056 = vmatmul.bf16.gmra.mxu0 %v1644
        %v2057 = vpop.f32.mrf.mxu0
        %v2058 = vadd.f32 %v2029, %v2057
        %v2059 = vpop.f32.mrf.mxu0
        %v2060 = vadd.f32 %v2031, %v2059
        %2061 = vmatmul.bf16.gmra.mxu0 %v1649
        %v2062 = vpop.f32.mrf.mxu0
        %v2063 = vadd.f32 %v2034, %v2062
        %v2064 = vpop.f32.mrf.mxu0
        %v2065 = vadd.f32 %v2036, %v2064
        %2066 = vmatmul.bf16.gmra.mxu0 %v1654
        %v2067 = vpop.f32.mrf.mxu0
        %v2068 = vadd.f32 %v2039, %v2067
        %v2069 = vpop.f32.mrf.mxu0
        %v2070 = vadd.f32 %v2041, %v2069
        %2071 = vmatmul.bf16.gmra.mxu0 %v1659
        %v2072 = vpop.f32.mrf.mxu0
        %v2073 = vadd.f32 %v2044, %v2072
        %v2074 = vpop.f32.mrf.mxu0
        %v2075 = vadd.f32 %v2046, %v2074
        %2076 = vdwg.mxu0
        %2077 = vmatpush.bf16.msra.mxu0 0
        %2078 = vmatpush.bf16.msra.mxu0 0
        %2079 = vmatpush.bf16.msra.mxu0 0
        %2080 = vmatpush.bf16.msra.mxu0 0
        %2081 = vmatpush.bf16.msra.mxu0 %v1912
        %2082 = vmatpush.bf16.msra.mxu0 %v1911
        %2083 = vmatpush.bf16.msra.mxu0 %v1910
        %2084 = vmatpush.bf16.msra.mxu0 %v1909
        %2085 = vmatmul.bf16.gmra.mxu0 %v1950
        %v2086 = vpop.f32.mrf.mxu0
        %v2087 = vadd.f32 %v2058, %v2086
        %v2088 = vpop.f32.mrf.mxu0
        %v2089 = vadd.f32 %v2060, %v2088
        %2090 = vmatmul.bf16.gmra.mxu0 %v1953
        %v2091 = vpop.f32.mrf.mxu0
        %v2092 = vadd.f32 %v2063, %v2091
        %v2093 = vpop.f32.mrf.mxu0
        %v2094 = vadd.f32 %v2065, %v2093
        %2095 = vmatmul.bf16.gmra.mxu0 %v1956
        %v2096 = vpop.f32.mrf.mxu0
        %v2097 = vadd.f32 %v2068, %v2096
        %v2098 = vpop.f32.mrf.mxu0
        %v2099 = vadd.f32 %v2070, %v2098
        %2100 = vmatmul.bf16.gmra.mxu0 %v1959
        %v2101 = vpop.f32.mrf.mxu0
        %v2102 = vadd.f32 %v2073, %v2101
        %v2103 = vpop.f32.mrf.mxu0
        %v2104 = vadd.f32 %v2075, %v2103
        %2105 = vdwg.mxu0
        %v2106 = vld [vmem:[%s5] sm:$0x1]
        %v2108 = vperm.slane %v2106, 0
        %v2110 = vmul.f32 %v2087, %v2108
        %v2111 = vmul.f32 %v2089, %v2108
        %v2112 = vmul.f32 %v2092, %v2108
        %v2113 = vmul.f32 %v2094, %v2108
        %v2114 = vmul.f32 %v2097, %v2108
        %v2115 = vmul.f32 %v2099, %v2108
        %v2116 = vmul.f32 %v2102, %v2108
        %v2117 = vmul.f32 %v2104, %v2108
        %v2118 = vld [vmem:[%s6] sm:$0x1]
        %v2120 = vperm.slane %v2118, 0
        %v2122 = vadd.f32 %v2110, %v2120
        %v2123 = vadd.f32 %v2111, %v2120
        %v2124 = vadd.f32 %v2112, %v2120
        %v2125 = vadd.f32 %v2113, %v2120
        %v2126 = vadd.f32 %v2114, %v2120
        %v2127 = vadd.f32 %v2115, %v2120
        %v2128 = vadd.f32 %v2116, %v2120
        %v2129 = vadd.f32 %v2117, %v2120
        %v2130 = vxor.u32 %v2122, 2147483648
        %v2131 = vxor.u32 %v2123, 2147483648
        %v2132 = vxor.u32 %v2124, 2147483648
        %v2133 = vxor.u32 %v2125, 2147483648
        %v2134 = vxor.u32 %v2126, 2147483648
        %v2135 = vxor.u32 %v2127, 2147483648
        %v2136 = vxor.u32 %v2128, 2147483648
        %v2137 = vxor.u32 %v2129, 2147483648
        %v2138 = vmul.f32 %v2130, 1.442695
        %v2139 = vpow.pop %v2138
        %v2140 = vmul.f32 %v2131, 1.442695
        %v2141 = vpow.pop %v2140
        %v2142 = vmul.f32 %v2132, 1.442695
        %v2143 = vpow.pop %v2142
        %v2144 = vmul.f32 %v2133, 1.442695
        %v2145 = vpow.pop %v2144
        %v2146 = vmul.f32 %v2134, 1.442695
        %v2147 = vpow.pop %v2146
        %v2148 = vmul.f32 %v2135, 1.442695
        %v2149 = vpow.pop %v2148
        %v2150 = vmul.f32 %v2136, 1.442695
        %v2151 = vpow.pop %v2150
        %v2152 = vmul.f32 %v2137, 1.442695
        %v2153 = vpow.pop %v2152
        %v2154 = vadd.f32 %v2139, 1.0
        %v2155 = vadd.f32 %v2141, 1.0
        %v2156 = vadd.f32 %v2143, 1.0
        %v2157 = vadd.f32 %v2145, 1.0
        %v2158 = vadd.f32 %v2147, 1.0
        %v2159 = vadd.f32 %v2149, 1.0
        %v2160 = vadd.f32 %v2151, 1.0
        %v2161 = vadd.f32 %v2153, 1.0
        %v2162 = vrcp.pop %v2154
        %v2163 = vmul.f32 %v2154, %v2162
        %v2164 = vsub.f32 1.0, %v2163
        %v2165 = vmul.f32 %v2162, %v2164
        %v2166 = vadd.f32 %v2162, %v2165
        %vm2167 = vweird.f32 %v2154
        %vm2168 = vweird.f32 %v2162
        %vm2169 = vmor %vm2167, %vm2168
        %v2170 = vsel %vm2169, %v2162, %v2166
        %v2171 = vand.u32 2147483647, %v2154
        %vm2172 = vcmp.eq.f32.partialorder %v2171, 8.507059e+37
        %v2173 = vand.u32 %v2154, 2147483648
        %v2174 = vor.u32 1.1754944e-38, %v2173
        %v2175 = vsel %vm2172, %v2174, %v2170
        %v2176 = vmul.f32 1.0, %v2175
        %v2177 = vrcp.pop %v2155
        %v2178 = vmul.f32 %v2155, %v2177
        %v2179 = vsub.f32 1.0, %v2178
        %v2180 = vmul.f32 %v2177, %v2179
        %v2181 = vadd.f32 %v2177, %v2180
        %vm2182 = vweird.f32 %v2155
        %vm2183 = vweird.f32 %v2177
        %vm2184 = vmor %vm2182, %vm2183
        %v2185 = vsel %vm2184, %v2177, %v2181
        %v2186 = vand.u32 2147483647, %v2155
        %vm2187 = vcmp.eq.f32.partialorder %v2186, 8.507059e+37
        %v2188 = vand.u32 %v2155, 2147483648
        %v2189 = vor.u32 1.1754944e-38, %v2188
        %v2190 = vsel %vm2187, %v2189, %v2185
        %v2191 = vmul.f32 1.0, %v2190
        %v2192 = vrcp.pop %v2156
        %v2193 = vmul.f32 %v2156, %v2192
        %v2194 = vsub.f32 1.0, %v2193
        %v2195 = vmul.f32 %v2192, %v2194
        %v2196 = vadd.f32 %v2192, %v2195
        %vm2197 = vweird.f32 %v2156
        %vm2198 = vweird.f32 %v2192
        %vm2199 = vmor %vm2197, %vm2198
        %v2200 = vsel %vm2199, %v2192, %v2196
        %v2201 = vand.u32 2147483647, %v2156
        %vm2202 = vcmp.eq.f32.partialorder %v2201, 8.507059e+37
        %v2203 = vand.u32 %v2156, 2147483648
        %v2204 = vor.u32 1.1754944e-38, %v2203
        %v2205 = vsel %vm2202, %v2204, %v2200
        %v2206 = vmul.f32 1.0, %v2205
        %v2207 = vrcp.pop %v2157
        %v2208 = vmul.f32 %v2157, %v2207
        %v2209 = vsub.f32 1.0, %v2208
        %v2210 = vmul.f32 %v2207, %v2209
        %v2211 = vadd.f32 %v2207, %v2210
        %vm2212 = vweird.f32 %v2157
        %vm2213 = vweird.f32 %v2207
        %vm2214 = vmor %vm2212, %vm2213
        %v2215 = vsel %vm2214, %v2207, %v2211
        %v2216 = vand.u32 2147483647, %v2157
        %vm2217 = vcmp.eq.f32.partialorder %v2216, 8.507059e+37
        %v2218 = vand.u32 %v2157, 2147483648
        %v2219 = vor.u32 1.1754944e-38, %v2218
        %v2220 = vsel %vm2217, %v2219, %v2215
        %v2221 = vmul.f32 1.0, %v2220
        %v2222 = vrcp.pop %v2158
        %v2223 = vmul.f32 %v2158, %v2222
        %v2224 = vsub.f32 1.0, %v2223
        %v2225 = vmul.f32 %v2222, %v2224
        %v2226 = vadd.f32 %v2222, %v2225
        %vm2227 = vweird.f32 %v2158
        %vm2228 = vweird.f32 %v2222
        %vm2229 = vmor %vm2227, %vm2228
        %v2230 = vsel %vm2229, %v2222, %v2226
        %v2231 = vand.u32 2147483647, %v2158
        %vm2232 = vcmp.eq.f32.partialorder %v2231, 8.507059e+37
        %v2233 = vand.u32 %v2158, 2147483648
        %v2234 = vor.u32 1.1754944e-38, %v2233
        %v2235 = vsel %vm2232, %v2234, %v2230
        %v2236 = vmul.f32 1.0, %v2235
        %v2237 = vrcp.pop %v2159
        %v2238 = vmul.f32 %v2159, %v2237
        %v2239 = vsub.f32 1.0, %v2238
        %v2240 = vmul.f32 %v2237, %v2239
        %v2241 = vadd.f32 %v2237, %v2240
        %vm2242 = vweird.f32 %v2159
        %vm2243 = vweird.f32 %v2237
        %vm2244 = vmor %vm2242, %vm2243
        %v2245 = vsel %vm2244, %v2237, %v2241
        %v2246 = vand.u32 2147483647, %v2159
        %vm2247 = vcmp.eq.f32.partialorder %v2246, 8.507059e+37
        %v2248 = vand.u32 %v2159, 2147483648
        %v2249 = vor.u32 1.1754944e-38, %v2248
        %v2250 = vsel %vm2247, %v2249, %v2245
        %v2251 = vmul.f32 1.0, %v2250
        %v2252 = vrcp.pop %v2160
        %v2253 = vmul.f32 %v2160, %v2252
        %v2254 = vsub.f32 1.0, %v2253
        %v2255 = vmul.f32 %v2252, %v2254
        %v2256 = vadd.f32 %v2252, %v2255
        %vm2257 = vweird.f32 %v2160
        %vm2258 = vweird.f32 %v2252
        %vm2259 = vmor %vm2257, %vm2258
        %v2260 = vsel %vm2259, %v2252, %v2256
        %v2261 = vand.u32 2147483647, %v2160
        %vm2262 = vcmp.eq.f32.partialorder %v2261, 8.507059e+37
        %v2263 = vand.u32 %v2160, 2147483648
        %v2264 = vor.u32 1.1754944e-38, %v2263
        %v2265 = vsel %vm2262, %v2264, %v2260
        %v2266 = vmul.f32 1.0, %v2265
        %v2267 = vrcp.pop %v2161
        %v2268 = vmul.f32 %v2161, %v2267
        %v2269 = vsub.f32 1.0, %v2268
        %v2270 = vmul.f32 %v2267, %v2269
        %v2271 = vadd.f32 %v2267, %v2270
        %vm2272 = vweird.f32 %v2161
        %vm2273 = vweird.f32 %v2267
        %vm2274 = vmor %vm2272, %vm2273
        %v2275 = vsel %vm2274, %v2267, %v2271
        %v2276 = vand.u32 2147483647, %v2161
        %vm2277 = vcmp.eq.f32.partialorder %v2276, 8.507059e+37
        %v2278 = vand.u32 %v2161, 2147483648
        %v2279 = vor.u32 1.1754944e-38, %v2278
        %v2280 = vsel %vm2277, %v2279, %v2275
        %v2281 = vmul.f32 1.0, %v2280
        %v2282 = vmul.f32 %v2122, %v2176
        %v2283 = vmul.f32 %v2123, %v2191
        %v2284 = vmul.f32 %v2124, %v2206
        %v2285 = vmul.f32 %v2125, %v2221
        %v2286 = vmul.f32 %v2126, %v2236
        %v2287 = vmul.f32 %v2127, %v2251
        %v2288 = vmul.f32 %v2128, %v2266
        %v2289 = vmul.f32 %v2129, %v2281
        %v2290 = vpack.c.bf16 %v2283, %v2282
        %v2291 = vpack.c.bf16 %v2285, %v2284
        %v2292 = vpack.c.bf16 %v2287, %v2286
        %v2293 = vpack.c.bf16 %v2289, %v2288
        %v2294 = vld [vmem:[%s7] sm:$0xf]
        %v2295 = vld [vmem:[%s7 + $0x4] sm:$0xf]
        %v2296 = vld [vmem:[%s7 + $0x8] sm:$0xf]
        %v2297 = vld [vmem:[%s7 + $0xc] sm:$0xf]
        %v2298 = vld [vmem:[%s7 + $0x10] sm:$0xf]
        %v2299 = vld [vmem:[%s7 + $0x14] sm:$0xf]
        %v2300 = vld [vmem:[%s7 + $0x18] sm:$0xf]
        %v2301 = vld [vmem:[%s7 + $0x1c] sm:$0xf]
        %v2302 = vld [vmem:[%s8] sm:$0x1]
        %v2304 = vperm.slane %v2302, 0
        %v2314 = vunpack.c.l.b16 %v2294
        %v2315 = vunpack.c.l.b16 %v2295
        %v2316 = vunpack.c.l.b16 %v2296
        %v2317 = vunpack.c.l.b16 %v2297
        %v2318 = vunpack.c.l.b16 %v2298
        %v2319 = vunpack.c.l.b16 %v2299
        %v2320 = vunpack.c.l.b16 %v2300
        %v2321 = vunpack.c.l.b16 %v2301
        %v2322 = vpack.c.b16 %v2315, %v2314
        %v2323 = vpack.c.b16 %v2317, %v2316
        %v2324 = vpack.c.b16 %v2319, %v2318
        %v2325 = vpack.c.b16 %v2321, %v2320
        %v2331 = vsel %vm576, %v2290, 0
        %v2334 = vsel %vm576, %v2291, 0
        %v2337 = vsel %vm576, %v2292, 0
        %v2340 = vsel %vm576, %v2293, 0
        %2342 = vmatpush.bf16.msra.mxu0 0
        %2343 = vmatpush.bf16.msra.mxu0 0
        %2344 = vmatpush.bf16.msra.mxu0 0
        %2345 = vmatpush.bf16.msra.mxu0 0
        %2346 = vmatpush.bf16.msra.mxu0 %v2325
        %2347 = vmatpush.bf16.msra.mxu0 %v2324
        %2348 = vmatpush.bf16.msra.mxu0 %v2323
        %2349 = vmatpush.bf16.msra.mxu0 %v2322
        %2350 = vmatmul.bf16.gmra.mxu0 %v2331
        %v2351 = vpop.f32.mrf.mxu0
        %v2352 = vadd.f32 %v2304, %v2351
        %v2353 = vpop.f32.mrf.mxu0
        %v2354 = vadd.f32 %v2304, %v2353
        %2355 = vmatmul.bf16.gmra.mxu0 %v2334
        %v2356 = vpop.f32.mrf.mxu0
        %v2357 = vadd.f32 %v2304, %v2356
        %v2358 = vpop.f32.mrf.mxu0
        %v2359 = vadd.f32 %v2304, %v2358
        %2360 = vmatmul.bf16.gmra.mxu0 %v2337
        %v2361 = vpop.f32.mrf.mxu0
        %v2362 = vadd.f32 %v2304, %v2361
        %v2363 = vpop.f32.mrf.mxu0
        %v2364 = vadd.f32 %v2304, %v2363
        %2365 = vmatmul.bf16.gmra.mxu0 %v2340
        %v2366 = vpop.f32.mrf.mxu0
        %v2367 = vadd.f32 %v2304, %v2366
        %v2368 = vpop.f32.mrf.mxu0
        %v2369 = vadd.f32 %v2304, %v2368
        %2370 = vdwg.mxu0
        %v2371 = vld [vmem:[#allocation2] sm:$0xff]
        %v2372 = vld [vmem:[#allocation2 + $0x10] sm:$0xff]
        %v2373 = vld [vmem:[#allocation2 + $0x20] sm:$0xff]
        %v2374 = vld [vmem:[#allocation2 + $0x30] sm:$0xff]
        %v2375 = vld [vmem:[#allocation2 + $0x40] sm:$0xff]
        %v2376 = vld [vmem:[#allocation2 + $0x50] sm:$0xff]
        %v2377 = vld [vmem:[#allocation2 + $0x60] sm:$0xff]
        %v2378 = vld [vmem:[#allocation2 + $0x70] sm:$0xff]
        %v2379 = vld [vmem:[#allocation2 + $0x1] sm:$0xff]
        %v2380 = vld [vmem:[#allocation2 + $0x11] sm:$0xff]
        %v2381 = vld [vmem:[#allocation2 + $0x21] sm:$0xff]
        %v2382 = vld [vmem:[#allocation2 + $0x31] sm:$0xff]
        %v2383 = vld [vmem:[#allocation2 + $0x41] sm:$0xff]
        %v2384 = vld [vmem:[#allocation2 + $0x51] sm:$0xff]
        %v2385 = vld [vmem:[#allocation2 + $0x61] sm:$0xff]
        %v2386 = vld [vmem:[#allocation2 + $0x71] sm:$0xff]
        %v2387 = vld [vmem:[#allocation2 + $0x2] sm:$0xff]
        %v2388 = vld [vmem:[#allocation2 + $0x12] sm:$0xff]
        %v2389 = vld [vmem:[#allocation2 + $0x22] sm:$0xff]
        %v2390 = vld [vmem:[#allocation2 + $0x32] sm:$0xff]
        %v2391 = vld [vmem:[#allocation2 + $0x42] sm:$0xff]
        %v2392 = vld [vmem:[#allocation2 + $0x52] sm:$0xff]
        %v2393 = vld [vmem:[#allocation2 + $0x62] sm:$0xff]
        %v2394 = vld [vmem:[#allocation2 + $0x72] sm:$0xff]
        %v2395 = vld [vmem:[%s637] sm:$0xff]
        %v2396 = vld [vmem:[%s637 + $0x10] sm:$0xff]
        %v2397 = vld [vmem:[%s637 + $0x20] sm:$0xff]
        %v2398 = vld [vmem:[%s637 + $0x30] sm:$0xff]
        %v2399 = vld [vmem:[%s637 + $0x40] sm:$0xff]
        %v2400 = vld [vmem:[%s637 + $0x50] sm:$0xff]
        %v2401 = vld [vmem:[%s637 + $0x60] sm:$0xff]
        %v2402 = vld [vmem:[%s637 + $0x70] sm:$0xff]
        %v2403 = vld [vmem:[%s637 + $0x1] sm:$0xff]
        %v2404 = vld [vmem:[%s637 + $0x11] sm:$0xff]
        %v2405 = vld [vmem:[%s637 + $0x21] sm:$0xff]
        %v2406 = vld [vmem:[%s637 + $0x31] sm:$0xff]
        %v2407 = vld [vmem:[%s637 + $0x41] sm:$0xff]
        %v2408 = vld [vmem:[%s637 + $0x51] sm:$0xff]
        %v2409 = vld [vmem:[%s637 + $0x61] sm:$0xff]
        %v2410 = vld [vmem:[%s637 + $0x71] sm:$0xff]
        %v2411 = vld [vmem:[%s637 + $0x2] sm:$0xff]
        %v2412 = vld [vmem:[%s637 + $0x12] sm:$0xff]
        %v2413 = vld [vmem:[%s637 + $0x22] sm:$0xff]
        %v2414 = vld [vmem:[%s637 + $0x32] sm:$0xff]
        %v2415 = vld [vmem:[%s637 + $0x42] sm:$0xff]
        %v2416 = vld [vmem:[%s637 + $0x52] sm:$0xff]
        %v2417 = vld [vmem:[%s637 + $0x62] sm:$0xff]
        %v2418 = vld [vmem:[%s637 + $0x72] sm:$0xff]
        %v2419 = vld [vmem:[%s694] sm:$0xff]
        %v2420 = vld [vmem:[%s694 + $0x10] sm:$0xff]
        %v2421 = vld [vmem:[%s694 + $0x20] sm:$0xff]
        %v2422 = vld [vmem:[%s694 + $0x30] sm:$0xff]
        %v2423 = vld [vmem:[%s694 + $0x40] sm:$0xff]
        %v2424 = vld [vmem:[%s694 + $0x50] sm:$0xff]
        %v2425 = vld [vmem:[%s694 + $0x60] sm:$0xff]
        %v2426 = vld [vmem:[%s694 + $0x70] sm:$0xff]
        %v2427 = vld [vmem:[%s694 + $0x1] sm:$0xff]
        %v2428 = vld [vmem:[%s694 + $0x11] sm:$0xff]
        %v2429 = vld [vmem:[%s694 + $0x21] sm:$0xff]
        %v2430 = vld [vmem:[%s694 + $0x31] sm:$0xff]
        %v2431 = vld [vmem:[%s694 + $0x41] sm:$0xff]
        %v2432 = vld [vmem:[%s694 + $0x51] sm:$0xff]
        %v2433 = vld [vmem:[%s694 + $0x61] sm:$0xff]
        %v2434 = vld [vmem:[%s694 + $0x71] sm:$0xff]
        %v2435 = vld [vmem:[%s694 + $0x2] sm:$0xff]
        %v2436 = vld [vmem:[%s694 + $0x12] sm:$0xff]
        %v2437 = vld [vmem:[%s694 + $0x22] sm:$0xff]
        %v2438 = vld [vmem:[%s694 + $0x32] sm:$0xff]
        %v2439 = vld [vmem:[%s694 + $0x42] sm:$0xff]
        %v2440 = vld [vmem:[%s694 + $0x52] sm:$0xff]
        %v2441 = vld [vmem:[%s694 + $0x62] sm:$0xff]
        %v2442 = vld [vmem:[%s694 + $0x72] sm:$0xff]
        %2451 = vrot.lane.b32.xlu0 %v2379, 32
        %v2452 = vpop.permute.xlu0 %2451
        %2453 = vrot.lane.b32.xlu0 %v2380, 32
        %v2454 = vpop.permute.xlu0 %2453
        %2455 = vrot.lane.b32.xlu0 %v2381, 32
        %v2456 = vpop.permute.xlu0 %2455
        %2457 = vrot.lane.b32.xlu0 %v2382, 32
        %v2458 = vpop.permute.xlu0 %2457
        %2459 = vrot.lane.b32.xlu0 %v2383, 32
        %v2460 = vpop.permute.xlu0 %2459
        %2461 = vrot.lane.b32.xlu0 %v2384, 32
        %v2462 = vpop.permute.xlu0 %2461
        %2463 = vrot.lane.b32.xlu0 %v2385, 32
        %v2464 = vpop.permute.xlu0 %2463
        %2465 = vrot.lane.b32.xlu0 %v2386, 32
        %v2466 = vpop.permute.xlu0 %2465
        %2483 = vrot.lane.b32.xlu0 %v2387, 64
        %v2484 = vpop.permute.xlu0 %2483
        %2485 = vrot.lane.b32.xlu0 %v2388, 64
        %v2486 = vpop.permute.xlu0 %2485
        %2487 = vrot.lane.b32.xlu0 %v2389, 64
        %v2488 = vpop.permute.xlu0 %2487
        %2489 = vrot.lane.b32.xlu0 %v2390, 64
        %v2490 = vpop.permute.xlu0 %2489
        %2491 = vrot.lane.b32.xlu0 %v2391, 64
        %v2492 = vpop.permute.xlu0 %2491
        %2493 = vrot.lane.b32.xlu0 %v2392, 64
        %v2494 = vpop.permute.xlu0 %2493
        %2495 = vrot.lane.b32.xlu0 %v2393, 64
        %v2496 = vpop.permute.xlu0 %2495
        %2497 = vrot.lane.b32.xlu0 %v2394, 64
        %v2498 = vpop.permute.xlu0 %2497
        %2515 = vrot.lane.b32.xlu0 %v2395, 96
        %v2516 = vpop.permute.xlu0 %2515
        %2517 = vrot.lane.b32.xlu0 %v2396, 96
        %v2518 = vpop.permute.xlu0 %2517
        %2519 = vrot.lane.b32.xlu0 %v2397, 96
        %v2520 = vpop.permute.xlu0 %2519
        %2521 = vrot.lane.b32.xlu0 %v2398, 96
        %v2522 = vpop.permute.xlu0 %2521
        %2523 = vrot.lane.b32.xlu0 %v2399, 96
        %v2524 = vpop.permute.xlu0 %2523
        %2525 = vrot.lane.b32.xlu0 %v2400, 96
        %v2526 = vpop.permute.xlu0 %2525
        %2527 = vrot.lane.b32.xlu0 %v2401, 96
        %v2528 = vpop.permute.xlu0 %2527
        %2529 = vrot.lane.b32.xlu0 %v2402, 96
        %v2530 = vpop.permute.xlu0 %2529
        %2547 = vrot.lane.b32.xlu0 %v2411, 32
        %v2548 = vpop.permute.xlu0 %2547
        %2549 = vrot.lane.b32.xlu0 %v2412, 32
        %v2550 = vpop.permute.xlu0 %2549
        %2551 = vrot.lane.b32.xlu0 %v2413, 32
        %v2552 = vpop.permute.xlu0 %2551
        %2553 = vrot.lane.b32.xlu0 %v2414, 32
        %v2554 = vpop.permute.xlu0 %2553
        %2555 = vrot.lane.b32.xlu0 %v2415, 32
        %v2556 = vpop.permute.xlu0 %2555
        %2557 = vrot.lane.b32.xlu0 %v2416, 32
        %v2558 = vpop.permute.xlu0 %2557
        %2559 = vrot.lane.b32.xlu0 %v2417, 32
        %v2560 = vpop.permute.xlu0 %2559
        %2561 = vrot.lane.b32.xlu0 %v2418, 32
        %v2562 = vpop.permute.xlu0 %2561
        %2579 = vrot.lane.b32.xlu0 %v2419, 64
        %v2580 = vpop.permute.xlu0 %2579
        %2581 = vrot.lane.b32.xlu0 %v2420, 64
        %v2582 = vpop.permute.xlu0 %2581
        %2583 = vrot.lane.b32.xlu0 %v2421, 64
        %v2584 = vpop.permute.xlu0 %2583
        %2585 = vrot.lane.b32.xlu0 %v2422, 64
        %v2586 = vpop.permute.xlu0 %2585
        %2587 = vrot.lane.b32.xlu0 %v2423, 64
        %v2588 = vpop.permute.xlu0 %2587
        %2589 = vrot.lane.b32.xlu0 %v2424, 64
        %v2590 = vpop.permute.xlu0 %2589
        %2591 = vrot.lane.b32.xlu0 %v2425, 64
        %v2592 = vpop.permute.xlu0 %2591
        %2593 = vrot.lane.b32.xlu0 %v2426, 64
        %v2594 = vpop.permute.xlu0 %2593
        %2611 = vrot.lane.b32.xlu0 %v2427, 96
        %v2612 = vpop.permute.xlu0 %2611
        %2613 = vrot.lane.b32.xlu0 %v2428, 96
        %v2614 = vpop.permute.xlu0 %2613
        %2615 = vrot.lane.b32.xlu0 %v2429, 96
        %v2616 = vpop.permute.xlu0 %2615
        %2617 = vrot.lane.b32.xlu0 %v2430, 96
        %v2618 = vpop.permute.xlu0 %2617
        %2619 = vrot.lane.b32.xlu0 %v2431, 96
        %v2620 = vpop.permute.xlu0 %2619
        %2621 = vrot.lane.b32.xlu0 %v2432, 96
        %v2622 = vpop.permute.xlu0 %2621
        %2623 = vrot.lane.b32.xlu0 %v2433, 96
        %v2624 = vpop.permute.xlu0 %2623
        %2625 = vrot.lane.b32.xlu0 %v2434, 96
        %v2626 = vpop.permute.xlu0 %2625
        %v2635 = vsel %vm548, %v2371, %v2452
        %v2636 = vsel %vm548, %v2372, %v2454
        %v2637 = vsel %vm548, %v2373, %v2456
        %v2638 = vsel %vm548, %v2374, %v2458
        %v2639 = vsel %vm548, %v2375, %v2460
        %v2640 = vsel %vm548, %v2376, %v2462
        %v2641 = vsel %vm548, %v2377, %v2464
        %v2642 = vsel %vm548, %v2378, %v2466
        %v2643 = vsel %vm576, %v2635, %v2484
        %v2644 = vsel %vm576, %v2636, %v2486
        %v2645 = vsel %vm576, %v2637, %v2488
        %v2646 = vsel %vm576, %v2638, %v2490
        %v2647 = vsel %vm576, %v2639, %v2492
        %v2648 = vsel %vm576, %v2640, %v2494
        %v2649 = vsel %vm576, %v2641, %v2496
        %v2650 = vsel %vm576, %v2642, %v2498
        %v2651 = vsel %vm927, %v2643, %v2516
        %v2652 = vsel %vm927, %v2644, %v2518
        %v2653 = vsel %vm927, %v2645, %v2520
        %v2654 = vsel %vm927, %v2646, %v2522
        %v2655 = vsel %vm927, %v2647, %v2524
        %v2656 = vsel %vm927, %v2648, %v2526
        %v2657 = vsel %vm927, %v2649, %v2528
        %v2658 = vsel %vm927, %v2650, %v2530
        %v2659 = vsel %vm548, %v2403, %v2548
        %v2660 = vsel %vm548, %v2404, %v2550
        %v2661 = vsel %vm548, %v2405, %v2552
        %v2662 = vsel %vm548, %v2406, %v2554
        %v2663 = vsel %vm548, %v2407, %v2556
        %v2664 = vsel %vm548, %v2408, %v2558
        %v2665 = vsel %vm548, %v2409, %v2560
        %v2666 = vsel %vm548, %v2410, %v2562
        %v2667 = vsel %vm576, %v2659, %v2580
        %v2668 = vsel %vm576, %v2660, %v2582
        %v2669 = vsel %vm576, %v2661, %v2584
        %v2670 = vsel %vm576, %v2662, %v2586
        %v2671 = vsel %vm576, %v2663, %v2588
        %v2672 = vsel %vm576, %v2664, %v2590
        %v2673 = vsel %vm576, %v2665, %v2592
        %v2674 = vsel %vm576, %v2666, %v2594
        %v2675 = vsel %vm927, %v2667, %v2612
        %v2676 = vsel %vm927, %v2668, %v2614
        %v2677 = vsel %vm927, %v2669, %v2616
        %v2678 = vsel %vm927, %v2670, %v2618
        %v2679 = vsel %vm927, %v2671, %v2620
        %v2680 = vsel %vm927, %v2672, %v2622
        %v2681 = vsel %vm927, %v2673, %v2624
        %v2682 = vsel %vm927, %v2674, %v2626
        %v2683 = vpack.c.bf16 %v2652, %v2651
        %v2684 = vpack.c.bf16 %v2676, %v2675
        %v2685 = vpack.c.bf16 %v2436, %v2435
        %v2686 = vpack.c.bf16 %v2654, %v2653
        %v2687 = vpack.c.bf16 %v2678, %v2677
        %v2688 = vpack.c.bf16 %v2438, %v2437
        %v2689 = vpack.c.bf16 %v2656, %v2655
        %v2690 = vpack.c.bf16 %v2680, %v2679
        %v2691 = vpack.c.bf16 %v2440, %v2439
        %v2692 = vpack.c.bf16 %v2658, %v2657
        %v2693 = vpack.c.bf16 %v2682, %v2681
        %v2694 = vpack.c.bf16 %v2442, %v2441
        %v2695 = vld [vmem:[%s9] sm:$0xf]
        %v2696 = vld [vmem:[%s9 + $0x4] sm:$0xf]
        %v2697 = vld [vmem:[%s9 + $0x8] sm:$0xf]
        %v2698 = vld [vmem:[%s9 + $0xc] sm:$0xf]
        %v2699 = vld [vmem:[%s9 + $0x10] sm:$0xf]
        %v2700 = vld [vmem:[%s9 + $0x14] sm:$0xf]
        %v2701 = vld [vmem:[%s9 + $0x18] sm:$0xf]
        %v2702 = vld [vmem:[%s9 + $0x1c] sm:$0xf]
        %v2703 = vld [vmem:[%s9 + $0x20] sm:$0xf]
        %v2704 = vld [vmem:[%s9 + $0x24] sm:$0xf]
        %v2705 = vld [vmem:[%s9 + $0x28] sm:$0xf]
        %v2706 = vld [vmem:[%s9 + $0x2c] sm:$0xf]
        %v2707 = vld [vmem:[%s9 + $0x30] sm:$0xf]
        %v2708 = vld [vmem:[%s9 + $0x34] sm:$0xf]
        %v2709 = vld [vmem:[%s9 + $0x38] sm:$0xf]
        %v2710 = vld [vmem:[%s9 + $0x3c] sm:$0xf]
        %v2711 = vld [vmem:[%s9 + $0x40] sm:$0xf]
        %v2712 = vld [vmem:[%s9 + $0x44] sm:$0xf]
        %v2713 = vld [vmem:[%s9 + $0x48] sm:$0xf]
        %v2714 = vld [vmem:[%s9 + $0x4c] sm:$0xf]
        %v2715 = vld [vmem:[%s9 + $0x50] sm:$0xf]
        %v2716 = vld [vmem:[%s9 + $0x54] sm:$0xf]
        %v2717 = vld [vmem:[%s9 + $0x58] sm:$0xf]
        %v2718 = vld [vmem:[%s9 + $0x5c] sm:$0xf]
        %v2719 = vld [vmem:[%s9 + $0x60] sm:$0xf]
        %v2720 = vld [vmem:[%s9 + $0x64] sm:$0xf]
        %v2721 = vld [vmem:[%s9 + $0x68] sm:$0xf]
        %v2722 = vld [vmem:[%s9 + $0x6c] sm:$0xf]
        %v2723 = vld [vmem:[%s9 + $0x70] sm:$0xf]
        %v2724 = vld [vmem:[%s9 + $0x74] sm:$0xf]
        %v2725 = vld [vmem:[%s9 + $0x78] sm:$0xf]
        %v2726 = vld [vmem:[%s9 + $0x7c] sm:$0xf]
        %v2727 = vld [vmem:[%s9 + $0x80] sm:$0xf]
        %v2728 = vld [vmem:[%s9 + $0x84] sm:$0xf]
        %v2729 = vld [vmem:[%s9 + $0x88] sm:$0xf]
        %v2730 = vld [vmem:[%s9 + $0x8c] sm:$0xf]
        %v2767 = vunpack.c.l.b16 %v2695
        %v2768 = vunpack.c.l.b16 %v2696
        %v2769 = vunpack.c.l.b16 %v2697
        %v2770 = vunpack.c.l.b16 %v2698
        %v2771 = vunpack.c.l.b16 %v2699
        %v2772 = vunpack.c.l.b16 %v2700
        %v2773 = vunpack.c.l.b16 %v2701
        %v2774 = vunpack.c.l.b16 %v2702
        %v2775 = vunpack.c.l.b16 %v2703
        %v2776 = vunpack.c.l.b16 %v2704
        %v2777 = vunpack.c.l.b16 %v2705
        %v2778 = vunpack.c.l.b16 %v2706
        %v2779 = vunpack.c.l.b16 %v2707
        %v2780 = vunpack.c.l.b16 %v2708
        %v2781 = vunpack.c.l.b16 %v2709
        %v2782 = vunpack.c.l.b16 %v2710
        %v2783 = vunpack.c.l.b16 %v2711
        %v2784 = vunpack.c.l.b16 %v2712
        %v2785 = vunpack.c.l.b16 %v2713
        %v2786 = vunpack.c.l.b16 %v2714
        %v2787 = vunpack.c.l.b16 %v2715
        %v2788 = vunpack.c.l.b16 %v2716
        %v2789 = vunpack.c.l.b16 %v2717
        %v2790 = vunpack.c.l.b16 %v2718
        %v2791 = vunpack.c.l.b16 %v2719
        %v2792 = vunpack.c.l.b16 %v2720
        %v2793 = vunpack.c.l.b16 %v2721
        %v2794 = vunpack.c.l.b16 %v2722
        %v2795 = vunpack.c.l.b16 %v2723
        %v2796 = vunpack.c.l.b16 %v2724
        %v2797 = vunpack.c.l.b16 %v2725
        %v2798 = vunpack.c.l.b16 %v2726
        %v2799 = vunpack.c.l.b16 %v2727
        %v2800 = vunpack.c.l.b16 %v2728
        %v2801 = vunpack.c.l.b16 %v2729
        %v2802 = vunpack.c.l.b16 %v2730
        %v2803 = vpack.c.b16 %v2768, %v2767
        %v2804 = vpack.c.b16 %v2770, %v2769
        %v2805 = vpack.c.b16 %v2772, %v2771
        %v2806 = vpack.c.b16 %v2774, %v2773
        %v2807 = vpack.c.b16 %v2776, %v2775
        %v2808 = vpack.c.b16 %v2778, %v2777
        %v2809 = vpack.c.b16 %v2780, %v2779
        %v2810 = vpack.c.b16 %v2782, %v2781
        %v2811 = vpack.c.b16 %v2784, %v2783
        %v2812 = vpack.c.b16 %v2786, %v2785
        %v2813 = vpack.c.b16 %v2788, %v2787
        %v2814 = vpack.c.b16 %v2790, %v2789
        %v2815 = vpack.c.b16 %v2792, %v2791
        %v2816 = vpack.c.b16 %v2794, %v2793
        %v2817 = vpack.c.b16 %v2796, %v2795
        %v2818 = vpack.c.b16 %v2798, %v2797
        %v2819 = vpack.c.b16 %v2800, %v2799
        %v2820 = vpack.c.b16 %v2802, %v2801
        %v2840 = vsel %vm548, %v2685, 0
        %v2843 = vsel %vm548, %v2688, 0
        %v2846 = vsel %vm548, %v2691, 0
        %v2849 = vsel %vm548, %v2694, 0
        %2851 = vmatpush.bf16.msra.mxu0 %v2810
        %2852 = vmatpush.bf16.msra.mxu0 %v2809
        %2853 = vmatpush.bf16.msra.mxu0 %v2808
        %2854 = vmatpush.bf16.msra.mxu0 %v2807
        %2855 = vmatpush.bf16.msra.mxu0 %v2806
        %2856 = vmatpush.bf16.msra.mxu0 %v2805
        %2857 = vmatpush.bf16.msra.mxu0 %v2804
        %2858 = vmatpush.bf16.msra.mxu0 %v2803
        %2859 = vmatmul.bf16.gmra.mxu0 %v2683
        %v2860 = vpop.f32.mrf.mxu0
        %v2861 = vadd.f32 0.0, %v2860
        %v2862 = vpop.f32.mrf.mxu0
        %v2863 = vadd.f32 0.0, %v2862
        %2864 = vmatmul.bf16.gmra.mxu0 %v2686
        %v2865 = vpop.f32.mrf.mxu0
        %v2866 = vadd.f32 0.0, %v2865
        %v2867 = vpop.f32.mrf.mxu0
        %v2868 = vadd.f32 0.0, %v2867
        %2869 = vmatmul.bf16.gmra.mxu0 %v2689
        %v2870 = vpop.f32.mrf.mxu0
        %v2871 = vadd.f32 0.0, %v2870
        %v2872 = vpop.f32.mrf.mxu0
        %v2873 = vadd.f32 0.0, %v2872
        %2874 = vmatmul.bf16.gmra.mxu0 %v2692
        %v2875 = vpop.f32.mrf.mxu0
        %v2876 = vadd.f32 0.0, %v2875
        %v2877 = vpop.f32.mrf.mxu0
        %v2878 = vadd.f32 0.0, %v2877
        %2879 = vdwg.mxu0
        %2880 = vmatpush.bf16.msra.mxu0 %v2818
        %2881 = vmatpush.bf16.msra.mxu0 %v2817
        %2882 = vmatpush.bf16.msra.mxu0 %v2816
        %2883 = vmatpush.bf16.msra.mxu0 %v2815
        %2884 = vmatpush.bf16.msra.mxu0 %v2814
        %2885 = vmatpush.bf16.msra.mxu0 %v2813
        %2886 = vmatpush.bf16.msra.mxu0 %v2812
        %2887 = vmatpush.bf16.msra.mxu0 %v2811
        %2888 = vmatmul.bf16.gmra.mxu0 %v2684
        %v2889 = vpop.f32.mrf.mxu0
        %v2890 = vadd.f32 %v2861, %v2889
        %v2891 = vpop.f32.mrf.mxu0
        %v2892 = vadd.f32 %v2863, %v2891
        %2893 = vmatmul.bf16.gmra.mxu0 %v2687
        %v2894 = vpop.f32.mrf.mxu0
        %v2895 = vadd.f32 %v2866, %v2894
        %v2896 = vpop.f32.mrf.mxu0
        %v2897 = vadd.f32 %v2868, %v2896
        %2898 = vmatmul.bf16.gmra.mxu0 %v2690
        %v2899 = vpop.f32.mrf.mxu0
        %v2900 = vadd.f32 %v2871, %v2899
        %v2901 = vpop.f32.mrf.mxu0
        %v2902 = vadd.f32 %v2873, %v2901
        %2903 = vmatmul.bf16.gmra.mxu0 %v2693
        %v2904 = vpop.f32.mrf.mxu0
        %v2905 = vadd.f32 %v2876, %v2904
        %v2906 = vpop.f32.mrf.mxu0
        %v2907 = vadd.f32 %v2878, %v2906
        %2908 = vdwg.mxu0
        %2909 = vmatpush.bf16.msra.mxu0 0
        %2910 = vmatpush.bf16.msra.mxu0 0
        %2911 = vmatpush.bf16.msra.mxu0 0
        %2912 = vmatpush.bf16.msra.mxu0 0
        %2913 = vmatpush.bf16.msra.mxu0 0
        %2914 = vmatpush.bf16.msra.mxu0 0
        %2915 = vmatpush.bf16.msra.mxu0 %v2820
        %2916 = vmatpush.bf16.msra.mxu0 %v2819
        %2917 = vmatmul.bf16.gmra.mxu0 %v2840
        %v2918 = vpop.f32.mrf.mxu0
        %v2919 = vadd.f32 %v2890, %v2918
        %v2920 = vpop.f32.mrf.mxu0
        %v2921 = vadd.f32 %v2892, %v2920
        %2922 = vmatmul.bf16.gmra.mxu0 %v2843
        %v2923 = vpop.f32.mrf.mxu0
        %v2924 = vadd.f32 %v2895, %v2923
        %v2925 = vpop.f32.mrf.mxu0
        %v2926 = vadd.f32 %v2897, %v2925
        %2927 = vmatmul.bf16.gmra.mxu0 %v2846
        %v2928 = vpop.f32.mrf.mxu0
        %v2929 = vadd.f32 %v2900, %v2928
        %v2930 = vpop.f32.mrf.mxu0
        %v2931 = vadd.f32 %v2902, %v2930
        %2932 = vmatmul.bf16.gmra.mxu0 %v2849
        %v2933 = vpop.f32.mrf.mxu0
        %v2934 = vadd.f32 %v2905, %v2933
        %v2935 = vpop.f32.mrf.mxu0
        %v2936 = vadd.f32 %v2907, %v2935
        %2937 = vdwg.mxu0
        %v2938 = vld [vmem:[%s10] sm:$0x1]
        %v2940 = vperm.slane %v2938, 0
        %v2942 = vmul.f32 %v2919, %v2940
        %v2943 = vmul.f32 %v2921, %v2940
        %v2944 = vmul.f32 %v2924, %v2940
        %v2945 = vmul.f32 %v2926, %v2940
        %v2946 = vmul.f32 %v2929, %v2940
        %v2947 = vmul.f32 %v2931, %v2940
        %v2948 = vmul.f32 %v2934, %v2940
        %v2949 = vmul.f32 %v2936, %v2940
        %v2950 = vld [vmem:[%s11] sm:$0x1]
        %v2952 = vperm.slane %v2950, 0
        %v2954 = vadd.f32 %v2942, %v2952
        %v2955 = vadd.f32 %v2943, %v2952
        %v2956 = vadd.f32 %v2944, %v2952
        %v2957 = vadd.f32 %v2945, %v2952
        %v2958 = vadd.f32 %v2946, %v2952
        %v2959 = vadd.f32 %v2947, %v2952
        %v2960 = vadd.f32 %v2948, %v2952
        %v2961 = vadd.f32 %v2949, %v2952
        %v2962 = vxor.u32 %v2954, 2147483648
        %v2963 = vxor.u32 %v2955, 2147483648
        %v2964 = vxor.u32 %v2956, 2147483648
        %v2965 = vxor.u32 %v2957, 2147483648
        %v2966 = vxor.u32 %v2958, 2147483648
        %v2967 = vxor.u32 %v2959, 2147483648
        %v2968 = vxor.u32 %v2960, 2147483648
        %v2969 = vxor.u32 %v2961, 2147483648
        %v2970 = vmul.f32 %v2962, 1.442695
        %v2971 = vpow.pop %v2970
        %v2972 = vmul.f32 %v2963, 1.442695
        %v2973 = vpow.pop %v2972
        %v2974 = vmul.f32 %v2964, 1.442695
        %v2975 = vpow.pop %v2974
        %v2976 = vmul.f32 %v2965, 1.442695
        %v2977 = vpow.pop %v2976
        %v2978 = vmul.f32 %v2966, 1.442695
        %v2979 = vpow.pop %v2978
        %v2980 = vmul.f32 %v2967, 1.442695
        %v2981 = vpow.pop %v2980
        %v2982 = vmul.f32 %v2968, 1.442695
        %v2983 = vpow.pop %v2982
        %v2984 = vmul.f32 %v2969, 1.442695
        %v2985 = vpow.pop %v2984
        %v2986 = vadd.f32 %v2971, 1.0
        %v2987 = vadd.f32 %v2973, 1.0
        %v2988 = vadd.f32 %v2975, 1.0
        %v2989 = vadd.f32 %v2977, 1.0
        %v2990 = vadd.f32 %v2979, 1.0
        %v2991 = vadd.f32 %v2981, 1.0
        %v2992 = vadd.f32 %v2983, 1.0
        %v2993 = vadd.f32 %v2985, 1.0
        %v2994 = vrcp.pop %v2986
        %v2995 = vmul.f32 %v2986, %v2994
        %v2996 = vsub.f32 1.0, %v2995
        %v2997 = vmul.f32 %v2994, %v2996
        %v2998 = vadd.f32 %v2994, %v2997
        %vm2999 = vweird.f32 %v2986
        %vm3000 = vweird.f32 %v2994
        %vm3001 = vmor %vm2999, %vm3000
        %v3002 = vsel %vm3001, %v2994, %v2998
        %v3003 = vand.u32 2147483647, %v2986
        %vm3004 = vcmp.eq.f32.partialorder %v3003, 8.507059e+37
        %v3005 = vand.u32 %v2986, 2147483648
        %v3006 = vor.u32 1.1754944e-38, %v3005
        %v3007 = vsel %vm3004, %v3006, %v3002
        %v3008 = vmul.f32 1.0, %v3007
        %v3009 = vrcp.pop %v2987
        %v3010 = vmul.f32 %v2987, %v3009
        %v3011 = vsub.f32 1.0, %v3010
        %v3012 = vmul.f32 %v3009, %v3011
        %v3013 = vadd.f32 %v3009, %v3012
        %vm3014 = vweird.f32 %v2987
        %vm3015 = vweird.f32 %v3009
        %vm3016 = vmor %vm3014, %vm3015
        %v3017 = vsel %vm3016, %v3009, %v3013
        %v3018 = vand.u32 2147483647, %v2987
        %vm3019 = vcmp.eq.f32.partialorder %v3018, 8.507059e+37
        %v3020 = vand.u32 %v2987, 2147483648
        %v3021 = vor.u32 1.1754944e-38, %v3020
        %v3022 = vsel %vm3019, %v3021, %v3017
        %v3023 = vmul.f32 1.0, %v3022
        %v3024 = vrcp.pop %v2988
        %v3025 = vmul.f32 %v2988, %v3024
        %v3026 = vsub.f32 1.0, %v3025
        %v3027 = vmul.f32 %v3024, %v3026
        %v3028 = vadd.f32 %v3024, %v3027
        %vm3029 = vweird.f32 %v2988
        %vm3030 = vweird.f32 %v3024
        %vm3031 = vmor %vm3029, %vm3030
        %v3032 = vsel %vm3031, %v3024, %v3028
        %v3033 = vand.u32 2147483647, %v2988
        %vm3034 = vcmp.eq.f32.partialorder %v3033, 8.507059e+37
        %v3035 = vand.u32 %v2988, 2147483648
        %v3036 = vor.u32 1.1754944e-38, %v3035
        %v3037 = vsel %vm3034, %v3036, %v3032
        %v3038 = vmul.f32 1.0, %v3037
        %v3039 = vrcp.pop %v2989
        %v3040 = vmul.f32 %v2989, %v3039
        %v3041 = vsub.f32 1.0, %v3040
        %v3042 = vmul.f32 %v3039, %v3041
        %v3043 = vadd.f32 %v3039, %v3042
        %vm3044 = vweird.f32 %v2989
        %vm3045 = vweird.f32 %v3039
        %vm3046 = vmor %vm3044, %vm3045
        %v3047 = vsel %vm3046, %v3039, %v3043
        %v3048 = vand.u32 2147483647, %v2989
        %vm3049 = vcmp.eq.f32.partialorder %v3048, 8.507059e+37
        %v3050 = vand.u32 %v2989, 2147483648
        %v3051 = vor.u32 1.1754944e-38, %v3050
        %v3052 = vsel %vm3049, %v3051, %v3047
        %v3053 = vmul.f32 1.0, %v3052
        %v3054 = vrcp.pop %v2990
        %v3055 = vmul.f32 %v2990, %v3054
        %v3056 = vsub.f32 1.0, %v3055
        %v3057 = vmul.f32 %v3054, %v3056
        %v3058 = vadd.f32 %v3054, %v3057
        %vm3059 = vweird.f32 %v2990
        %vm3060 = vweird.f32 %v3054
        %vm3061 = vmor %vm3059, %vm3060
        %v3062 = vsel %vm3061, %v3054, %v3058
        %v3063 = vand.u32 2147483647, %v2990
        %vm3064 = vcmp.eq.f32.partialorder %v3063, 8.507059e+37
        %v3065 = vand.u32 %v2990, 2147483648
        %v3066 = vor.u32 1.1754944e-38, %v3065
        %v3067 = vsel %vm3064, %v3066, %v3062
        %v3068 = vmul.f32 1.0, %v3067
        %v3069 = vrcp.pop %v2991
        %v3070 = vmul.f32 %v2991, %v3069
        %v3071 = vsub.f32 1.0, %v3070
        %v3072 = vmul.f32 %v3069, %v3071
        %v3073 = vadd.f32 %v3069, %v3072
        %vm3074 = vweird.f32 %v2991
        %vm3075 = vweird.f32 %v3069
        %vm3076 = vmor %vm3074, %vm3075
        %v3077 = vsel %vm3076, %v3069, %v3073
        %v3078 = vand.u32 2147483647, %v2991
        %vm3079 = vcmp.eq.f32.partialorder %v3078, 8.507059e+37
        %v3080 = vand.u32 %v2991, 2147483648
        %v3081 = vor.u32 1.1754944e-38, %v3080
        %v3082 = vsel %vm3079, %v3081, %v3077
        %v3083 = vmul.f32 1.0, %v3082
        %v3084 = vrcp.pop %v2992
        %v3085 = vmul.f32 %v2992, %v3084
        %v3086 = vsub.f32 1.0, %v3085
        %v3087 = vmul.f32 %v3084, %v3086
        %v3088 = vadd.f32 %v3084, %v3087
        %vm3089 = vweird.f32 %v2992
        %vm3090 = vweird.f32 %v3084
        %vm3091 = vmor %vm3089, %vm3090
        %v3092 = vsel %vm3091, %v3084, %v3088
        %v3093 = vand.u32 2147483647, %v2992
        %vm3094 = vcmp.eq.f32.partialorder %v3093, 8.507059e+37
        %v3095 = vand.u32 %v2992, 2147483648
        %v3096 = vor.u32 1.1754944e-38, %v3095
        %v3097 = vsel %vm3094, %v3096, %v3092
        %v3098 = vmul.f32 1.0, %v3097
        %v3099 = vrcp.pop %v2993
        %v3100 = vmul.f32 %v2993, %v3099
        %v3101 = vsub.f32 1.0, %v3100
        %v3102 = vmul.f32 %v3099, %v3101
        %v3103 = vadd.f32 %v3099, %v3102
        %vm3104 = vweird.f32 %v2993
        %vm3105 = vweird.f32 %v3099
        %vm3106 = vmor %vm3104, %vm3105
        %v3107 = vsel %vm3106, %v3099, %v3103
        %v3108 = vand.u32 2147483647, %v2993
        %vm3109 = vcmp.eq.f32.partialorder %v3108, 8.507059e+37
        %v3110 = vand.u32 %v2993, 2147483648
        %v3111 = vor.u32 1.1754944e-38, %v3110
        %v3112 = vsel %vm3109, %v3111, %v3107
        %v3113 = vmul.f32 1.0, %v3112
        %v3114 = vmul.f32 %v2954, %v3008
        %v3115 = vmul.f32 %v2955, %v3023
        %v3116 = vmul.f32 %v2956, %v3038
        %v3117 = vmul.f32 %v2957, %v3053
        %v3118 = vmul.f32 %v2958, %v3068
        %v3119 = vmul.f32 %v2959, %v3083
        %v3120 = vmul.f32 %v2960, %v3098
        %v3121 = vmul.f32 %v2961, %v3113
        %s3122 = scalar_lea.vmem [#allocation4], 16
        %3123 = vst.msk [vmem:[%s3122 + $0x1] sm:$0xff] %vm548, %v3114
        %3124 = vst.msk [vmem:[%s3122 + $0x11] sm:$0xff] %vm548, %v3115
        %3125 = vst.msk [vmem:[%s3122 + $0x21] sm:$0xff] %vm548, %v3116
        %3126 = vst.msk [vmem:[%s3122 + $0x31] sm:$0xff] %vm548, %v3117
        %3127 = vst.msk [vmem:[%s3122 + $0x41] sm:$0xff] %vm548, %v3118
        %3128 = vst.msk [vmem:[%s3122 + $0x51] sm:$0xff] %vm548, %v3119
        %3129 = vst.msk [vmem:[%s3122 + $0x61] sm:$0xff] %vm548, %v3120
        %3130 = vst.msk [vmem:[%s3122 + $0x71] sm:$0xff] %vm548, %v3121
        %v3131 = vld [vmem:[#allocation4] sm:$0xff]
        %v3132 = vld [vmem:[#allocation4 + $0x10] sm:$0xff]
        %v3133 = vld [vmem:[#allocation4 + $0x20] sm:$0xff]
        %v3134 = vld [vmem:[#allocation4 + $0x30] sm:$0xff]
        %v3135 = vld [vmem:[#allocation4 + $0x40] sm:$0xff]
        %v3136 = vld [vmem:[#allocation4 + $0x50] sm:$0xff]
        %v3137 = vld [vmem:[#allocation4 + $0x60] sm:$0xff]
        %v3138 = vld [vmem:[#allocation4 + $0x70] sm:$0xff]
        %v3139 = vld [vmem:[#allocation4 + $0x1] sm:$0xff]
        %v3140 = vld [vmem:[#allocation4 + $0x11] sm:$0xff]
        %v3141 = vld [vmem:[#allocation4 + $0x21] sm:$0xff]
        %v3142 = vld [vmem:[#allocation4 + $0x31] sm:$0xff]
        %v3143 = vld [vmem:[#allocation4 + $0x41] sm:$0xff]
        %v3144 = vld [vmem:[#allocation4 + $0x51] sm:$0xff]
        %v3145 = vld [vmem:[#allocation4 + $0x61] sm:$0xff]
        %v3146 = vld [vmem:[#allocation4 + $0x71] sm:$0xff]
        %v3147 = vld [vmem:[#allocation4 + $0x2] sm:$0xff]
        %v3148 = vld [vmem:[#allocation4 + $0x12] sm:$0xff]
        %v3149 = vld [vmem:[#allocation4 + $0x22] sm:$0xff]
        %v3150 = vld [vmem:[#allocation4 + $0x32] sm:$0xff]
        %v3151 = vld [vmem:[#allocation4 + $0x42] sm:$0xff]
        %v3152 = vld [vmem:[#allocation4 + $0x52] sm:$0xff]
        %v3153 = vld [vmem:[#allocation4 + $0x62] sm:$0xff]
        %v3154 = vld [vmem:[#allocation4 + $0x72] sm:$0xff]
        %v3155 = vld [vmem:[%s3122] sm:$0xff]
        %v3156 = vld [vmem:[%s3122 + $0x10] sm:$0xff]
        %v3157 = vld [vmem:[%s3122 + $0x20] sm:$0xff]
        %v3158 = vld [vmem:[%s3122 + $0x30] sm:$0xff]
        %v3159 = vld [vmem:[%s3122 + $0x40] sm:$0xff]
        %v3160 = vld [vmem:[%s3122 + $0x50] sm:$0xff]
        %v3161 = vld [vmem:[%s3122 + $0x60] sm:$0xff]
        %v3162 = vld [vmem:[%s3122 + $0x70] sm:$0xff]
        %v3163 = vld [vmem:[%s3122 + $0x1] sm:$0xff]
        %v3164 = vld [vmem:[%s3122 + $0x11] sm:$0xff]
        %v3165 = vld [vmem:[%s3122 + $0x21] sm:$0xff]
        %v3166 = vld [vmem:[%s3122 + $0x31] sm:$0xff]
        %v3167 = vld [vmem:[%s3122 + $0x41] sm:$0xff]
        %v3168 = vld [vmem:[%s3122 + $0x51] sm:$0xff]
        %v3169 = vld [vmem:[%s3122 + $0x61] sm:$0xff]
        %v3170 = vld [vmem:[%s3122 + $0x71] sm:$0xff]
        %v3171 = vld [vmem:[%s3122 + $0x2] sm:$0xff]
        %v3172 = vld [vmem:[%s3122 + $0x12] sm:$0xff]
        %v3173 = vld [vmem:[%s3122 + $0x22] sm:$0xff]
        %v3174 = vld [vmem:[%s3122 + $0x32] sm:$0xff]
        %v3175 = vld [vmem:[%s3122 + $0x42] sm:$0xff]
        %v3176 = vld [vmem:[%s3122 + $0x52] sm:$0xff]
        %v3177 = vld [vmem:[%s3122 + $0x62] sm:$0xff]
        %v3178 = vld [vmem:[%s3122 + $0x72] sm:$0xff]
        %s3179 = scalar_lea.vmem [#allocation4], 32
        %v3180 = vld [vmem:[%s3179] sm:$0xff]
        %v3181 = vld [vmem:[%s3179 + $0x10] sm:$0xff]
        %v3182 = vld [vmem:[%s3179 + $0x20] sm:$0xff]
        %v3183 = vld [vmem:[%s3179 + $0x30] sm:$0xff]
        %v3184 = vld [vmem:[%s3179 + $0x40] sm:$0xff]
        %v3185 = vld [vmem:[%s3179 + $0x50] sm:$0xff]
        %v3186 = vld [vmem:[%s3179 + $0x60] sm:$0xff]
        %v3187 = vld [vmem:[%s3179 + $0x70] sm:$0xff]
        %v3188 = vld [vmem:[%s3179 + $0x1] sm:$0xff]
        %v3189 = vld [vmem:[%s3179 + $0x11] sm:$0xff]
        %v3190 = vld [vmem:[%s3179 + $0x21] sm:$0xff]
        %v3191 = vld [vmem:[%s3179 + $0x31] sm:$0xff]
        %v3192 = vld [vmem:[%s3179 + $0x41] sm:$0xff]
        %v3193 = vld [vmem:[%s3179 + $0x51] sm:$0xff]
        %v3194 = vld [vmem:[%s3179 + $0x61] sm:$0xff]
        %v3195 = vld [vmem:[%s3179 + $0x71] sm:$0xff]
        %v3196 = vld [vmem:[%s3179 + $0x2] sm:$0xff]
        %v3197 = vld [vmem:[%s3179 + $0x12] sm:$0xff]
        %v3198 = vld [vmem:[%s3179 + $0x22] sm:$0xff]
        %v3199 = vld [vmem:[%s3179 + $0x32] sm:$0xff]
        %v3200 = vld [vmem:[%s3179 + $0x42] sm:$0xff]
        %v3201 = vld [vmem:[%s3179 + $0x52] sm:$0xff]
        %v3202 = vld [vmem:[%s3179 + $0x62] sm:$0xff]
        %v3203 = vld [vmem:[%s3179 + $0x72] sm:$0xff]
        %3212 = vrot.lane.b32.xlu0 %v3139, 32
        %v3213 = vpop.permute.xlu0 %3212
        %3214 = vrot.lane.b32.xlu0 %v3140, 32
        %v3215 = vpop.permute.xlu0 %3214
        %3216 = vrot.lane.b32.xlu0 %v3141, 32
        %v3217 = vpop.permute.xlu0 %3216
        %3218 = vrot.lane.b32.xlu0 %v3142, 32
        %v3219 = vpop.permute.xlu0 %3218
        %3220 = vrot.lane.b32.xlu0 %v3143, 32
        %v3221 = vpop.permute.xlu0 %3220
        %3222 = vrot.lane.b32.xlu0 %v3144, 32
        %v3223 = vpop.permute.xlu0 %3222
        %3224 = vrot.lane.b32.xlu0 %v3145, 32
        %v3225 = vpop.permute.xlu0 %3224
        %3226 = vrot.lane.b32.xlu0 %v3146, 32
        %v3227 = vpop.permute.xlu0 %3226
        %3244 = vrot.lane.b32.xlu0 %v3147, 64
        %v3245 = vpop.permute.xlu0 %3244
        %3246 = vrot.lane.b32.xlu0 %v3148, 64
        %v3247 = vpop.permute.xlu0 %3246
        %3248 = vrot.lane.b32.xlu0 %v3149, 64
        %v3249 = vpop.permute.xlu0 %3248
        %3250 = vrot.lane.b32.xlu0 %v3150, 64
        %v3251 = vpop.permute.xlu0 %3250
        %3252 = vrot.lane.b32.xlu0 %v3151, 64
        %v3253 = vpop.permute.xlu0 %3252
        %3254 = vrot.lane.b32.xlu0 %v3152, 64
        %v3255 = vpop.permute.xlu0 %3254
        %3256 = vrot.lane.b32.xlu0 %v3153, 64
        %v3257 = vpop.permute.xlu0 %3256
        %3258 = vrot.lane.b32.xlu0 %v3154, 64
        %v3259 = vpop.permute.xlu0 %3258
        %3276 = vrot.lane.b32.xlu0 %v3155, 96
        %v3277 = vpop.permute.xlu0 %3276
        %3278 = vrot.lane.b32.xlu0 %v3156, 96
        %v3279 = vpop.permute.xlu0 %3278
        %3280 = vrot.lane.b32.xlu0 %v3157, 96
        %v3281 = vpop.permute.xlu0 %3280
        %3282 = vrot.lane.b32.xlu0 %v3158, 96
        %v3283 = vpop.permute.xlu0 %3282
        %3284 = vrot.lane.b32.xlu0 %v3159, 96
        %v3285 = vpop.permute.xlu0 %3284
        %3286 = vrot.lane.b32.xlu0 %v3160, 96
        %v3287 = vpop.permute.xlu0 %3286
        %3288 = vrot.lane.b32.xlu0 %v3161, 96
        %v3289 = vpop.permute.xlu0 %3288
        %3290 = vrot.lane.b32.xlu0 %v3162, 96
        %v3291 = vpop.permute.xlu0 %3290
        %3308 = vrot.lane.b32.xlu0 %v3171, 32
        %v3309 = vpop.permute.xlu0 %3308
        %3310 = vrot.lane.b32.xlu0 %v3172, 32
        %v3311 = vpop.permute.xlu0 %3310
        %3312 = vrot.lane.b32.xlu0 %v3173, 32
        %v3313 = vpop.permute.xlu0 %3312
        %3314 = vrot.lane.b32.xlu0 %v3174, 32
        %v3315 = vpop.permute.xlu0 %3314
        %3316 = vrot.lane.b32.xlu0 %v3175, 32
        %v3317 = vpop.permute.xlu0 %3316
        %3318 = vrot.lane.b32.xlu0 %v3176, 32
        %v3319 = vpop.permute.xlu0 %3318
        %3320 = vrot.lane.b32.xlu0 %v3177, 32
        %v3321 = vpop.permute.xlu0 %3320
        %3322 = vrot.lane.b32.xlu0 %v3178, 32
        %v3323 = vpop.permute.xlu0 %3322
        %3340 = vrot.lane.b32.xlu0 %v3180, 64
        %v3341 = vpop.permute.xlu0 %3340
        %3342 = vrot.lane.b32.xlu0 %v3181, 64
        %v3343 = vpop.permute.xlu0 %3342
        %3344 = vrot.lane.b32.xlu0 %v3182, 64
        %v3345 = vpop.permute.xlu0 %3344
        %3346 = vrot.lane.b32.xlu0 %v3183, 64
        %v3347 = vpop.permute.xlu0 %3346
        %3348 = vrot.lane.b32.xlu0 %v3184, 64
        %v3349 = vpop.permute.xlu0 %3348
        %3350 = vrot.lane.b32.xlu0 %v3185, 64
        %v3351 = vpop.permute.xlu0 %3350
        %3352 = vrot.lane.b32.xlu0 %v3186, 64
        %v3353 = vpop.permute.xlu0 %3352
        %3354 = vrot.lane.b32.xlu0 %v3187, 64
        %v3355 = vpop.permute.xlu0 %3354
        %3372 = vrot.lane.b32.xlu0 %v3188, 96
        %v3373 = vpop.permute.xlu0 %3372
        %3374 = vrot.lane.b32.xlu0 %v3189, 96
        %v3375 = vpop.permute.xlu0 %3374
        %3376 = vrot.lane.b32.xlu0 %v3190, 96
        %v3377 = vpop.permute.xlu0 %3376
        %3378 = vrot.lane.b32.xlu0 %v3191, 96
        %v3379 = vpop.permute.xlu0 %3378
        %3380 = vrot.lane.b32.xlu0 %v3192, 96
        %v3381 = vpop.permute.xlu0 %3380
        %3382 = vrot.lane.b32.xlu0 %v3193, 96
        %v3383 = vpop.permute.xlu0 %3382
        %3384 = vrot.lane.b32.xlu0 %v3194, 96
        %v3385 = vpop.permute.xlu0 %3384
        %3386 = vrot.lane.b32.xlu0 %v3195, 96
        %v3387 = vpop.permute.xlu0 %3386
        %v3396 = vsel %vm548, %v3131, %v3213
        %v3397 = vsel %vm548, %v3132, %v3215
        %v3398 = vsel %vm548, %v3133, %v3217
        %v3399 = vsel %vm548, %v3134, %v3219
        %v3400 = vsel %vm548, %v3135, %v3221
        %v3401 = vsel %vm548, %v3136, %v3223
        %v3402 = vsel %vm548, %v3137, %v3225
        %v3403 = vsel %vm548, %v3138, %v3227
        %v3404 = vsel %vm576, %v3396, %v3245
        %v3405 = vsel %vm576, %v3397, %v3247
        %v3406 = vsel %vm576, %v3398, %v3249
        %v3407 = vsel %vm576, %v3399, %v3251
        %v3408 = vsel %vm576, %v3400, %v3253
        %v3409 = vsel %vm576, %v3401, %v3255
        %v3410 = vsel %vm576, %v3402, %v3257
        %v3411 = vsel %vm576, %v3403, %v3259
        %v3412 = vsel %vm927, %v3404, %v3277
        %v3413 = vsel %vm927, %v3405, %v3279
        %v3414 = vsel %vm927, %v3406, %v3281
        %v3415 = vsel %vm927, %v3407, %v3283
        %v3416 = vsel %vm927, %v3408, %v3285
        %v3417 = vsel %vm927, %v3409, %v3287
        %v3418 = vsel %vm927, %v3410, %v3289
        %v3419 = vsel %vm927, %v3411, %v3291
        %v3420 = vsel %vm548, %v3163, %v3309
        %v3421 = vsel %vm548, %v3164, %v3311
        %v3422 = vsel %vm548, %v3165, %v3313
        %v3423 = vsel %vm548, %v3166, %v3315
        %v3424 = vsel %vm548, %v3167, %v3317
        %v3425 = vsel %vm548, %v3168, %v3319
        %v3426 = vsel %vm548, %v3169, %v3321
        %v3427 = vsel %vm548, %v3170, %v3323
        %v3428 = vsel %vm576, %v3420, %v3341
        %v3429 = vsel %vm576, %v3421, %v3343
        %v3430 = vsel %vm576, %v3422, %v3345
        %v3431 = vsel %vm576, %v3423, %v3347
        %v3432 = vsel %vm576, %v3424, %v3349
        %v3433 = vsel %vm576, %v3425, %v3351
        %v3434 = vsel %vm576, %v3426, %v3353
        %v3435 = vsel %vm576, %v3427, %v3355
        %v3436 = vsel %vm927, %v3428, %v3373
        %v3437 = vsel %vm927, %v3429, %v3375
        %v3438 = vsel %vm927, %v3430, %v3377
        %v3439 = vsel %vm927, %v3431, %v3379
        %v3440 = vsel %vm927, %v3432, %v3381
        %v3441 = vsel %vm927, %v3433, %v3383
        %v3442 = vsel %vm927, %v3434, %v3385
        %v3443 = vsel %vm927, %v3435, %v3387
        %v3444 = vpack.c.bf16 %v3413, %v3412
        %v3445 = vpack.c.bf16 %v3437, %v3436
        %v3446 = vpack.c.bf16 %v3197, %v3196
        %v3447 = vpack.c.bf16 %v3415, %v3414
        %v3448 = vpack.c.bf16 %v3439, %v3438
        %v3449 = vpack.c.bf16 %v3199, %v3198
        %v3450 = vpack.c.bf16 %v3417, %v3416
        %v3451 = vpack.c.bf16 %v3441, %v3440
        %v3452 = vpack.c.bf16 %v3201, %v3200
        %v3453 = vpack.c.bf16 %v3419, %v3418
        %v3454 = vpack.c.bf16 %v3443, %v3442
        %v3455 = vpack.c.bf16 %v3203, %v3202
        %v3456 = vld [vmem:[%s12] sm:$0xf]
        %v3457 = vld [vmem:[%s12 + $0x4] sm:$0xf]
        %v3458 = vld [vmem:[%s12 + $0x8] sm:$0xf]
        %v3459 = vld [vmem:[%s12 + $0xc] sm:$0xf]
        %v3460 = vld [vmem:[%s12 + $0x10] sm:$0xf]
        %v3461 = vld [vmem:[%s12 + $0x14] sm:$0xf]
        %v3462 = vld [vmem:[%s12 + $0x18] sm:$0xf]
        %v3463 = vld [vmem:[%s12 + $0x1c] sm:$0xf]
        %v3464 = vld [vmem:[%s12 + $0x20] sm:$0xf]
        %v3465 = vld [vmem:[%s12 + $0x24] sm:$0xf]
        %v3466 = vld [vmem:[%s12 + $0x28] sm:$0xf]
        %v3467 = vld [vmem:[%s12 + $0x2c] sm:$0xf]
        %v3468 = vld [vmem:[%s12 + $0x30] sm:$0xf]
        %v3469 = vld [vmem:[%s12 + $0x34] sm:$0xf]
        %v3470 = vld [vmem:[%s12 + $0x38] sm:$0xf]
        %v3471 = vld [vmem:[%s12 + $0x3c] sm:$0xf]
        %v3472 = vld [vmem:[%s12 + $0x40] sm:$0xf]
        %v3473 = vld [vmem:[%s12 + $0x44] sm:$0xf]
        %v3474 = vld [vmem:[%s12 + $0x48] sm:$0xf]
        %v3475 = vld [vmem:[%s12 + $0x4c] sm:$0xf]
        %v3476 = vld [vmem:[%s12 + $0x50] sm:$0xf]
        %v3477 = vld [vmem:[%s12 + $0x54] sm:$0xf]
        %v3478 = vld [vmem:[%s12 + $0x58] sm:$0xf]
        %v3479 = vld [vmem:[%s12 + $0x5c] sm:$0xf]
        %v3480 = vld [vmem:[%s12 + $0x60] sm:$0xf]
        %v3481 = vld [vmem:[%s12 + $0x64] sm:$0xf]
        %v3482 = vld [vmem:[%s12 + $0x68] sm:$0xf]
        %v3483 = vld [vmem:[%s12 + $0x6c] sm:$0xf]
        %v3484 = vld [vmem:[%s12 + $0x70] sm:$0xf]
        %v3485 = vld [vmem:[%s12 + $0x74] sm:$0xf]
        %v3486 = vld [vmem:[%s12 + $0x78] sm:$0xf]
        %v3487 = vld [vmem:[%s12 + $0x7c] sm:$0xf]
        %v3488 = vld [vmem:[%s12 + $0x80] sm:$0xf]
        %v3489 = vld [vmem:[%s12 + $0x84] sm:$0xf]
        %v3490 = vld [vmem:[%s12 + $0x88] sm:$0xf]
        %v3491 = vld [vmem:[%s12 + $0x8c] sm:$0xf]
        %v3528 = vunpack.c.l.b16 %v3456
        %v3529 = vunpack.c.l.b16 %v3457
        %v3530 = vunpack.c.l.b16 %v3458
        %v3531 = vunpack.c.l.b16 %v3459
        %v3532 = vunpack.c.l.b16 %v3460
        %v3533 = vunpack.c.l.b16 %v3461
        %v3534 = vunpack.c.l.b16 %v3462
        %v3535 = vunpack.c.l.b16 %v3463
        %v3536 = vunpack.c.l.b16 %v3464
        %v3537 = vunpack.c.l.b16 %v3465
        %v3538 = vunpack.c.l.b16 %v3466
        %v3539 = vunpack.c.l.b16 %v3467
        %v3540 = vunpack.c.l.b16 %v3468
        %v3541 = vunpack.c.l.b16 %v3469
        %v3542 = vunpack.c.l.b16 %v3470
        %v3543 = vunpack.c.l.b16 %v3471
        %v3544 = vunpack.c.l.b16 %v3472
        %v3545 = vunpack.c.l.b16 %v3473
        %v3546 = vunpack.c.l.b16 %v3474
        %v3547 = vunpack.c.l.b16 %v3475
        %v3548 = vunpack.c.l.b16 %v3476
        %v3549 = vunpack.c.l.b16 %v3477
        %v3550 = vunpack.c.l.b16 %v3478
        %v3551 = vunpack.c.l.b16 %v3479
        %v3552 = vunpack.c.l.b16 %v3480
        %v3553 = vunpack.c.l.b16 %v3481
        %v3554 = vunpack.c.l.b16 %v3482
        %v3555 = vunpack.c.l.b16 %v3483
        %v3556 = vunpack.c.l.b16 %v3484
        %v3557 = vunpack.c.l.b16 %v3485
        %v3558 = vunpack.c.l.b16 %v3486
        %v3559 = vunpack.c.l.b16 %v3487
        %v3560 = vunpack.c.l.b16 %v3488
        %v3561 = vunpack.c.l.b16 %v3489
        %v3562 = vunpack.c.l.b16 %v3490
        %v3563 = vunpack.c.l.b16 %v3491
        %v3564 = vpack.c.b16 %v3529, %v3528
        %v3565 = vpack.c.b16 %v3531, %v3530
        %v3566 = vpack.c.b16 %v3533, %v3532
        %v3567 = vpack.c.b16 %v3535, %v3534
        %v3568 = vpack.c.b16 %v3537, %v3536
        %v3569 = vpack.c.b16 %v3539, %v3538
        %v3570 = vpack.c.b16 %v3541, %v3540
        %v3571 = vpack.c.b16 %v3543, %v3542
        %v3572 = vpack.c.b16 %v3545, %v3544
        %v3573 = vpack.c.b16 %v3547, %v3546
        %v3574 = vpack.c.b16 %v3549, %v3548
        %v3575 = vpack.c.b16 %v3551, %v3550
        %v3576 = vpack.c.b16 %v3553, %v3552
        %v3577 = vpack.c.b16 %v3555, %v3554
        %v3578 = vpack.c.b16 %v3557, %v3556
        %v3579 = vpack.c.b16 %v3559, %v3558
        %v3580 = vpack.c.b16 %v3561, %v3560
        %v3581 = vpack.c.b16 %v3563, %v3562
        %v3601 = vsel %vm548, %v3446, 0
        %v3604 = vsel %vm548, %v3449, 0
        %v3607 = vsel %vm548, %v3452, 0
        %v3610 = vsel %vm548, %v3455, 0
        %3612 = vmatpush.bf16.msra.mxu0 %v3571
        %3613 = vmatpush.bf16.msra.mxu0 %v3570
        %3614 = vmatpush.bf16.msra.mxu0 %v3569
        %3615 = vmatpush.bf16.msra.mxu0 %v3568
        %3616 = vmatpush.bf16.msra.mxu0 %v3567
        %3617 = vmatpush.bf16.msra.mxu0 %v3566
        %3618 = vmatpush.bf16.msra.mxu0 %v3565
        %3619 = vmatpush.bf16.msra.mxu0 %v3564
        %3620 = vmatmul.bf16.gmra.mxu0 %v3444
        %v3621 = vpop.f32.mrf.mxu0
        %v3622 = vadd.f32 0.0, %v3621
        %v3623 = vpop.f32.mrf.mxu0
        %v3624 = vadd.f32 0.0, %v3623
        %3625 = vmatmul.bf16.gmra.mxu0 %v3447
        %v3626 = vpop.f32.mrf.mxu0
        %v3627 = vadd.f32 0.0, %v3626
        %v3628 = vpop.f32.mrf.mxu0
        %v3629 = vadd.f32 0.0, %v3628
        %3630 = vmatmul.bf16.gmra.mxu0 %v3450
        %v3631 = vpop.f32.mrf.mxu0
        %v3632 = vadd.f32 0.0, %v3631
        %v3633 = vpop.f32.mrf.mxu0
        %v3634 = vadd.f32 0.0, %v3633
        %3635 = vmatmul.bf16.gmra.mxu0 %v3453
        %v3636 = vpop.f32.mrf.mxu0
        %v3637 = vadd.f32 0.0, %v3636
        %v3638 = vpop.f32.mrf.mxu0
        %v3639 = vadd.f32 0.0, %v3638
        %3640 = vdwg.mxu0
        %3641 = vmatpush.bf16.msra.mxu0 %v3579
        %3642 = vmatpush.bf16.msra.mxu0 %v3578
        %3643 = vmatpush.bf16.msra.mxu0 %v3577
        %3644 = vmatpush.bf16.msra.mxu0 %v3576
        %3645 = vmatpush.bf16.msra.mxu0 %v3575
        %3646 = vmatpush.bf16.msra.mxu0 %v3574
        %3647 = vmatpush.bf16.msra.mxu0 %v3573
        %3648 = vmatpush.bf16.msra.mxu0 %v3572
        %3649 = vmatmul.bf16.gmra.mxu0 %v3445
        %v3650 = vpop.f32.mrf.mxu0
        %v3651 = vadd.f32 %v3622, %v3650
        %v3652 = vpop.f32.mrf.mxu0
        %v3653 = vadd.f32 %v3624, %v3652
        %3654 = vmatmul.bf16.gmra.mxu0 %v3448
        %v3655 = vpop.f32.mrf.mxu0
        %v3656 = vadd.f32 %v3627, %v3655
        %v3657 = vpop.f32.mrf.mxu0
        %v3658 = vadd.f32 %v3629, %v3657
        %3659 = vmatmul.bf16.gmra.mxu0 %v3451
        %v3660 = vpop.f32.mrf.mxu0
        %v3661 = vadd.f32 %v3632, %v3660
        %v3662 = vpop.f32.mrf.mxu0
        %v3663 = vadd.f32 %v3634, %v3662
        %3664 = vmatmul.bf16.gmra.mxu0 %v3454
        %v3665 = vpop.f32.mrf.mxu0
        %v3666 = vadd.f32 %v3637, %v3665
        %v3667 = vpop.f32.mrf.mxu0
        %v3668 = vadd.f32 %v3639, %v3667
        %3669 = vdwg.mxu0
        %3670 = vmatpush.bf16.msra.mxu0 0
        %3671 = vmatpush.bf16.msra.mxu0 0
        %3672 = vmatpush.bf16.msra.mxu0 0
        %3673 = vmatpush.bf16.msra.mxu0 0
        %3674 = vmatpush.bf16.msra.mxu0 0
        %3675 = vmatpush.bf16.msra.mxu0 0
        %3676 = vmatpush.bf16.msra.mxu0 %v3581
        %3677 = vmatpush.bf16.msra.mxu0 %v3580
        %3678 = vmatmul.bf16.gmra.mxu0 %v3601
        %v3679 = vpop.f32.mrf.mxu0
        %v3680 = vadd.f32 %v3651, %v3679
        %v3681 = vpop.f32.mrf.mxu0
        %v3682 = vadd.f32 %v3653, %v3681
        %3683 = vmatmul.bf16.gmra.mxu0 %v3604
        %v3684 = vpop.f32.mrf.mxu0
        %v3685 = vadd.f32 %v3656, %v3684
        %v3686 = vpop.f32.mrf.mxu0
        %v3687 = vadd.f32 %v3658, %v3686
        %3688 = vmatmul.bf16.gmra.mxu0 %v3607
        %v3689 = vpop.f32.mrf.mxu0
        %v3690 = vadd.f32 %v3661, %v3689
        %v3691 = vpop.f32.mrf.mxu0
        %v3692 = vadd.f32 %v3663, %v3691
        %3693 = vmatmul.bf16.gmra.mxu0 %v3610
        %v3694 = vpop.f32.mrf.mxu0
        %v3695 = vadd.f32 %v3666, %v3694
        %v3696 = vpop.f32.mrf.mxu0
        %v3697 = vadd.f32 %v3668, %v3696
        %3698 = vdwg.mxu0
        %v3699 = vld [vmem:[%s13] sm:$0x1]
        %v3701 = vperm.slane %v3699, 0
        %v3703 = vmul.f32 %v3680, %v3701
        %v3704 = vmul.f32 %v3682, %v3701
        %v3705 = vmul.f32 %v3685, %v3701
        %v3706 = vmul.f32 %v3687, %v3701
        %v3707 = vmul.f32 %v3690, %v3701
        %v3708 = vmul.f32 %v3692, %v3701
        %v3709 = vmul.f32 %v3695, %v3701
        %v3710 = vmul.f32 %v3697, %v3701
        %v3711 = vld [vmem:[%s14] sm:$0x1]
        %v3713 = vperm.slane %v3711, 0
        %v3715 = vadd.f32 %v3703, %v3713
        %v3716 = vadd.f32 %v3704, %v3713
        %v3717 = vadd.f32 %v3705, %v3713
        %v3718 = vadd.f32 %v3706, %v3713
        %v3719 = vadd.f32 %v3707, %v3713
        %v3720 = vadd.f32 %v3708, %v3713
        %v3721 = vadd.f32 %v3709, %v3713
        %v3722 = vadd.f32 %v3710, %v3713
        %v3723 = vxor.u32 %v3715, 2147483648
        %v3724 = vxor.u32 %v3716, 2147483648
        %v3725 = vxor.u32 %v3717, 2147483648
        %v3726 = vxor.u32 %v3718, 2147483648
        %v3727 = vxor.u32 %v3719, 2147483648
        %v3728 = vxor.u32 %v3720, 2147483648
        %v3729 = vxor.u32 %v3721, 2147483648
        %v3730 = vxor.u32 %v3722, 2147483648
        %v3731 = vmul.f32 %v3723, 1.442695
        %v3732 = vpow.pop %v3731
        %v3733 = vmul.f32 %v3724, 1.442695
        %v3734 = vpow.pop %v3733
        %v3735 = vmul.f32 %v3725, 1.442695
        %v3736 = vpow.pop %v3735
        %v3737 = vmul.f32 %v3726, 1.442695
        %v3738 = vpow.pop %v3737
        %v3739 = vmul.f32 %v3727, 1.442695
        %v3740 = vpow.pop %v3739
        %v3741 = vmul.f32 %v3728, 1.442695
        %v3742 = vpow.pop %v3741
        %v3743 = vmul.f32 %v3729, 1.442695
        %v3744 = vpow.pop %v3743
        %v3745 = vmul.f32 %v3730, 1.442695
        %v3746 = vpow.pop %v3745
        %v3747 = vadd.f32 %v3732, 1.0
        %v3748 = vadd.f32 %v3734, 1.0
        %v3749 = vadd.f32 %v3736, 1.0
        %v3750 = vadd.f32 %v3738, 1.0
        %v3751 = vadd.f32 %v3740, 1.0
        %v3752 = vadd.f32 %v3742, 1.0
        %v3753 = vadd.f32 %v3744, 1.0
        %v3754 = vadd.f32 %v3746, 1.0
        %v3755 = vrcp.pop %v3747
        %v3756 = vmul.f32 %v3747, %v3755
        %v3757 = vsub.f32 1.0, %v3756
        %v3758 = vmul.f32 %v3755, %v3757
        %v3759 = vadd.f32 %v3755, %v3758
        %vm3760 = vweird.f32 %v3747
        %vm3761 = vweird.f32 %v3755
        %vm3762 = vmor %vm3760, %vm3761
        %v3763 = vsel %vm3762, %v3755, %v3759
        %v3764 = vand.u32 2147483647, %v3747
        %vm3765 = vcmp.eq.f32.partialorder %v3764, 8.507059e+37
        %v3766 = vand.u32 %v3747, 2147483648
        %v3767 = vor.u32 1.1754944e-38, %v3766
        %v3768 = vsel %vm3765, %v3767, %v3763
        %v3769 = vmul.f32 1.0, %v3768
        %v3770 = vrcp.pop %v3748
        %v3771 = vmul.f32 %v3748, %v3770
        %v3772 = vsub.f32 1.0, %v3771
        %v3773 = vmul.f32 %v3770, %v3772
        %v3774 = vadd.f32 %v3770, %v3773
        %vm3775 = vweird.f32 %v3748
        %vm3776 = vweird.f32 %v3770
        %vm3777 = vmor %vm3775, %vm3776
        %v3778 = vsel %vm3777, %v3770, %v3774
        %v3779 = vand.u32 2147483647, %v3748
        %vm3780 = vcmp.eq.f32.partialorder %v3779, 8.507059e+37
        %v3781 = vand.u32 %v3748, 2147483648
        %v3782 = vor.u32 1.1754944e-38, %v3781
        %v3783 = vsel %vm3780, %v3782, %v3778
        %v3784 = vmul.f32 1.0, %v3783
        %v3785 = vrcp.pop %v3749
        %v3786 = vmul.f32 %v3749, %v3785
        %v3787 = vsub.f32 1.0, %v3786
        %v3788 = vmul.f32 %v3785, %v3787
        %v3789 = vadd.f32 %v3785, %v3788
        %vm3790 = vweird.f32 %v3749
        %vm3791 = vweird.f32 %v3785
        %vm3792 = vmor %vm3790, %vm3791
        %v3793 = vsel %vm3792, %v3785, %v3789
        %v3794 = vand.u32 2147483647, %v3749
        %vm3795 = vcmp.eq.f32.partialorder %v3794, 8.507059e+37
        %v3796 = vand.u32 %v3749, 2147483648
        %v3797 = vor.u32 1.1754944e-38, %v3796
        %v3798 = vsel %vm3795, %v3797, %v3793
        %v3799 = vmul.f32 1.0, %v3798
        %v3800 = vrcp.pop %v3750
        %v3801 = vmul.f32 %v3750, %v3800
        %v3802 = vsub.f32 1.0, %v3801
        %v3803 = vmul.f32 %v3800, %v3802
        %v3804 = vadd.f32 %v3800, %v3803
        %vm3805 = vweird.f32 %v3750
        %vm3806 = vweird.f32 %v3800
        %vm3807 = vmor %vm3805, %vm3806
        %v3808 = vsel %vm3807, %v3800, %v3804
        %v3809 = vand.u32 2147483647, %v3750
        %vm3810 = vcmp.eq.f32.partialorder %v3809, 8.507059e+37
        %v3811 = vand.u32 %v3750, 2147483648
        %v3812 = vor.u32 1.1754944e-38, %v3811
        %v3813 = vsel %vm3810, %v3812, %v3808
        %v3814 = vmul.f32 1.0, %v3813
        %v3815 = vrcp.pop %v3751
        %v3816 = vmul.f32 %v3751, %v3815
        %v3817 = vsub.f32 1.0, %v3816
        %v3818 = vmul.f32 %v3815, %v3817
        %v3819 = vadd.f32 %v3815, %v3818
        %vm3820 = vweird.f32 %v3751
        %vm3821 = vweird.f32 %v3815
        %vm3822 = vmor %vm3820, %vm3821
        %v3823 = vsel %vm3822, %v3815, %v3819
        %v3824 = vand.u32 2147483647, %v3751
        %vm3825 = vcmp.eq.f32.partialorder %v3824, 8.507059e+37
        %v3826 = vand.u32 %v3751, 2147483648
        %v3827 = vor.u32 1.1754944e-38, %v3826
        %v3828 = vsel %vm3825, %v3827, %v3823
        %v3829 = vmul.f32 1.0, %v3828
        %v3830 = vrcp.pop %v3752
        %v3831 = vmul.f32 %v3752, %v3830
        %v3832 = vsub.f32 1.0, %v3831
        %v3833 = vmul.f32 %v3830, %v3832
        %v3834 = vadd.f32 %v3830, %v3833
        %vm3835 = vweird.f32 %v3752
        %vm3836 = vweird.f32 %v3830
        %vm3837 = vmor %vm3835, %vm3836
        %v3838 = vsel %vm3837, %v3830, %v3834
        %v3839 = vand.u32 2147483647, %v3752
        %vm3840 = vcmp.eq.f32.partialorder %v3839, 8.507059e+37
        %v3841 = vand.u32 %v3752, 2147483648
        %v3842 = vor.u32 1.1754944e-38, %v3841
        %v3843 = vsel %vm3840, %v3842, %v3838
        %v3844 = vmul.f32 1.0, %v3843
        %v3845 = vrcp.pop %v3753
        %v3846 = vmul.f32 %v3753, %v3845
        %v3847 = vsub.f32 1.0, %v3846
        %v3848 = vmul.f32 %v3845, %v3847
        %v3849 = vadd.f32 %v3845, %v3848
        %vm3850 = vweird.f32 %v3753
        %vm3851 = vweird.f32 %v3845
        %vm3852 = vmor %vm3850, %vm3851
        %v3853 = vsel %vm3852, %v3845, %v3849
        %v3854 = vand.u32 2147483647, %v3753
        %vm3855 = vcmp.eq.f32.partialorder %v3854, 8.507059e+37
        %v3856 = vand.u32 %v3753, 2147483648
        %v3857 = vor.u32 1.1754944e-38, %v3856
        %v3858 = vsel %vm3855, %v3857, %v3853
        %v3859 = vmul.f32 1.0, %v3858
        %v3860 = vrcp.pop %v3754
        %v3861 = vmul.f32 %v3754, %v3860
        %v3862 = vsub.f32 1.0, %v3861
        %v3863 = vmul.f32 %v3860, %v3862
        %v3864 = vadd.f32 %v3860, %v3863
        %vm3865 = vweird.f32 %v3754
        %vm3866 = vweird.f32 %v3860
        %vm3867 = vmor %vm3865, %vm3866
        %v3868 = vsel %vm3867, %v3860, %v3864
        %v3869 = vand.u32 2147483647, %v3754
        %vm3870 = vcmp.eq.f32.partialorder %v3869, 8.507059e+37
        %v3871 = vand.u32 %v3754, 2147483648
        %v3872 = vor.u32 1.1754944e-38, %v3871
        %v3873 = vsel %vm3870, %v3872, %v3868
        %v3874 = vmul.f32 1.0, %v3873
        %v3875 = vmul.f32 %v3715, %v3769
        %v3876 = vmul.f32 %v3716, %v3784
        %v3877 = vmul.f32 %v3717, %v3799
        %v3878 = vmul.f32 %v3718, %v3814
        %v3879 = vmul.f32 %v3719, %v3829
        %v3880 = vmul.f32 %v3720, %v3844
        %v3881 = vmul.f32 %v3721, %v3859
        %v3882 = vmul.f32 %v3722, %v3874
        %v3883 = vpack.c.bf16 %v3876, %v3875
        %v3884 = vpack.c.bf16 %v3878, %v3877
        %v3885 = vpack.c.bf16 %v3880, %v3879
        %v3886 = vpack.c.bf16 %v3882, %v3881
        %v3887 = vld [vmem:[%s15] sm:$0xf]
        %v3888 = vld [vmem:[%s15 + $0x4] sm:$0xf]
        %v3889 = vld [vmem:[%s15 + $0x8] sm:$0xf]
        %v3890 = vld [vmem:[%s15 + $0xc] sm:$0xf]
        %v3891 = vld [vmem:[%s16] sm:$0x1]
        %v3893 = vperm.slane %v3891, 0
        %v3899 = vunpack.c.l.b16 %v3887
        %v3900 = vunpack.c.l.b16 %v3888
        %v3901 = vunpack.c.l.b16 %v3889
        %v3902 = vunpack.c.l.b16 %v3890
        %v3903 = vpack.c.b16 %v3900, %v3899
        %v3904 = vpack.c.b16 %v3902, %v3901
        %v3908 = vsel %vm548, %v3883, 0
        %v3911 = vsel %vm548, %v3884, 0
        %v3914 = vsel %vm548, %v3885, 0
        %v3917 = vsel %vm548, %v3886, 0
        %3919 = vmatpush.bf16.msra.mxu0 0
        %3920 = vmatpush.bf16.msra.mxu0 0
        %3921 = vmatpush.bf16.msra.mxu0 0
        %3922 = vmatpush.bf16.msra.mxu0 0
        %3923 = vmatpush.bf16.msra.mxu0 0
        %3924 = vmatpush.bf16.msra.mxu0 0
        %3925 = vmatpush.bf16.msra.mxu0 %v3904
        %3926 = vmatpush.bf16.msra.mxu0 %v3903
        %3927 = vmatmul.bf16.gmra.mxu0 %v3908
        %v3928 = vpop.f32.mrf.mxu0
        %v3929 = vadd.f32 %v3893, %v3928
        %v3930 = vpop.f32.mrf.mxu0
        %v3931 = vadd.f32 %v3893, %v3930
        %3932 = vmatmul.bf16.gmra.mxu0 %v3911
        %v3933 = vpop.f32.mrf.mxu0
        %v3934 = vadd.f32 %v3893, %v3933
        %v3935 = vpop.f32.mrf.mxu0
        %v3936 = vadd.f32 %v3893, %v3935
        %3937 = vmatmul.bf16.gmra.mxu0 %v3914
        %v3938 = vpop.f32.mrf.mxu0
        %v3939 = vadd.f32 %v3893, %v3938
        %v3940 = vpop.f32.mrf.mxu0
        %v3941 = vadd.f32 %v3893, %v3940
        %3942 = vmatmul.bf16.gmra.mxu0 %v3917
        %v3943 = vpop.f32.mrf.mxu0
        %v3944 = vadd.f32 %v3893, %v3943
        %v3945 = vpop.f32.mrf.mxu0
        %v3946 = vadd.f32 %v3893, %v3945
        %3947 = vdwg.mxu0
        %3956 = vrot.lane.b32.xlu0 %v3929, 64
        %v3957 = vpop.permute.xlu0 %3956
        %3958 = vrot.lane.b32.xlu0 %v3931, 64
        %v3959 = vpop.permute.xlu0 %3958
        %3960 = vrot.lane.b32.xlu0 %v3934, 64
        %v3961 = vpop.permute.xlu0 %3960
        %3962 = vrot.lane.b32.xlu0 %v3936, 64
        %v3963 = vpop.permute.xlu0 %3962
        %3964 = vrot.lane.b32.xlu0 %v3939, 64
        %v3965 = vpop.permute.xlu0 %3964
        %3966 = vrot.lane.b32.xlu0 %v3941, 64
        %v3967 = vpop.permute.xlu0 %3966
        %3968 = vrot.lane.b32.xlu0 %v3944, 64
        %v3969 = vpop.permute.xlu0 %3968
        %3970 = vrot.lane.b32.xlu0 %v3946, 64
        %v3971 = vpop.permute.xlu0 %3970
        %v3980 = vsel %vm576, %v2352, %v3957
        %v3981 = vsel %vm576, %v2354, %v3959
        %v3982 = vsel %vm576, %v2357, %v3961
        %v3983 = vsel %vm576, %v2359, %v3963
        %v3984 = vsel %vm576, %v2362, %v3965
        %v3985 = vsel %vm576, %v2364, %v3967
        %v3986 = vsel %vm576, %v2367, %v3969
        %v3987 = vsel %vm576, %v2369, %v3971
        %vm3988 = vcmask 588800
        %3989 = vst.msk [vmem:[%s541] sm:$0xff] %vm3988, %v3980
        %3990 = vst.msk [vmem:[%s541 + $0x8] sm:$0xff] %vm3988, %v3981
        %3991 = vst.msk [vmem:[%s541 + $0x10] sm:$0xff] %vm3988, %v3982
        %3992 = vst.msk [vmem:[%s541 + $0x18] sm:$0xff] %vm3988, %v3983
        %3993 = vst.msk [vmem:[%s541 + $0x20] sm:$0xff] %vm3988, %v3984
        %3994 = vst.msk [vmem:[%s541 + $0x28] sm:$0xff] %vm3988, %v3985
        %3995 = vst.msk [vmem:[%s541 + $0x30] sm:$0xff] %vm3988, %v3986
        %3996 = vst.msk [vmem:[%s541 + $0x38] sm:$0xff] %vm3988, %v3987
        %s3997 = sand.u32 %s401, 1
        %s3998 = scalar_lea.sflag [#allocation6], %s3997
        %s3999 = sand.u32 %s401, 1
        %s4000 = smul.addr %s3999, 64
        %s4001 = scalar_lea.vmem [#allocation5], %s4000
        // Predicated region
        $region89: #{tpu_custom_call.1} parent=87 // pred_check
          %p4002 = pneg %p411
        $region90: #{tpu_custom_call.1} parent=87 // pred_check_branch
          %4004 = sbr.rel (%p4002) target = $region92
        $region91: #{tpu_custom_call.1} parent=87 // pred_region
          %4006 = vsyncadd %s3998, 0
          %s4007 = smul.addr %s31, 8
          %s4008 = smul.addr %s4007, 8
          %s4009 = scalar_lea.hbm %s17, %s4008
          %s4010 = sshll.u32 %s4001, 4
          %s4011 = int_to_ptr.vmem [resolvable:$true] %s4010
          %s4012 = sshll.u32 %s4009, 4
          %s4013 = int_to_ptr.hbm [resolvable:$true] %s4012
          %4018 = dma.vmem_to_hbm [thread:$0]  %s4011, 1024, %s4013, %s3998, 128, 128, 8
        $region92: #{tpu_custom_call.1} parent=87 // pred_fallthru
          _
      $region88: #{tpu_custom_call.1} parent=5 // pred_fallthru
        _
      %p4019 = scmp.le.s32.totalorder 2, %s26
      // Predicated region
      $region93: #{tpu_custom_call.1} parent=5 // pred_check
        %p4020 = pneg %p4019
      $region94: #{tpu_custom_call.1} parent=5 // pred_check_branch
        %4022 = sbr.rel (%p4020) target = $region96
      $region95: #{tpu_custom_call.1} parent=5 // pred_region
        %s4023 = ssub.s32 %s26, 2
        // Predicated region
        $region97: #{tpu_custom_call.1} parent=95 // pred_check
          %p4024 = pneg %p417
        $region98: #{tpu_custom_call.1} parent=95 // pred_check_branch
          %4026 = sbr.rel (%p4024) target = $region100
        $region99: #{tpu_custom_call.1} parent=95 // pred_region
          %s4027 = sand.u32 %s402, 1
          %s4028 = scalar_lea.sflag [#allocation6], %s4027
          %s4029 = sand.u32 %s402, 1
          %s4030 = smul.addr %s4029, 64
          %s4031 = scalar_lea.vmem [#allocation5], %s4030
          %4033 = dma.done %s4028, 1024
        $region100: #{tpu_custom_call.1} parent=95 // pred_fallthru
          _
      $region96: #{tpu_custom_call.1} parent=5 // pred_fallthru
        _
    $region6: #{tpu_custom_call.1} parent=1 // loop_footer
      %s30 = sadd.s32 1, %s26
    $region7: #{tpu_custom_call.1} parent=1 // loop_footer_branch
      %25 = sbr.rel target = $region3
    $region8: #{tpu_custom_call.1} parent=1 // loop_exit
      _
    %4034 = vsyncpa [#allocation6], 1
    %s4035 = scalar_lea.sflag [#allocation6], 1
    %4036 = vsyncpa %s4035, 1

</llo_original>
